<compile_context>
chip_gen: v6e
topology: v6e:2x2x1
jax: 0.10.0
libtpu: 0.0.40
codegen_flags: <defaults>
</compile_context>

<pallas_src>
import functools

import jax
import jax.numpy as jnp
from jax import lax
from jax.experimental import pallas as pl
from jax.experimental.pallas import tpu as pltpu


def _round_up(x, m):
    return ((x + m - 1) // m) * m


# ----------------------------------------------------------------------------
# Fused forward kernel: embedding + all LSTM layers + final linear.
# Grid axis 0 = time chunks ("arbitrary"); h/c carried in scratch across chunks.
# ----------------------------------------------------------------------------
def _char_rnn_kernel(*refs, layers, hidden_pad, dict_pad, time_chunk, batch_pad,
                     unroll):
    L, Hp, Dp, Tc, Bp = layers, hidden_pad, dict_pad, time_chunk, batch_pad
    R = Tc * Bp

    it = iter(refs)
    ids_ref = next(it)                       # (R, 1)       int32  (time-chunk block)
    h0_ref = next(it)                        # (L, Bp, Hp)  f32
    c0_ref = next(it)                        # (L, Bp, Hp)  f32
    emb_wih0_ref = next(it)                  # (Dp, 4Hp)    bf16   emb folded w/ layer-0 W_ih
    b_refs = [next(it)]                      # (1, 4Hp)     f32
    whh_refs = [next(it)]                    # (Hp, 4Hp)    bf16
    wih_refs = [None]
    for _ in range(1, L):
        wih_refs.append(next(it))            # (Hp, 4Hp)    bf16
        b_refs.append(next(it))
        whh_refs.append(next(it))
    fcw_ref = next(it)                       # (Hp, Dp)     bf16
    fcb_ref = next(it)                       # (1, Dp)      f32
    logits_ref = next(it)                    # (R, Dp)      f32 out (time-chunk block)
    hn_ref = next(it)                        # (L, Bp, Hp)  f32 out
    cn_ref = next(it)                        # (L, Bp, Hp)  f32 out
    gin_ref = next(it)                       # (R, 4Hp)     f32 scratch
    y_ref = next(it)                         # (R, Hp)      bf16 scratch
    h_sc = next(it)                          # (L, Bp, Hp)  f32 scratch (carried)
    c_sc = next(it)                          # (L, Bp, Hp)  f32 scratch (carried)

    t = pl.program_id(0)

    @pl.when(t == 0)
    def _():
        h_sc[...] = h0_ref[...]
        c_sc[...] = c0_ref[...]

    def recur(l, whh_ref):
        # TODO(synk): hold W_hh in MXU weight staging across the time loop via
        # pltpu.matmul_push_rhs / matmul_acc_lhs / matmul_pop (RHS is loop-invariant).
        whh = whh_ref[...]                                       # (Hp, 4Hp) bf16

        def step(s, carry):
            h, c = carry                                         # (Bp, Hp) f32
            row = pl.multiple_of(s * Bp, Bp)
            gates = (jnp.dot(h.astype(jnp.bfloat16), whh,
                             preferred_element_type=jnp.float32)
                     + gin_ref[pl.ds(row, Bp), :])               # (Bp, 4Hp); slabs i,f,o,g
            sfo = jax.nn.sigmoid(gates[:, 0:3 * Hp])             # one EUP dispatch for i/f/o
            g_g = jnp.tanh(gates[:, 3 * Hp:4 * Hp])
            i_g = sfo[:, 0:Hp]
            f_g = sfo[:, Hp:2 * Hp]
            o_g = sfo[:, 2 * Hp:3 * Hp]
            c_new = f_g * c + i_g * g_g
            h_new = o_g * jnp.tanh(c_new)
            y_ref[pl.ds(row, Bp), :] = h_new.astype(jnp.bfloat16)   # lane-dense bf16 store
            return h_new, c_new

        h_f, c_f = lax.fori_loop(0, Tc, step, (h_sc[l], c_sc[l]), unroll=unroll)
        h_sc[l] = h_f
        c_sc[l] = c_f

    # Layer 0: embedding gather + input projection fused as one one-hot bf16 GEMM,
    # hoisted over all timesteps of this chunk.
    onehot = (ids_ref[...] ==
              lax.broadcasted_iota(jnp.int32, (R, Dp), 1)).astype(jnp.bfloat16)
    gin_ref[...] = (jnp.dot(onehot, emb_wih0_ref[...],
                            preferred_element_type=jnp.float32) + b_refs[0][...])
    recur(0, whh_refs[0])

    # Layers 1..L-1: hoisted input GEMM from bf16 y, then the serial recurrence.
    for l in range(1, L):
        gin_ref[...] = (jnp.dot(y_ref[...], wih_refs[l][...],
                                preferred_element_type=jnp.float32) + b_refs[l][...])
        recur(l, whh_refs[l])

    # Fused final projection over this chunk; lane-dense Dp output.
    logits_ref[...] = (jnp.dot(y_ref[...], fcw_ref[...],
                               preferred_element_type=jnp.float32) + fcb_ref[...])

    @pl.when(t == pl.num_programs(0) - 1)
    def _():
        hn_ref[...] = h_sc[...]
        cn_ref[...] = c_sc[...]


def _const_spec(shape):
    rank = len(shape)
    return pl.BlockSpec(shape, lambda t, _r=rank: (0,) * _r)


# ----------------------------------------------------------------------------
# CharRNN module (parameter container + forward)
# ----------------------------------------------------------------------------
class CharRNNPallas:
    def __init__(self, dictionary_len, dropout, hidden_size, layers,
                 embedding_len=32, key=None, max_time_chunk=64):
        if key is None:
            key = jax.random.PRNGKey(0)
        self.dictionary_len = dictionary_len
        self.hidden_size = hidden_size
        self.layers = layers
        self.embedding_len = embedding_len
        self.dropout = dropout                      # identity at inference
        self.max_time_chunk = max_time_chunk
        self.d_pad = _round_up(dictionary_len, 128)   # lane-dense logits / onehot K
        self.h_pad = _round_up(hidden_size, 128)      # lane-aligned gate / state slabs

        keys = jax.random.split(key, 2 + 4 * layers + 2)
        ki = iter(keys)

        # nn.Embedding(dictionary_len, embedding_len, padding_idx=-1)
        emb = jax.random.normal(next(ki), (dictionary_len, embedding_len), jnp.float32)
        emb = emb.at[dictionary_len - 1].set(0.0)     # padding_idx=-1 -> row D-1 zeroed
        self.embedding = emb

        # nn.LSTM(embedding_len, hidden_size, num_layers=layers, batch_first=True)
        k = 1.0 / jnp.sqrt(hidden_size)
        self.lstm_params = []
        for layer in range(layers):
            in_dim = embedding_len if layer == 0 else hidden_size
            w_ih = jax.random.uniform(next(ki), (4 * hidden_size, in_dim),
                                      jnp.float32, -k, k)
            w_hh = jax.random.uniform(next(ki), (4 * hidden_size, hidden_size),
                                      jnp.float32, -k, k)
            b_ih = jax.random.uniform(next(ki), (4 * hidden_size,), jnp.float32, -k, k)
            b_hh = jax.random.uniform(next(ki), (4 * hidden_size,), jnp.float32, -k, k)
            self.lstm_params.append((w_ih, w_hh, b_ih, b_hh))

        # nn.Linear(hidden_size, dictionary_len)
        kf = 1.0 / jnp.sqrt(hidden_size)
        self.fc_w = jax.random.uniform(next(ki), (dictionary_len, hidden_size),
                                       jnp.float32, -kf, kf)
        self.fc_b = jax.random.uniform(next(ki), (dictionary_len,), jnp.float32, -kf, kf)

        # ---- kernel-ready parameters -------------------------------------------------
        H, Hp = hidden_size, self.h_pad
        order = (0, 1, 3, 2)      # PyTorch rows [i,f,g,o] -> kernel column slabs [i,f,o,g]

        def pack_w(w, in_dim):
            # w: (4H, in_dim)  ->  (in_dim, 4*Hp), gate slabs reordered + zero-padded.
            out = jnp.zeros((in_dim, 4 * Hp), jnp.float32)
            for slab, g in enumerate(order):
                out = out.at[:, slab * Hp:slab * Hp + H].set(w[g * H:(g + 1) * H, :].T)
            return out

        def pack_b(b_ih, b_hh):
            b = b_ih + b_hh
            out = jnp.zeros((1, 4 * Hp), jnp.float32)
            for slab, g in enumerate(order):
                out = out.at[0, slab * Hp:slab * Hp + H].set(b[g * H:(g + 1) * H])
            return out

        # Layer 0: fold the embedding into the input projection:
        #   gin0[token] = emb[token] @ W_ih0^T + b0  ->  (Dp, 4Hp) table, gathered
        #   in-kernel by a one-hot GEMM. (Dropout on the embedding is identity at eval.)
        wih0_packed = pack_w(self.lstm_params[0][0], embedding_len)       # (E, 4Hp)
        tab = self.embedding @ wih0_packed                                # (D, 4Hp)
        tab_pad = jnp.zeros((self.d_pad, 4 * Hp), jnp.float32).at[:dictionary_len].set(tab)
        self._emb_wih0 = tab_pad.astype(jnp.bfloat16)

        self._wih_t = [None]
        self._whh_t = []
        self._bias = []
        for layer in range(layers):
            w_ih, w_hh, b_ih, b_hh = self.lstm_params[layer]
            if layer > 0:
                wp = jnp.zeros((Hp, 4 * Hp), jnp.float32).at[:H].set(pack_w(w_ih, H))
                self._wih_t.append(wp.astype(jnp.bfloat16))
            whhp = jnp.zeros((Hp, 4 * Hp), jnp.float32).at[:H].set(pack_w(w_hh, H))
            self._whh_t.append(whhp.astype(jnp.bfloat16))
            self._bias.append(pack_b(b_ih, b_hh))

        fcw = jnp.zeros((Hp, self.d_pad), jnp.float32)
        fcw = fcw.at[:H, :dictionary_len].set(self.fc_w.T)
        self._fcw_pad = fcw.astype(jnp.bfloat16)
        self._fcb_pad = jnp.zeros((1, self.d_pad), jnp.float32).at[0, :dictionary_len].set(self.fc_b)

    def zero_state(self, batch_size):
        return (jnp.zeros((self.layers, batch_size, self.hidden_size), jnp.float32),
                jnp.zeros((self.layers, batch_size, self.hidden_size), jnp.float32))

    def _pick_time_chunk(self, T):
        target = min(T, self.max_time_chunk)
        for c in range(target, 0, -1):
            if T % c == 0:
                return c
        return T

    def _fused_forward(self, ids2d, h0p, c0p, T, Bp, Tc):
        Hp, L, Dp = self.h_pad, self.layers, self.d_pad
        n_chunks = T // Tc
        R = Tc * Bp

        kernel = functools.partial(_char_rnn_kernel, layers=L, hidden_pad=Hp,
                                   dict_pad=Dp, time_chunk=Tc, batch_pad=Bp,
                                   unroll=min(Tc, 8))

        inputs = [ids2d, h0p, c0p, self._emb_wih0, self._bias[0], self._whh_t[0]]
        in_specs = [pl.BlockSpec((R, 1), lambda t: (t, 0)),
                    _const_spec(h0p.shape), _const_spec(c0p.shape),
                    _const_spec(self._emb_wih0.shape),
                    _const_spec(self._bias[0].shape),
                    _const_spec(self._whh_t[0].shape)]
        for l in range(1, L):
            inputs += [self._wih_t[l], self._bias[l], self._whh_t[l]]
            in_specs += [_const_spec(self._wih_t[l].shape),
                         _const_spec(self._bias[l].shape),
                         _const_spec(self._whh_t[l].shape)]
        inputs += [self._fcw_pad, self._fcb_pad]
        in_specs += [_const_spec(self._fcw_pad.shape), _const_spec(self._fcb_pad.shape)]

        out_shape = (jax.ShapeDtypeStruct((T * Bp, Dp), jnp.float32),
                     jax.ShapeDtypeStruct((L, Bp, Hp), jnp.float32),
                     jax.ShapeDtypeStruct((L, Bp, Hp), jnp.float32))
        out_specs = (pl.BlockSpec((R, Dp), lambda t: (t, 0)),
                     _const_spec((L, Bp, Hp)),
                     _const_spec((L, Bp, Hp)))

        scratch = [pltpu.VMEM((R, 4 * Hp), jnp.float32),     # gin
                   pltpu.VMEM((R, Hp), jnp.bfloat16),        # y (bf16 matmul LHS)
                   pltpu.VMEM((L, Bp, Hp), jnp.float32),     # h carry across chunks
                   pltpu.VMEM((L, Bp, Hp), jnp.float32)]     # c carry across chunks

        # Explicit scoped-VMEM budget derived from the actual buffers (x2 double-buffer).
        resident = sum(int(a.size) * a.dtype.itemsize for a in inputs[1:])
        chunk_io = R * 4 + R * Dp * 4                         # ids in + logits out, per buffer
        state_out = 2 * L * Bp * Hp * 4                       # hn + cn
        scratch_b = R * 4 * Hp * 4 + R * Hp * 2 + 2 * L * Bp * Hp * 4
        vmem_bytes = 2 * (resident + chunk_io + state_out) + scratch_b + (2 << 20)
        vmem_bytes = int(min(max(vmem_bytes, 32 << 20), 64 << 20))

        # TODO(synk): on v7x, add a leading "parallel" grid axis splitting the batch
        # across the two TensorCores (independent per batch row).
        return pl.pallas_call(
            kernel,
            out_shape=out_shape,
            grid=(n_chunks,),
            in_specs=in_specs,
            out_specs=out_specs,
            scratch_shapes=scratch,
            compiler_params=pltpu.CompilerParams(
                dimension_semantics=("arbitrary",),
                vmem_limit_bytes=vmem_bytes),
        )(*inputs)

    def forward(self, x, prev_state=None):
        """x: int token ids, shape (B, T), batch_first.
        Returns (logits (B, T, dictionary_len), (h_n, c_n) each (layers, B, H))."""
        B, T = x.shape
        D, Dp = self.dictionary_len, self.d_pad
        H, Hp, L = self.hidden_size, self.h_pad, self.layers
        Bp = _round_up(B, 8)                       # sublane-aligned batch
        Tc = self._pick_time_chunk(T)

        # padding_idx=-1 -> row D-1 (zeroed), matching PyTorch normalization.
        # Padded batch rows also point at the zero row.  Dropout == identity (eval).
        ids = jnp.where(x < 0, x + D, x).astype(jnp.int32)          # (B, T)
        ids_tm = jnp.transpose(ids)                                 # (T, B) time-major
        ids_tm = jnp.pad(ids_tm, ((0, 0), (0, Bp - B)), constant_values=D - 1)
        ids2d = ids_tm.reshape(T * Bp, 1)                           # (T*Bp, 1)

        if prev_state is None:
            h0, c0 = self.zero_state(B)
        else:
            h0, c0 = prev_state
        h0p = jnp.pad(h0, ((0, 0), (0, Bp - B), (0, Hp - H)))
        c0p = jnp.pad(c0, ((0, 0), (0, Bp - B), (0, Hp - H)))

        logits2d, h_n_p, c_n_p = self._fused_forward(ids2d, h0p, c0p, T, Bp, Tc)

        logits = logits2d.reshape(T, Bp, Dp)[:, :B, :D]
        logits = jnp.transpose(logits, (1, 0, 2))                   # (B, T, D)
        hidden_state = (h_n_p[:, :B, :H], c_n_p[:, :B, :H])
        return logits, hidden_state


# ----------------------------------------------------------------------------
# Pure-JAX f32 reference (PyTorch-equivalent math) for a correctness check.
# ----------------------------------------------------------------------------
def _reference_forward(model, x, prev_state=None):
    B, T = x.shape
    D, H = model.dictionary_len, model.hidden_size
    ids = jnp.where(x < 0, x + D, x).astype(jnp.int32)
    xs = jnp.take(model.embedding, ids, axis=0)                    # (B, T, E)
    if prev_state is None:
        h = jnp.zeros((model.layers, B, H), jnp.float32)
        c = jnp.zeros((model.layers, B, H), jnp.float32)
    else:
        h, c = prev_state
    h_out, c_out = [], []
    for l in range(model.layers):
        w_ih, w_hh, b_ih, b_hh = model.lstm_params[l]
        hl, cl = h[l], c[l]
        outs = []
        for t in range(T):
            g = xs[:, t, :] @ w_ih.T + hl @ w_hh.T + b_ih + b_hh
            i = jax.nn.sigmoid(g[:, 0:H])
            f = jax.nn.sigmoid(g[:, H:2 * H])
            gg = jnp.tanh(g[:, 2 * H:3 * H])
            o = jax.nn.sigmoid(g[:, 3 * H:4 * H])
            cl = f * cl + i * gg
            hl = o * jnp.tanh(cl)
            outs.append(hl)
        xs = jnp.stack(outs, axis=1)
        h_out.append(hl)
        c_out.append(cl)
    logits = xs @ model.fc_w.T + model.fc_b
    return logits, (jnp.stack(h_out), jnp.stack(c_out))


if __name__ == "__main__":
    key = jax.random.PRNGKey(0)
    k_param, k_data = jax.random.split(key)

    dictionary_len = 48
    hidden_size = 32
    layers = 2
    embedding_len = 32
    batch = 2
    seq = 8

    # max_time_chunk=4 -> two time-chunks, exercising the cross-chunk h/c carry.
    model = CharRNNPallas(dictionary_len, dropout=0.1, hidden_size=hidden_size,
                          layers=layers, embedding_len=embedding_len, key=k_param,
                          max_time_chunk=4)

    x = jax.random.randint(k_data, (batch, seq), 0, dictionary_len, dtype=jnp.int32)

    logits, (h_n, c_n) = model.forward(x)
    jax.block_until_ready((logits, h_n, c_n))

    assert logits.shape == (batch, seq, dictionary_len)
    assert h_n.shape == (layers, batch, hidden_size)
    assert c_n.shape == (layers, batch, hidden_size)
    assert bool(jnp.all(jnp.isfinite(logits)))

    ref_logits, (ref_h, ref_c) = _reference_forward(model, x)
    assert float(jnp.max(jnp.abs(logits - ref_logits))) < 1e-1   # bf16 matmuls vs f32 ref
    assert float(jnp.max(jnp.abs(h_n - ref_h))) < 1e-1
    assert float(jnp.max(jnp.abs(c_n - ref_c))) < 1e-1

    print("KERNEL_OK")
</pallas_src>

<mosaic_0001>
module attributes {stable_mosaic.version = 11 : i64} {
  func.func @_char_rnn_kernel(%arg0: i32, %arg1: memref<32x1xi32, #tpu.memory_space<vmem>>, %arg2: memref<2x8x128xf32, #tpu.memory_space<vmem>>, %arg3: memref<2x8x128xf32, #tpu.memory_space<vmem>>, %arg4: memref<128x512xbf16, #tpu.memory_space<vmem>>, %arg5: memref<1x512xf32, #tpu.memory_space<vmem>>, %arg6: memref<128x512xbf16, #tpu.memory_space<vmem>>, %arg7: memref<128x512xbf16, #tpu.memory_space<vmem>>, %arg8: memref<1x512xf32, #tpu.memory_space<vmem>>, %arg9: memref<128x512xbf16, #tpu.memory_space<vmem>>, %arg10: memref<128x128xbf16, #tpu.memory_space<vmem>>, %arg11: memref<1x128xf32, #tpu.memory_space<vmem>>, %arg12: memref<32x128xf32, #tpu.memory_space<vmem>>, %arg13: memref<2x8x128xf32, #tpu.memory_space<vmem>>, %arg14: memref<2x8x128xf32, #tpu.memory_space<vmem>>, %arg15: memref<32x512xf32, #tpu.memory_space<vmem>>, %arg16: memref<32x128xbf16, #tpu.memory_space<vmem>>, %arg17: memref<2x8x128xf32, #tpu.memory_space<vmem>>, %arg18: memref<2x8x128xf32, #tpu.memory_space<vmem>>) attributes {dimension_semantics = [#tpu.dimension_semantics<arbitrary>], iteration_bounds = array<i64: 2>, scalar_prefetch = 0 : i64, scratch_operands = 4 : i64, tpu.core_type = #tpu.core_type<tc>, window_params = [{transform_indices = @transform_0, window_bounds = array<i64: 32, 1>}, {pipeline_mode = #tpu.pipeline_mode<synchronous>, transform_indices = @transform_1, window_bounds = array<i64: 2, 8, 128>}, {pipeline_mode = #tpu.pipeline_mode<synchronous>, transform_indices = @transform_2, window_bounds = array<i64: 2, 8, 128>}, {pipeline_mode = #tpu.pipeline_mode<synchronous>, transform_indices = @transform_3, window_bounds = array<i64: 128, 512>}, {pipeline_mode = #tpu.pipeline_mode<synchronous>, transform_indices = @transform_4, window_bounds = array<i64: 1, 512>}, {pipeline_mode = #tpu.pipeline_mode<synchronous>, transform_indices = @transform_5, window_bounds = array<i64: 128, 512>}, {pipeline_mode = #tpu.pipeline_mode<synchronous>, transform_indices = @transform_6, window_bounds = array<i64: 128, 512>}, {pipeline_mode = #tpu.pipeline_mode<synchronous>, transform_indices = @transform_7, window_bounds = array<i64: 1, 512>}, {pipeline_mode = #tpu.pipeline_mode<synchronous>, transform_indices = @transform_8, window_bounds = array<i64: 128, 512>}, {pipeline_mode = #tpu.pipeline_mode<synchronous>, transform_indices = @transform_9, window_bounds = array<i64: 128, 128>}, {pipeline_mode = #tpu.pipeline_mode<synchronous>, transform_indices = @transform_10, window_bounds = array<i64: 1, 128>}, {transform_indices = @transform_11, window_bounds = array<i64: 32, 128>}, {pipeline_mode = #tpu.pipeline_mode<synchronous>, transform_indices = @transform_12, window_bounds = array<i64: 2, 8, 128>}, {pipeline_mode = #tpu.pipeline_mode<synchronous>, transform_indices = @transform_13, window_bounds = array<i64: 2, 8, 128>}]} {
    %c0_i32 = arith.constant 0 : i32
    %0 = arith.cmpi eq, %arg0, %c0_i32 : i32
    %1 = arith.extui %0 : i1 to i32
    %c0_i32_0 = arith.constant 0 : i32
    %2 = arith.cmpi ne, %1, %c0_i32_0 : i32
    scf.if %2 {
      %c0_100 = arith.constant 0 : index
      %c0_101 = arith.constant 0 : index
      %c0_102 = arith.constant 0 : index
      %263 = vector.load %arg2[%c0_100, %c0_101, %c0_102] : memref<2x8x128xf32, #tpu.memory_space<vmem>>, vector<2x8x128xf32>
      %c0_103 = arith.constant 0 : index
      %c0_104 = arith.constant 0 : index
      %c0_105 = arith.constant 0 : index
      %264 = vector.load %arg17[%c0_103, %c0_104, %c0_105] : memref<2x8x128xf32, #tpu.memory_space<vmem>>, vector<2x8x128xf32>
      tpu.vector_store %arg17[%c0_103, %c0_104, %c0_105], %263 {strides = array<i32>} : memref<2x8x128xf32, #tpu.memory_space<vmem>>, vector<2x8x128xf32>,
      %c0_106 = arith.constant 0 : index
      %c0_107 = arith.constant 0 : index
      %c0_108 = arith.constant 0 : index
      %265 = vector.load %arg3[%c0_106, %c0_107, %c0_108] : memref<2x8x128xf32, #tpu.memory_space<vmem>>, vector<2x8x128xf32>
      %c0_109 = arith.constant 0 : index
      %c0_110 = arith.constant 0 : index
      %c0_111 = arith.constant 0 : index
      %266 = vector.load %arg18[%c0_109, %c0_110, %c0_111] : memref<2x8x128xf32, #tpu.memory_space<vmem>>, vector<2x8x128xf32>
      tpu.vector_store %arg18[%c0_109, %c0_110, %c0_111], %265 {strides = array<i32>} : memref<2x8x128xf32, #tpu.memory_space<vmem>>, vector<2x8x128xf32>,
    } else {
    }
    %c0 = arith.constant 0 : index
    %c0_1 = arith.constant 0 : index
    %3 = vector.load %arg1[%c0, %c0_1] : memref<32x1xi32, #tpu.memory_space<vmem>>, vector<32x1xi32>
    %4 = tpu.iota {dimensions = array<i32: 1>} : vector<32x128xi32>
    %5 = vector.broadcast %3 : vector<32x1xi32> to vector<32x128xi32>
    %6 = arith.cmpi eq, %5, %4 : vector<32x128xi32>
    %7 = arith.extui %6 : vector<32x128xi1> to vector<32x128xi32>
    %8 = arith.sitofp %7 : vector<32x128xi32> to vector<32x128xf32>
    %9 = arith.truncf %8 : vector<32x128xf32> to vector<32x128xbf16>
    %c0_2 = arith.constant 0 : index
    %c0_3 = arith.constant 0 : index
    %10 = vector.load %arg4[%c0_2, %c0_3] : memref<128x512xbf16, #tpu.memory_space<vmem>>, vector<128x512xbf16>
    %cst = arith.constant dense<0.000000e+00> : vector<32x512xf32>
    %11 = tpu.matmul %9, %10, %cst {dimension_numbers = #tpu.dot_dimension_numbers<[1], [0], [0], [1], [0, 0, 1, 1], [], []>} : vector<32x128xbf16>, vector<128x512xbf16>, vector<32x512xf32> -> vector<32x512xf32>
    %c0_4 = arith.constant 0 : index
    %c0_5 = arith.constant 0 : index
    %12 = vector.load %arg5[%c0_4, %c0_5] : memref<1x512xf32, #tpu.memory_space<vmem>>, vector<1x512xf32>
    %13 = vector.broadcast %12 : vector<1x512xf32> to vector<32x512xf32>
    %14 = arith.addf %11, %13 : vector<32x512xf32>
    %c0_6 = arith.constant 0 : index
    %c0_7 = arith.constant 0 : index
    %15 = vector.load %arg15[%c0_6, %c0_7] : memref<32x512xf32, #tpu.memory_space<vmem>>, vector<32x512xf32>
    tpu.vector_store %arg15[%c0_6, %c0_7], %14 {strides = array<i32>} : memref<32x512xf32, #tpu.memory_space<vmem>>, vector<32x512xf32>,
    %c0_8 = arith.constant 0 : index
    %c0_9 = arith.constant 0 : index
    %16 = vector.load %arg6[%c0_8, %c0_9] : memref<128x512xbf16, #tpu.memory_space<vmem>>, vector<128x512xbf16>
    %c0_10 = arith.constant 0 : index
    %c0_11 = arith.constant 0 : index
    %c0_12 = arith.constant 0 : index
    %17 = vector.load %arg17[%c0_10, %c0_11, %c0_12] : memref<2x8x128xf32, #tpu.memory_space<vmem>>, vector<1x8x128xf32>
    %18 = vector.shape_cast %17 : vector<1x8x128xf32> to vector<8x128xf32>
    %c0_13 = arith.constant 0 : index
    %c0_14 = arith.constant 0 : index
    %c0_15 = arith.constant 0 : index
    %19 = vector.load %arg18[%c0_13, %c0_14, %c0_15] : memref<2x8x128xf32, #tpu.memory_space<vmem>>, vector<1x8x128xf32>
    %20 = vector.shape_cast %19 : vector<1x8x128xf32> to vector<8x128xf32>
    %c0_i32_16 = arith.constant 0 : i32
    %c8_i32 = arith.constant 8 : i32
    %21 = arith.muli %c0_i32_16, %c8_i32 : i32
    %22 = tpu.assume_multiple %21, 8 : i32
    %23 = arith.truncf %18 : vector<8x128xf32> to vector<8x128xbf16>
    %cst_17 = arith.constant dense<0.000000e+00> : vector<8x512xf32>
    %24 = tpu.matmul %23, %16, %cst_17 {dimension_numbers = #tpu.dot_dimension_numbers<[1], [0], [0], [1], [0, 0, 1, 1], [], []>} : vector<8x128xbf16>, vector<128x512xbf16>, vector<8x512xf32> -> vector<8x512xf32>
    %25 = arith.index_cast %22 : i32 to index
    %c0_18 = arith.constant 0 : index
    %26 = vector.load %arg15[%25, %c0_18] : memref<32x512xf32, #tpu.memory_space<vmem>>, vector<8x512xf32>
    %27 = arith.addf %24, %26 : vector<8x512xf32>
    %28 = vector.extract_strided_slice %27 {offsets = [0, 0], sizes = [8, 384], strides = [1, 1]} : vector<8x512xf32> to vector<8x384xf32>
    %29 = arith.negf %28 : vector<8x384xf32>
    %30 = math.exp %29 : vector<8x384xf32>
    %cst_19 = arith.constant 1.000000e+00 : f32
    %31 = vector.broadcast %cst_19 : f32 to vector<8x384xf32>
    %32 = arith.addf %31, %30 : vector<8x384xf32>
    %33 = arith.divf %31, %32 : vector<8x384xf32>
    %34 = vector.extract_strided_slice %27 {offsets = [0, 384], sizes = [8, 128], strides = [1, 1]} : vector<8x512xf32> to vector<8x128xf32>
    %35 = math.tanh %34 : vector<8x128xf32>
    %36 = vector.extract_strided_slice %33 {offsets = [0, 0], sizes = [8, 128], strides = [1, 1]} : vector<8x384xf32> to vector<8x128xf32>
    %37 = vector.extract_strided_slice %33 {offsets = [0, 128], sizes = [8, 128], strides = [1, 1]} : vector<8x384xf32> to vector<8x128xf32>
    %38 = vector.extract_strided_slice %33 {offsets = [0, 256], sizes = [8, 128], strides = [1, 1]} : vector<8x384xf32> to vector<8x128xf32>
    %39 = arith.mulf %37, %20 : vector<8x128xf32>
    %40 = arith.mulf %36, %35 : vector<8x128xf32>
    %41 = arith.addf %39, %40 : vector<8x128xf32>
    %42 = math.tanh %41 : vector<8x128xf32>
    %43 = arith.mulf %38, %42 : vector<8x128xf32>
    %44 = arith.truncf %43 : vector<8x128xf32> to vector<8x128xbf16>
    %45 = arith.index_cast %22 : i32 to index
    %c0_20 = arith.constant 0 : index
    %46 = vector.load %arg16[%45, %c0_20] : memref<32x128xbf16, #tpu.memory_space<vmem>>, vector<8x128xbf16>
    tpu.vector_store %arg16[%45, %c0_20], %44 {strides = array<i32>} : memref<32x128xbf16, #tpu.memory_space<vmem>>, vector<8x128xbf16>,
    %c1_i32 = arith.constant 1 : i32
    %c8_i32_21 = arith.constant 8 : i32
    %47 = arith.muli %c1_i32, %c8_i32_21 : i32
    %48 = tpu.assume_multiple %47, 8 : i32
    %49 = arith.truncf %43 : vector<8x128xf32> to vector<8x128xbf16>
    %cst_22 = arith.constant dense<0.000000e+00> : vector<8x512xf32>
    %50 = tpu.matmul %49, %16, %cst_22 {dimension_numbers = #tpu.dot_dimension_numbers<[1], [0], [0], [1], [0, 0, 1, 1], [], []>} : vector<8x128xbf16>, vector<128x512xbf16>, vector<8x512xf32> -> vector<8x512xf32>
    %51 = arith.index_cast %48 : i32 to index
    %c0_23 = arith.constant 0 : index
    %52 = vector.load %arg15[%51, %c0_23] : memref<32x512xf32, #tpu.memory_space<vmem>>, vector<8x512xf32>
    %53 = arith.addf %50, %52 : vector<8x512xf32>
    %54 = vector.extract_strided_slice %53 {offsets = [0, 0], sizes = [8, 384], strides = [1, 1]} : vector<8x512xf32> to vector<8x384xf32>
    %55 = arith.negf %54 : vector<8x384xf32>
    %56 = math.exp %55 : vector<8x384xf32>
    %cst_24 = arith.constant 1.000000e+00 : f32
    %57 = vector.broadcast %cst_24 : f32 to vector<8x384xf32>
    %58 = arith.addf %57, %56 : vector<8x384xf32>
    %59 = arith.divf %57, %58 : vector<8x384xf32>
    %60 = vector.extract_strided_slice %53 {offsets = [0, 384], sizes = [8, 128], strides = [1, 1]} : vector<8x512xf32> to vector<8x128xf32>
    %61 = math.tanh %60 : vector<8x128xf32>
    %62 = vector.extract_strided_slice %59 {offsets = [0, 0], sizes = [8, 128], strides = [1, 1]} : vector<8x384xf32> to vector<8x128xf32>
    %63 = vector.extract_strided_slice %59 {offsets = [0, 128], sizes = [8, 128], strides = [1, 1]} : vector<8x384xf32> to vector<8x128xf32>
    %64 = vector.extract_strided_slice %59 {offsets = [0, 256], sizes = [8, 128], strides = [1, 1]} : vector<8x384xf32> to vector<8x128xf32>
    %65 = arith.mulf %63, %41 : vector<8x128xf32>
    %66 = arith.mulf %62, %61 : vector<8x128xf32>
    %67 = arith.addf %65, %66 : vector<8x128xf32>
    %68 = math.tanh %67 : vector<8x128xf32>
    %69 = arith.mulf %64, %68 : vector<8x128xf32>
    %70 = arith.truncf %69 : vector<8x128xf32> to vector<8x128xbf16>
    %71 = arith.index_cast %48 : i32 to index
    %c0_25 = arith.constant 0 : index
    %72 = vector.load %arg16[%71, %c0_25] : memref<32x128xbf16, #tpu.memory_space<vmem>>, vector<8x128xbf16>
    tpu.vector_store %arg16[%71, %c0_25], %70 {strides = array<i32>} : memref<32x128xbf16, #tpu.memory_space<vmem>>, vector<8x128xbf16>,
    %c2_i32 = arith.constant 2 : i32
    %c8_i32_26 = arith.constant 8 : i32
    %73 = arith.muli %c2_i32, %c8_i32_26 : i32
    %74 = tpu.assume_multiple %73, 8 : i32
    %75 = arith.truncf %69 : vector<8x128xf32> to vector<8x128xbf16>
    %cst_27 = arith.constant dense<0.000000e+00> : vector<8x512xf32>
    %76 = tpu.matmul %75, %16, %cst_27 {dimension_numbers = #tpu.dot_dimension_numbers<[1], [0], [0], [1], [0, 0, 1, 1], [], []>} : vector<8x128xbf16>, vector<128x512xbf16>, vector<8x512xf32> -> vector<8x512xf32>
    %77 = arith.index_cast %74 : i32 to index
    %c0_28 = arith.constant 0 : index
    %78 = vector.load %arg15[%77, %c0_28] : memref<32x512xf32, #tpu.memory_space<vmem>>, vector<8x512xf32>
    %79 = arith.addf %76, %78 : vector<8x512xf32>
    %80 = vector.extract_strided_slice %79 {offsets = [0, 0], sizes = [8, 384], strides = [1, 1]} : vector<8x512xf32> to vector<8x384xf32>
    %81 = arith.negf %80 : vector<8x384xf32>
    %82 = math.exp %81 : vector<8x384xf32>
    %cst_29 = arith.constant 1.000000e+00 : f32
    %83 = vector.broadcast %cst_29 : f32 to vector<8x384xf32>
    %84 = arith.addf %83, %82 : vector<8x384xf32>
    %85 = arith.divf %83, %84 : vector<8x384xf32>
    %86 = vector.extract_strided_slice %79 {offsets = [0, 384], sizes = [8, 128], strides = [1, 1]} : vector<8x512xf32> to vector<8x128xf32>
    %87 = math.tanh %86 : vector<8x128xf32>
    %88 = vector.extract_strided_slice %85 {offsets = [0, 0], sizes = [8, 128], strides = [1, 1]} : vector<8x384xf32> to vector<8x128xf32>
    %89 = vector.extract_strided_slice %85 {offsets = [0, 128], sizes = [8, 128], strides = [1, 1]} : vector<8x384xf32> to vector<8x128xf32>
    %90 = vector.extract_strided_slice %85 {offsets = [0, 256], sizes = [8, 128], strides = [1, 1]} : vector<8x384xf32> to vector<8x128xf32>
    %91 = arith.mulf %89, %67 : vector<8x128xf32>
    %92 = arith.mulf %88, %87 : vector<8x128xf32>
    %93 = arith.addf %91, %92 : vector<8x128xf32>
    %94 = math.tanh %93 : vector<8x128xf32>
    %95 = arith.mulf %90, %94 : vector<8x128xf32>
    %96 = arith.truncf %95 : vector<8x128xf32> to vector<8x128xbf16>
    %97 = arith.index_cast %74 : i32 to index
    %c0_30 = arith.constant 0 : index
    %98 = vector.load %arg16[%97, %c0_30] : memref<32x128xbf16, #tpu.memory_space<vmem>>, vector<8x128xbf16>
    tpu.vector_store %arg16[%97, %c0_30], %96 {strides = array<i32>} : memref<32x128xbf16, #tpu.memory_space<vmem>>, vector<8x128xbf16>,
    %c3_i32 = arith.constant 3 : i32
    %c8_i32_31 = arith.constant 8 : i32
    %99 = arith.muli %c3_i32, %c8_i32_31 : i32
    %100 = tpu.assume_multiple %99, 8 : i32
    %101 = arith.truncf %95 : vector<8x128xf32> to vector<8x128xbf16>
    %cst_32 = arith.constant dense<0.000000e+00> : vector<8x512xf32>
    %102 = tpu.matmul %101, %16, %cst_32 {dimension_numbers = #tpu.dot_dimension_numbers<[1], [0], [0], [1], [0, 0, 1, 1], [], []>} : vector<8x128xbf16>, vector<128x512xbf16>, vector<8x512xf32> -> vector<8x512xf32>
    %103 = arith.index_cast %100 : i32 to index
    %c0_33 = arith.constant 0 : index
    %104 = vector.load %arg15[%103, %c0_33] : memref<32x512xf32, #tpu.memory_space<vmem>>, vector<8x512xf32>
    %105 = arith.addf %102, %104 : vector<8x512xf32>
    %106 = vector.extract_strided_slice %105 {offsets = [0, 0], sizes = [8, 384], strides = [1, 1]} : vector<8x512xf32> to vector<8x384xf32>
    %107 = arith.negf %106 : vector<8x384xf32>
    %108 = math.exp %107 : vector<8x384xf32>
    %cst_34 = arith.constant 1.000000e+00 : f32
    %109 = vector.broadcast %cst_34 : f32 to vector<8x384xf32>
    %110 = arith.addf %109, %108 : vector<8x384xf32>
    %111 = arith.divf %109, %110 : vector<8x384xf32>
    %112 = vector.extract_strided_slice %105 {offsets = [0, 384], sizes = [8, 128], strides = [1, 1]} : vector<8x512xf32> to vector<8x128xf32>
    %113 = math.tanh %112 : vector<8x128xf32>
    %114 = vector.extract_strided_slice %111 {offsets = [0, 0], sizes = [8, 128], strides = [1, 1]} : vector<8x384xf32> to vector<8x128xf32>
    %115 = vector.extract_strided_slice %111 {offsets = [0, 128], sizes = [8, 128], strides = [1, 1]} : vector<8x384xf32> to vector<8x128xf32>
    %116 = vector.extract_strided_slice %111 {offsets = [0, 256], sizes = [8, 128], strides = [1, 1]} : vector<8x384xf32> to vector<8x128xf32>
    %117 = arith.mulf %115, %93 : vector<8x128xf32>
    %118 = arith.mulf %114, %113 : vector<8x128xf32>
    %119 = arith.addf %117, %118 : vector<8x128xf32>
    %120 = math.tanh %119 : vector<8x128xf32>
    %121 = arith.mulf %116, %120 : vector<8x128xf32>
    %122 = arith.truncf %121 : vector<8x128xf32> to vector<8x128xbf16>
    %123 = arith.index_cast %100 : i32 to index
    %c0_35 = arith.constant 0 : index
    %124 = vector.load %arg16[%123, %c0_35] : memref<32x128xbf16, #tpu.memory_space<vmem>>, vector<8x128xbf16>
    tpu.vector_store %arg16[%123, %c0_35], %122 {strides = array<i32>} : memref<32x128xbf16, #tpu.memory_space<vmem>>, vector<8x128xbf16>,
    %c4_i32 = arith.constant 4 : i32
    %c0_36 = arith.constant 0 : index
    %c0_37 = arith.constant 0 : index
    %c0_38 = arith.constant 0 : index
    %125 = vector.load %arg17[%c0_36, %c0_37, %c0_38] : memref<2x8x128xf32, #tpu.memory_space<vmem>>, vector<1x8x128xf32>
    %126 = vector.shape_cast %125 : vector<1x8x128xf32> to vector<8x128xf32>
    %127 = vector.shape_cast %121 : vector<8x128xf32> to vector<1x8x128xf32>
    tpu.vector_store %arg17[%c0_36, %c0_37, %c0_38], %127 {strides = array<i32>} : memref<2x8x128xf32, #tpu.memory_space<vmem>>, vector<1x8x128xf32>,
    %c0_39 = arith.constant 0 : index
    %c0_40 = arith.constant 0 : index
    %c0_41 = arith.constant 0 : index
    %128 = vector.load %arg18[%c0_39, %c0_40, %c0_41] : memref<2x8x128xf32, #tpu.memory_space<vmem>>, vector<1x8x128xf32>
    %129 = vector.shape_cast %128 : vector<1x8x128xf32> to vector<8x128xf32>
    %130 = vector.shape_cast %119 : vector<8x128xf32> to vector<1x8x128xf32>
    tpu.vector_store %arg18[%c0_39, %c0_40, %c0_41], %130 {strides = array<i32>} : memref<2x8x128xf32, #tpu.memory_space<vmem>>, vector<1x8x128xf32>,
    %c0_42 = arith.constant 0 : index
    %c0_43 = arith.constant 0 : index
    %131 = vector.load %arg16[%c0_42, %c0_43] : memref<32x128xbf16, #tpu.memory_space<vmem>>, vector<32x128xbf16>
    %c0_44 = arith.constant 0 : index
    %c0_45 = arith.constant 0 : index
    %132 = vector.load %arg7[%c0_44, %c0_45] : memref<128x512xbf16, #tpu.memory_space<vmem>>, vector<128x512xbf16>
    %cst_46 = arith.constant dense<0.000000e+00> : vector<32x512xf32>
    %133 = tpu.matmul %131, %132, %cst_46 {dimension_numbers = #tpu.dot_dimension_numbers<[1], [0], [0], [1], [0, 0, 1, 1], [], []>} : vector<32x128xbf16>, vector<128x512xbf16>, vector<32x512xf32> -> vector<32x512xf32>
    %c0_47 = arith.constant 0 : index
    %c0_48 = arith.constant 0 : index
    %134 = vector.load %arg8[%c0_47, %c0_48] : memref<1x512xf32, #tpu.memory_space<vmem>>, vector<1x512xf32>
    %135 = vector.broadcast %134 : vector<1x512xf32> to vector<32x512xf32>
    %136 = arith.addf %133, %135 : vector<32x512xf32>
    %c0_49 = arith.constant 0 : index
    %c0_50 = arith.constant 0 : index
    %137 = vector.load %arg15[%c0_49, %c0_50] : memref<32x512xf32, #tpu.memory_space<vmem>>, vector<32x512xf32>
    tpu.vector_store %arg15[%c0_49, %c0_50], %136 {strides = array<i32>} : memref<32x512xf32, #tpu.memory_space<vmem>>, vector<32x512xf32>,
    %c0_51 = arith.constant 0 : index
    %c0_52 = arith.constant 0 : index
    %138 = vector.load %arg9[%c0_51, %c0_52] : memref<128x512xbf16, #tpu.memory_space<vmem>>, vector<128x512xbf16>
    %c1 = arith.constant 1 : index
    %c0_53 = arith.constant 0 : index
    %c0_54 = arith.constant 0 : index
    %139 = vector.load %arg17[%c1, %c0_53, %c0_54] : memref<2x8x128xf32, #tpu.memory_space<vmem>>, vector<1x8x128xf32>
    %140 = vector.shape_cast %139 : vector<1x8x128xf32> to vector<8x128xf32>
    %c1_55 = arith.constant 1 : index
    %c0_56 = arith.constant 0 : index
    %c0_57 = arith.constant 0 : index
    %141 = vector.load %arg18[%c1_55, %c0_56, %c0_57] : memref<2x8x128xf32, #tpu.memory_space<vmem>>, vector<1x8x128xf32>
    %142 = vector.shape_cast %141 : vector<1x8x128xf32> to vector<8x128xf32>
    %c0_i32_58 = arith.constant 0 : i32
    %c8_i32_59 = arith.constant 8 : i32
    %143 = arith.muli %c0_i32_58, %c8_i32_59 : i32
    %144 = tpu.assume_multiple %143, 8 : i32
    %145 = arith.truncf %140 : vector<8x128xf32> to vector<8x128xbf16>
    %cst_60 = arith.constant dense<0.000000e+00> : vector<8x512xf32>
    %146 = tpu.matmul %145, %138, %cst_60 {dimension_numbers = #tpu.dot_dimension_numbers<[1], [0], [0], [1], [0, 0, 1, 1], [], []>} : vector<8x128xbf16>, vector<128x512xbf16>, vector<8x512xf32> -> vector<8x512xf32>
    %147 = arith.index_cast %144 : i32 to index
    %c0_61 = arith.constant 0 : index
    %148 = vector.load %arg15[%147, %c0_61] : memref<32x512xf32, #tpu.memory_space<vmem>>, vector<8x512xf32>
    %149 = arith.addf %146, %148 : vector<8x512xf32>
    %150 = vector.extract_strided_slice %149 {offsets = [0, 0], sizes = [8, 384], strides = [1, 1]} : vector<8x512xf32> to vector<8x384xf32>
    %151 = arith.negf %150 : vector<8x384xf32>
    %152 = math.exp %151 : vector<8x384xf32>
    %cst_62 = arith.constant 1.000000e+00 : f32
    %153 = vector.broadcast %cst_62 : f32 to vector<8x384xf32>
    %154 = arith.addf %153, %152 : vector<8x384xf32>
    %155 = arith.divf %153, %154 : vector<8x384xf32>
    %156 = vector.extract_strided_slice %149 {offsets = [0, 384], sizes = [8, 128], strides = [1, 1]} : vector<8x512xf32> to vector<8x128xf32>
    %157 = math.tanh %156 : vector<8x128xf32>
    %158 = vector.extract_strided_slice %155 {offsets = [0, 0], sizes = [8, 128], strides = [1, 1]} : vector<8x384xf32> to vector<8x128xf32>
    %159 = vector.extract_strided_slice %155 {offsets = [0, 128], sizes = [8, 128], strides = [1, 1]} : vector<8x384xf32> to vector<8x128xf32>
    %160 = vector.extract_strided_slice %155 {offsets = [0, 256], sizes = [8, 128], strides = [1, 1]} : vector<8x384xf32> to vector<8x128xf32>
    %161 = arith.mulf %159, %142 : vector<8x128xf32>
    %162 = arith.mulf %158, %157 : vector<8x128xf32>
    %163 = arith.addf %161, %162 : vector<8x128xf32>
    %164 = math.tanh %163 : vector<8x128xf32>
    %165 = arith.mulf %160, %164 : vector<8x128xf32>
    %166 = arith.truncf %165 : vector<8x128xf32> to vector<8x128xbf16>
    %167 = arith.index_cast %144 : i32 to index
    %c0_63 = arith.constant 0 : index
    %168 = vector.load %arg16[%167, %c0_63] : memref<32x128xbf16, #tpu.memory_space<vmem>>, vector<8x128xbf16>
    tpu.vector_store %arg16[%167, %c0_63], %166 {strides = array<i32>} : memref<32x128xbf16, #tpu.memory_space<vmem>>, vector<8x128xbf16>,
    %c1_i32_64 = arith.constant 1 : i32
    %c8_i32_65 = arith.constant 8 : i32
    %169 = arith.muli %c1_i32_64, %c8_i32_65 : i32
    %170 = tpu.assume_multiple %169, 8 : i32
    %171 = arith.truncf %165 : vector<8x128xf32> to vector<8x128xbf16>
    %cst_66 = arith.constant dense<0.000000e+00> : vector<8x512xf32>
    %172 = tpu.matmul %171, %138, %cst_66 {dimension_numbers = #tpu.dot_dimension_numbers<[1], [0], [0], [1], [0, 0, 1, 1], [], []>} : vector<8x128xbf16>, vector<128x512xbf16>, vector<8x512xf32> -> vector<8x512xf32>
    %173 = arith.index_cast %170 : i32 to index
    %c0_67 = arith.constant 0 : index
    %174 = vector.load %arg15[%173, %c0_67] : memref<32x512xf32, #tpu.memory_space<vmem>>, vector<8x512xf32>
    %175 = arith.addf %172, %174 : vector<8x512xf32>
    %176 = vector.extract_strided_slice %175 {offsets = [0, 0], sizes = [8, 384], strides = [1, 1]} : vector<8x512xf32> to vector<8x384xf32>
    %177 = arith.negf %176 : vector<8x384xf32>
    %178 = math.exp %177 : vector<8x384xf32>
    %cst_68 = arith.constant 1.000000e+00 : f32
    %179 = vector.broadcast %cst_68 : f32 to vector<8x384xf32>
    %180 = arith.addf %179, %178 : vector<8x384xf32>
    %181 = arith.divf %179, %180 : vector<8x384xf32>
    %182 = vector.extract_strided_slice %175 {offsets = [0, 384], sizes = [8, 128], strides = [1, 1]} : vector<8x512xf32> to vector<8x128xf32>
    %183 = math.tanh %182 : vector<8x128xf32>
    %184 = vector.extract_strided_slice %181 {offsets = [0, 0], sizes = [8, 128], strides = [1, 1]} : vector<8x384xf32> to vector<8x128xf32>
    %185 = vector.extract_strided_slice %181 {offsets = [0, 128], sizes = [8, 128], strides = [1, 1]} : vector<8x384xf32> to vector<8x128xf32>
    %186 = vector.extract_strided_slice %181 {offsets = [0, 256], sizes = [8, 128], strides = [1, 1]} : vector<8x384xf32> to vector<8x128xf32>
    %187 = arith.mulf %185, %163 : vector<8x128xf32>
    %188 = arith.mulf %184, %183 : vector<8x128xf32>
    %189 = arith.addf %187, %188 : vector<8x128xf32>
    %190 = math.tanh %189 : vector<8x128xf32>
    %191 = arith.mulf %186, %190 : vector<8x128xf32>
    %192 = arith.truncf %191 : vector<8x128xf32> to vector<8x128xbf16>
    %193 = arith.index_cast %170 : i32 to index
    %c0_69 = arith.constant 0 : index
    %194 = vector.load %arg16[%193, %c0_69] : memref<32x128xbf16, #tpu.memory_space<vmem>>, vector<8x128xbf16>
    tpu.vector_store %arg16[%193, %c0_69], %192 {strides = array<i32>} : memref<32x128xbf16, #tpu.memory_space<vmem>>, vector<8x128xbf16>,
    %c2_i32_70 = arith.constant 2 : i32
    %c8_i32_71 = arith.constant 8 : i32
    %195 = arith.muli %c2_i32_70, %c8_i32_71 : i32
    %196 = tpu.assume_multiple %195, 8 : i32
    %197 = arith.truncf %191 : vector<8x128xf32> to vector<8x128xbf16>
    %cst_72 = arith.constant dense<0.000000e+00> : vector<8x512xf32>
    %198 = tpu.matmul %197, %138, %cst_72 {dimension_numbers = #tpu.dot_dimension_numbers<[1], [0], [0], [1], [0, 0, 1, 1], [], []>} : vector<8x128xbf16>, vector<128x512xbf16>, vector<8x512xf32> -> vector<8x512xf32>
    %199 = arith.index_cast %196 : i32 to index
    %c0_73 = arith.constant 0 : index
    %200 = vector.load %arg15[%199, %c0_73] : memref<32x512xf32, #tpu.memory_space<vmem>>, vector<8x512xf32>
    %201 = arith.addf %198, %200 : vector<8x512xf32>
    %202 = vector.extract_strided_slice %201 {offsets = [0, 0], sizes = [8, 384], strides = [1, 1]} : vector<8x512xf32> to vector<8x384xf32>
    %203 = arith.negf %202 : vector<8x384xf32>
    %204 = math.exp %203 : vector<8x384xf32>
    %cst_74 = arith.constant 1.000000e+00 : f32
    %205 = vector.broadcast %cst_74 : f32 to vector<8x384xf32>
    %206 = arith.addf %205, %204 : vector<8x384xf32>
    %207 = arith.divf %205, %206 : vector<8x384xf32>
    %208 = vector.extract_strided_slice %201 {offsets = [0, 384], sizes = [8, 128], strides = [1, 1]} : vector<8x512xf32> to vector<8x128xf32>
    %209 = math.tanh %208 : vector<8x128xf32>
    %210 = vector.extract_strided_slice %207 {offsets = [0, 0], sizes = [8, 128], strides = [1, 1]} : vector<8x384xf32> to vector<8x128xf32>
    %211 = vector.extract_strided_slice %207 {offsets = [0, 128], sizes = [8, 128], strides = [1, 1]} : vector<8x384xf32> to vector<8x128xf32>
    %212 = vector.extract_strided_slice %207 {offsets = [0, 256], sizes = [8, 128], strides = [1, 1]} : vector<8x384xf32> to vector<8x128xf32>
    %213 = arith.mulf %211, %189 : vector<8x128xf32>
    %214 = arith.mulf %210, %209 : vector<8x128xf32>
    %215 = arith.addf %213, %214 : vector<8x128xf32>
    %216 = math.tanh %215 : vector<8x128xf32>
    %217 = arith.mulf %212, %216 : vector<8x128xf32>
    %218 = arith.truncf %217 : vector<8x128xf32> to vector<8x128xbf16>
    %219 = arith.index_cast %196 : i32 to index
    %c0_75 = arith.constant 0 : index
    %220 = vector.load %arg16[%219, %c0_75] : memref<32x128xbf16, #tpu.memory_space<vmem>>, vector<8x128xbf16>
    tpu.vector_store %arg16[%219, %c0_75], %218 {strides = array<i32>} : memref<32x128xbf16, #tpu.memory_space<vmem>>, vector<8x128xbf16>,
    %c3_i32_76 = arith.constant 3 : i32
    %c8_i32_77 = arith.constant 8 : i32
    %221 = arith.muli %c3_i32_76, %c8_i32_77 : i32
    %222 = tpu.assume_multiple %221, 8 : i32
    %223 = arith.truncf %217 : vector<8x128xf32> to vector<8x128xbf16>
    %cst_78 = arith.constant dense<0.000000e+00> : vector<8x512xf32>
    %224 = tpu.matmul %223, %138, %cst_78 {dimension_numbers = #tpu.dot_dimension_numbers<[1], [0], [0], [1], [0, 0, 1, 1], [], []>} : vector<8x128xbf16>, vector<128x512xbf16>, vector<8x512xf32> -> vector<8x512xf32>
    %225 = arith.index_cast %222 : i32 to index
    %c0_79 = arith.constant 0 : index
    %226 = vector.load %arg15[%225, %c0_79] : memref<32x512xf32, #tpu.memory_space<vmem>>, vector<8x512xf32>
    %227 = arith.addf %224, %226 : vector<8x512xf32>
    %228 = vector.extract_strided_slice %227 {offsets = [0, 0], sizes = [8, 384], strides = [1, 1]} : vector<8x512xf32> to vector<8x384xf32>
    %229 = arith.negf %228 : vector<8x384xf32>
    %230 = math.exp %229 : vector<8x384xf32>
    %cst_80 = arith.constant 1.000000e+00 : f32
    %231 = vector.broadcast %cst_80 : f32 to vector<8x384xf32>
    %232 = arith.addf %231, %230 : vector<8x384xf32>
    %233 = arith.divf %231, %232 : vector<8x384xf32>
    %234 = vector.extract_strided_slice %227 {offsets = [0, 384], sizes = [8, 128], strides = [1, 1]} : vector<8x512xf32> to vector<8x128xf32>
    %235 = math.tanh %234 : vector<8x128xf32>
    %236 = vector.extract_strided_slice %233 {offsets = [0, 0], sizes = [8, 128], strides = [1, 1]} : vector<8x384xf32> to vector<8x128xf32>
    %237 = vector.extract_strided_slice %233 {offsets = [0, 128], sizes = [8, 128], strides = [1, 1]} : vector<8x384xf32> to vector<8x128xf32>
    %238 = vector.extract_strided_slice %233 {offsets = [0, 256], sizes = [8, 128], strides = [1, 1]} : vector<8x384xf32> to vector<8x128xf32>
    %239 = arith.mulf %237, %215 : vector<8x128xf32>
    %240 = arith.mulf %236, %235 : vector<8x128xf32>
    %241 = arith.addf %239, %240 : vector<8x128xf32>
    %242 = math.tanh %241 : vector<8x128xf32>
    %243 = arith.mulf %238, %242 : vector<8x128xf32>
    %244 = arith.truncf %243 : vector<8x128xf32> to vector<8x128xbf16>
    %245 = arith.index_cast %222 : i32 to index
    %c0_81 = arith.constant 0 : index
    %246 = vector.load %arg16[%245, %c0_81] : memref<32x128xbf16, #tpu.memory_space<vmem>>, vector<8x128xbf16>
    tpu.vector_store %arg16[%245, %c0_81], %244 {strides = array<i32>} : memref<32x128xbf16, #tpu.memory_space<vmem>>, vector<8x128xbf16>,
    %c4_i32_82 = arith.constant 4 : i32
    %c1_83 = arith.constant 1 : index
    %c0_84 = arith.constant 0 : index
    %c0_85 = arith.constant 0 : index
    %247 = vector.load %arg17[%c1_83, %c0_84, %c0_85] : memref<2x8x128xf32, #tpu.memory_space<vmem>>, vector<1x8x128xf32>
    %248 = vector.shape_cast %247 : vector<1x8x128xf32> to vector<8x128xf32>
    %249 = vector.shape_cast %243 : vector<8x128xf32> to vector<1x8x128xf32>
    tpu.vector_store %arg17[%c1_83, %c0_84, %c0_85], %249 {strides = array<i32>} : memref<2x8x128xf32, #tpu.memory_space<vmem>>, vector<1x8x128xf32>,
    %c1_86 = arith.constant 1 : index
    %c0_87 = arith.constant 0 : index
    %c0_88 = arith.constant 0 : index
    %250 = vector.load %arg18[%c1_86, %c0_87, %c0_88] : memref<2x8x128xf32, #tpu.memory_space<vmem>>, vector<1x8x128xf32>
    %251 = vector.shape_cast %250 : vector<1x8x128xf32> to vector<8x128xf32>
    %252 = vector.shape_cast %241 : vector<8x128xf32> to vector<1x8x128xf32>
    tpu.vector_store %arg18[%c1_86, %c0_87, %c0_88], %252 {strides = array<i32>} : memref<2x8x128xf32, #tpu.memory_space<vmem>>, vector<1x8x128xf32>,
    %c0_89 = arith.constant 0 : index
    %c0_90 = arith.constant 0 : index
    %253 = vector.load %arg16[%c0_89, %c0_90] : memref<32x128xbf16, #tpu.memory_space<vmem>>, vector<32x128xbf16>
    %c0_91 = arith.constant 0 : index
    %c0_92 = arith.constant 0 : index
    %254 = vector.load %arg10[%c0_91, %c0_92] : memref<128x128xbf16, #tpu.memory_space<vmem>>, vector<128x128xbf16>
    %cst_93 = arith.constant dense<0.000000e+00> : vector<32x128xf32>
    %255 = tpu.matmul %253, %254, %cst_93 {dimension_numbers = #tpu.dot_dimension_numbers<[1], [0], [0], [1], [0, 0, 1, 1], [], []>} : vector<32x128xbf16>, vector<128x128xbf16>, vector<32x128xf32> -> vector<32x128xf32>
    %c0_94 = arith.constant 0 : index
    %c0_95 = arith.constant 0 : index
    %256 = vector.load %arg11[%c0_94, %c0_95] : memref<1x128xf32, #tpu.memory_space<vmem>>, vector<1x128xf32>
    %257 = vector.broadcast %256 : vector<1x128xf32> to vector<32x128xf32>
    %258 = arith.addf %255, %257 : vector<32x128xf32>
    %c0_96 = arith.constant 0 : index
    %c0_97 = arith.constant 0 : index
    %259 = vector.load %arg12[%c0_96, %c0_97] : memref<32x128xf32, #tpu.memory_space<vmem>>, vector<32x128xf32>
    tpu.vector_store %arg12[%c0_96, %c0_97], %258 {strides = array<i32>} : memref<32x128xf32, #tpu.memory_space<vmem>>, vector<32x128xf32>,
    %c1_i32_98 = arith.constant 1 : i32
    %260 = arith.cmpi eq, %arg0, %c1_i32_98 : i32
    %261 = arith.extui %260 : i1 to i32
    %c0_i32_99 = arith.constant 0 : i32
    %262 = arith.cmpi ne, %261, %c0_i32_99 : i32
    scf.if %262 {
      %c0_100 = arith.constant 0 : index
      %c0_101 = arith.constant 0 : index
      %c0_102 = arith.constant 0 : index
      %263 = vector.load %arg17[%c0_100, %c0_101, %c0_102] : memref<2x8x128xf32, #tpu.memory_space<vmem>>, vector<2x8x128xf32>
      %c0_103 = arith.constant 0 : index
      %c0_104 = arith.constant 0 : index
      %c0_105 = arith.constant 0 : index
      %264 = vector.load %arg13[%c0_103, %c0_104, %c0_105] : memref<2x8x128xf32, #tpu.memory_space<vmem>>, vector<2x8x128xf32>
      tpu.vector_store %arg13[%c0_103, %c0_104, %c0_105], %263 {strides = array<i32>} : memref<2x8x128xf32, #tpu.memory_space<vmem>>, vector<2x8x128xf32>,
      %c0_106 = arith.constant 0 : index
      %c0_107 = arith.constant 0 : index
      %c0_108 = arith.constant 0 : index
      %265 = vector.load %arg18[%c0_106, %c0_107, %c0_108] : memref<2x8x128xf32, #tpu.memory_space<vmem>>, vector<2x8x128xf32>
      %c0_109 = arith.constant 0 : index
      %c0_110 = arith.constant 0 : index
      %c0_111 = arith.constant 0 : index
      %266 = vector.load %arg14[%c0_109, %c0_110, %c0_111] : memref<2x8x128xf32, #tpu.memory_space<vmem>>, vector<2x8x128xf32>
      tpu.vector_store %arg14[%c0_109, %c0_110, %c0_111], %265 {strides = array<i32>} : memref<2x8x128xf32, #tpu.memory_space<vmem>>, vector<2x8x128xf32>,
    } else {
    }
    return
  }
  func.func @transform_0(%arg0: i32) -> (i32, i32) {
    %c0_i32 = arith.constant 0 : i32
    %c0_i32_0 = arith.constant 0 : i32
    return %arg0, %c0_i32 : i32, i32
  }
  func.func @transform_1(%arg0: i32) -> (i32, i32, i32) {
    %c0_i32 = arith.constant 0 : i32
    %c0_i32_0 = arith.constant 0 : i32
    %c0_i32_1 = arith.constant 0 : i32
    %c0_i32_2 = arith.constant 0 : i32
    return %c0_i32, %c0_i32_0, %c0_i32_1 : i32, i32, i32
  }
  func.func @transform_2(%arg0: i32) -> (i32, i32, i32) {
    %c0_i32 = arith.constant 0 : i32
    %c0_i32_0 = arith.constant 0 : i32
    %c0_i32_1 = arith.constant 0 : i32
    %c0_i32_2 = arith.constant 0 : i32
    return %c0_i32, %c0_i32_0, %c0_i32_1 : i32, i32, i32
  }
  func.func @transform_3(%arg0: i32) -> (i32, i32) {
    %c0_i32 = arith.constant 0 : i32
    %c0_i32_0 = arith.constant 0 : i32
    %c0_i32_1 = arith.constant 0 : i32
    return %c0_i32, %c0_i32_0 : i32, i32
  }
  func.func @transform_4(%arg0: i32) -> (i32, i32) {
    %c0_i32 = arith.constant 0 : i32
    %c0_i32_0 = arith.constant 0 : i32
    %c0_i32_1 = arith.constant 0 : i32
    return %c0_i32, %c0_i32_0 : i32, i32
  }
  func.func @transform_5(%arg0: i32) -> (i32, i32) {
    %c0_i32 = arith.constant 0 : i32
    %c0_i32_0 = arith.constant 0 : i32
    %c0_i32_1 = arith.constant 0 : i32
    return %c0_i32, %c0_i32_0 : i32, i32
  }
  func.func @transform_6(%arg0: i32) -> (i32, i32) {
    %c0_i32 = arith.constant 0 : i32
    %c0_i32_0 = arith.constant 0 : i32
    %c0_i32_1 = arith.constant 0 : i32
    return %c0_i32, %c0_i32_0 : i32, i32
  }
  func.func @transform_7(%arg0: i32) -> (i32, i32) {
    %c0_i32 = arith.constant 0 : i32
    %c0_i32_0 = arith.constant 0 : i32
    %c0_i32_1 = arith.constant 0 : i32
    return %c0_i32, %c0_i32_0 : i32, i32
  }
  func.func @transform_8(%arg0: i32) -> (i32, i32) {
    %c0_i32 = arith.constant 0 : i32
    %c0_i32_0 = arith.constant 0 : i32
    %c0_i32_1 = arith.constant 0 : i32
    return %c0_i32, %c0_i32_0 : i32, i32
  }
  func.func @transform_9(%arg0: i32) -> (i32, i32) {
    %c0_i32 = arith.constant 0 : i32
    %c0_i32_0 = arith.constant 0 : i32
    %c0_i32_1 = arith.constant 0 : i32
    return %c0_i32, %c0_i32_0 : i32, i32
  }
  func.func @transform_10(%arg0: i32) -> (i32, i32) {
    %c0_i32 = arith.constant 0 : i32
    %c0_i32_0 = arith.constant 0 : i32
    %c0_i32_1 = arith.constant 0 : i32
    return %c0_i32, %c0_i32_0 : i32, i32
  }
  func.func @transform_11(%arg0: i32) -> (i32, i32) {
    %c0_i32 = arith.constant 0 : i32
    %c0_i32_0 = arith.constant 0 : i32
    return %arg0, %c0_i32 : i32, i32
  }
  func.func @transform_12(%arg0: i32) -> (i32, i32, i32) {
    %c0_i32 = arith.constant 0 : i32
    %c0_i32_0 = arith.constant 0 : i32
    %c0_i32_1 = arith.constant 0 : i32
    %c0_i32_2 = arith.constant 0 : i32
    return %c0_i32, %c0_i32_0, %c0_i32_1 : i32, i32, i32
  }
  func.func @transform_13(%arg0: i32) -> (i32, i32, i32) {
    %c0_i32 = arith.constant 0 : i32
    %c0_i32_0 = arith.constant 0 : i32
    %c0_i32_1 = arith.constant 0 : i32
    %c0_i32_2 = arith.constant 0 : i32
    return %c0_i32, %c0_i32_0, %c0_i32_1 : i32, i32, i32
  }
}

</mosaic_0001>

<llo_original>
// kernel: tpu_custom_call.1
$region0: #{tpu_custom_call.1}
  #allocation0 [shape = 'u32[]', space=smem, size = 0x4, offset = 0x4, fixed_abs, tag = 'smem constant byte address 0x4 - core index']
  #allocation1 [shape = 'u32[144,128]{1,0:T(1,128)}', space=vmem, size = 0x12000, scoped, tag = 'internal scratch']
  #allocation2 [shape = 'f32[32,512]{1,0:T(8,128)}', space=vmem, size = 0x10000, scoped, tag = 'scratch operand']
  #allocation3 [shape = 'bf16[32,128]{1,0:T(8,128)(2,1)}', space=vmem, size = 0x2000, scoped, tag = 'scratch operand']
  #allocation4 [shape = 'f32[2,8,128]{2,1,0:T(8,128)}', space=vmem, size = 0x2000, scoped, tag = 'scratch operand']
  #allocation5 [shape = 'f32[2,8,128]{2,1,0:T(8,128)}', space=vmem, size = 0x2000, scoped, tag = 'scratch operand']
  %s0 = inlined_call_operand.vmem [shape: s32[64,1], index: 0, kind: input, shape index: {}]
  %s1 = inlined_call_operand.vmem [shape: f32[2,8,128], index: 1, kind: input, shape index: {}]
  %s2 = inlined_call_operand.hbm [shape: f32[2,8,128], index: 2, kind: input, shape index: {}]
  %s3 = inlined_call_operand.hbm [shape: bf16[128,512], index: 3, kind: input, shape index: {}]
  %s4 = inlined_call_operand.hbm [shape: f32[1,512], index: 4, kind: input, shape index: {}]
  %s5 = inlined_call_operand.hbm [shape: bf16[128,512], index: 5, kind: input, shape index: {}]
  %s6 = inlined_call_operand.hbm [shape: bf16[128,512], index: 6, kind: input, shape index: {}]
  %s7 = inlined_call_operand.hbm [shape: f32[1,512], index: 7, kind: input, shape index: {}]
  %s8 = inlined_call_operand.hbm [shape: bf16[128,512], index: 8, kind: input, shape index: {}]
  %s9 = inlined_call_operand.vmem [shape: bf16[128,128], index: 9, kind: input, shape index: {}]
  %s10 = inlined_call_operand.vmem [shape: f32[1,128], index: 10, kind: input, shape index: {}]
  %s11 = inlined_call_operand.hbm [shape: f32[64,128], index: 11, kind: output, shape index: {0}]
  %s12 = inlined_call_operand.hbm [shape: f32[2,8,128], index: 12, kind: output, shape index: {1}]
  %s13 = inlined_call_operand.hbm [shape: f32[2,8,128], index: 13, kind: output, shape index: {2}]
  %14 = xla_tuple %s11, %s12, %s13
  %s15 = sld [smem:[#allocation0]]
  $region129: #{tpu_custom_call.1} parent=0
    _
  %s17 = ssub.s32 1, %s15
  %s18 = scalar_select 0, %s17, %s15
  $region1: #{tpu_custom_call.1} parent=0
    #allocation6 [shape = 'u8[8192]{0}', space=vmem, size = 0x2000, scoped, tag = 'input window, operand 2, single buffered']
    #allocation7 [shape = 's32[2]{0}', space=sflag, size = 0x8, scoped, tag = 'scoped memory for tpu_custom_call.1']
    #allocation8 [shape = 's32[2]{0}', space=sflag, size = 0x8, scoped, tag = 'scoped memory for tpu_custom_call.1']
    #allocation9 [shape = 'u8[131072]{0}', space=vmem, size = 0x20000, scoped, tag = 'input window, operand 3, single buffered']
    #allocation10 [shape = 's32[1]{0}', space=sflag, size = 0x4, scoped, tag = 'scoped memory for tpu_custom_call.1']
    #allocation11 [shape = 'u8[2048]{0}', space=vmem, size = 0x800, scoped, tag = 'input window, operand 4, single buffered']
    #allocation12 [shape = 'u8[131072]{0}', space=vmem, size = 0x20000, scoped, tag = 'input window, operand 5, single buffered']
    #allocation13 [shape = 's32[1]{0}', space=sflag, size = 0x4, scoped, tag = 'scoped memory for tpu_custom_call.1']
    #allocation14 [shape = 'u8[131072]{0}', space=vmem, size = 0x20000, scoped, tag = 'input window, operand 6, single buffered']
    #allocation15 [shape = 'u8[2048]{0}', space=vmem, size = 0x800, scoped, tag = 'input window, operand 7, single buffered']
    #allocation16 [shape = 's32[1]{0}', space=sflag, size = 0x4, scoped, tag = 'scoped memory for tpu_custom_call.1']
    #allocation17 [shape = 'u8[131072]{0}', space=vmem, size = 0x20000, scoped, tag = 'input window, operand 8, single buffered']
    #allocation18 [shape = 'u8[32768]{0}', space=vmem, size = 0x8000, scoped, tag = 'output window, operand 0']
    #allocation19 [shape = 'u8[8192]{0}', space=vmem, size = 0x2000, scoped, tag = 'output window, operand 1, single buffered']
    #allocation20 [shape = 's32[1]{0}', space=sflag, size = 0x4, scoped, tag = 'scoped memory for tpu_custom_call.1']
    #allocation21 [shape = 'u8[8192]{0}', space=vmem, size = 0x2000, scoped, tag = 'output window, operand 2, single buffered']
    %19 = vsyncpa [#allocation7], 0
    %20 = vsyncpa [#allocation10], 0
    %21 = vsyncpa [#allocation13], 0
    %22 = vsyncpa [#allocation16], 0
    %23 = vsyncpa [#allocation8], 0
    %s24 = scalar_lea.sflag [#allocation8], 1
    %25 = vsyncpa %s24, 0
    %26 = vsyncpa [#allocation20], 0
    loop: start=0, step=1, limit=4
    $region2: #{tpu_custom_call.1} parent=1 // loop_pre_header
      _
    $region3: #{tpu_custom_call.1} parent=1 // loop_header
      %s28 = sphi 0, %s32
      %p29 = scmp.ge.s32.totalorder %s28, 4
      %s38 = sphi 0, %s40
      %s41 = sphi 0, %s38
      %s42 = sphi 0, %s41
      %s58 = sphi 0, %s42
      %s62 = sphi 0, %s62
      %s64 = sphi 0, %s62
      %s65 = sphi 0, %s64
      %s79 = sphi 0, %s65
      %s83 = sphi 0, %s83
      %s85 = sphi 0, %s83
      %s86 = sphi 0, %s85
      %s100 = sphi 0, %s86
      %s104 = sphi 0, %s104
      %s106 = sphi 0, %s104
      %s107 = sphi 0, %s106
      %s121 = sphi 0, %s107
      %s125 = sphi 0, %s125
      %s127 = sphi 0, %s125
      %s128 = sphi 0, %s127
      %s142 = sphi 0, %s128
      %s146 = sphi 0, %s146
      %s148 = sphi 0, %s146
      %s149 = sphi 0, %s148
      %s163 = sphi 0, %s149
      %s167 = sphi 0, %s167
      %s169 = sphi 0, %s167
      %s170 = sphi 0, %s169
      %s184 = sphi 0, %s170
      %s188 = sphi 0, %s188
      %s190 = sphi 0, %s188
      %s191 = sphi 0, %s190
      %s205 = sphi 0, %s191
      %s209 = sphi 0, %s209
      %s211 = sphi 0, %s209
      %s212 = sphi 0, %s211
      %s226 = sphi 0, %s212
      %s230 = sphi 0, %s230
      %s232 = sphi 0, %s230
      %s233 = sphi 0, %s232
      %s247 = sphi 0, %s233
      %s251 = sphi 0, %s251
      %s253 = sphi 0, %s251
      %s254 = sphi 0, %s253
      %s268 = sphi 0, %s254
      %s274 = sphi 0, %s276
      %s277 = sphi 0, %s274
      %s278 = sphi 0, %s277
      %s294 = sphi 0, %s278
      %s298 = sphi 0, %s298
      %s300 = sphi 0, %s298
      %s301 = sphi 0, %s300
      %s315 = sphi 0, %s301
      %s319 = sphi 0, %s319
      %s321 = sphi 0, %s319
      %s322 = sphi 0, %s321
      %s336 = sphi 0, %s322
    $region4: #{tpu_custom_call.1} parent=1 // loop_header_branch
      %31 = sbr.rel (%p29) target = $region8
    $region5: #{tpu_custom_call.1} parent=1 // loop_body
      %s33 = ssub.s32 %s28, 1
      %s34 = ssub.s32 %s28, 2
      %s35 = sadd.s32 %s28, 1
      %s36 = ssub.s32 %s28, %s35
      %p37 = scmp.eq.s32.totalorder %s36, 0
      %s39 = sadd.s32 %s38, 1
      %s40 = scalar_select %p37, %s38, %s39
      %p43 = pneg %p37
      %p44 = scmp.eq.s32.totalorder %s28, 1
      %p45 = por %p43, %p44
      %p46 = scmp.ne.s32.totalorder %s38, %s41
      %p47 = scmp.eq.s32.totalorder %s28, 0
      %p48 = por %p46, %p47
      %p49 = scmp.ne.s32.totalorder %s38, %s41
      %p50 = scmp.eq.s32.totalorder %s33, 1
      %p51 = por %p49, %p50
      %p52 = scmp.ne.s32.totalorder %s41, %s42
      %p53 = scmp.eq.s32.totalorder %s33, 0
      %p54 = por %p52, %p53
      %p55 = scmp.ne.s32.totalorder %s41, %s42
      %p56 = scmp.eq.s32.totalorder %s34, 1
      %p57 = por %p55, %p56
      %p59 = scmp.ne.s32.totalorder %s42, %s58
      %p60 = scmp.eq.s32.totalorder %s34, 0
      %p61 = por %p59, %p60
      %s63 = sadd.s32 %s62, 1
      %p66 = scmp.eq.s32.totalorder %s28, 1
      %p67 = scmp.ne.s32.totalorder %s62, %s64
      %p68 = scmp.eq.s32.totalorder %s28, 0
      %p69 = por %p67, %p68
      %p70 = scmp.ne.s32.totalorder %s62, %s64
      %p71 = scmp.eq.s32.totalorder %s33, 1
      %p72 = por %p70, %p71
      %p73 = scmp.ne.s32.totalorder %s64, %s65
      %p74 = scmp.eq.s32.totalorder %s33, 0
      %p75 = por %p73, %p74
      %p76 = scmp.ne.s32.totalorder %s64, %s65
      %p77 = scmp.eq.s32.totalorder %s34, 1
      %p78 = por %p76, %p77
      %p80 = scmp.ne.s32.totalorder %s65, %s79
      %p81 = scmp.eq.s32.totalorder %s34, 0
      %p82 = por %p80, %p81
      %s84 = sadd.s32 %s83, 1
      %p87 = scmp.eq.s32.totalorder %s28, 1
      %p88 = scmp.ne.s32.totalorder %s83, %s85
      %p89 = scmp.eq.s32.totalorder %s28, 0
      %p90 = por %p88, %p89
      %p91 = scmp.ne.s32.totalorder %s83, %s85
      %p92 = scmp.eq.s32.totalorder %s33, 1
      %p93 = por %p91, %p92
      %p94 = scmp.ne.s32.totalorder %s85, %s86
      %p95 = scmp.eq.s32.totalorder %s33, 0
      %p96 = por %p94, %p95
      %p97 = scmp.ne.s32.totalorder %s85, %s86
      %p98 = scmp.eq.s32.totalorder %s34, 1
      %p99 = por %p97, %p98
      %p101 = scmp.ne.s32.totalorder %s86, %s100
      %p102 = scmp.eq.s32.totalorder %s34, 0
      %p103 = por %p101, %p102
      %s105 = sadd.s32 %s104, 1
      %p108 = scmp.eq.s32.totalorder %s28, 1
      %p109 = scmp.ne.s32.totalorder %s104, %s106
      %p110 = scmp.eq.s32.totalorder %s28, 0
      %p111 = por %p109, %p110
      %p112 = scmp.ne.s32.totalorder %s104, %s106
      %p113 = scmp.eq.s32.totalorder %s33, 1
      %p114 = por %p112, %p113
      %p115 = scmp.ne.s32.totalorder %s106, %s107
      %p116 = scmp.eq.s32.totalorder %s33, 0
      %p117 = por %p115, %p116
      %p118 = scmp.ne.s32.totalorder %s106, %s107
      %p119 = scmp.eq.s32.totalorder %s34, 1
      %p120 = por %p118, %p119
      %p122 = scmp.ne.s32.totalorder %s107, %s121
      %p123 = scmp.eq.s32.totalorder %s34, 0
      %p124 = por %p122, %p123
      %s126 = sadd.s32 %s125, 1
      %p129 = scmp.eq.s32.totalorder %s28, 1
      %p130 = scmp.ne.s32.totalorder %s125, %s127
      %p131 = scmp.eq.s32.totalorder %s28, 0
      %p132 = por %p130, %p131
      %p133 = scmp.ne.s32.totalorder %s125, %s127
      %p134 = scmp.eq.s32.totalorder %s33, 1
      %p135 = por %p133, %p134
      %p136 = scmp.ne.s32.totalorder %s127, %s128
      %p137 = scmp.eq.s32.totalorder %s33, 0
      %p138 = por %p136, %p137
      %p139 = scmp.ne.s32.totalorder %s127, %s128
      %p140 = scmp.eq.s32.totalorder %s34, 1
      %p141 = por %p139, %p140
      %p143 = scmp.ne.s32.totalorder %s128, %s142
      %p144 = scmp.eq.s32.totalorder %s34, 0
      %p145 = por %p143, %p144
      %s147 = sadd.s32 %s146, 1
      %p150 = scmp.eq.s32.totalorder %s28, 1
      %p151 = scmp.ne.s32.totalorder %s146, %s148
      %p152 = scmp.eq.s32.totalorder %s28, 0
      %p153 = por %p151, %p152
      %p154 = scmp.ne.s32.totalorder %s146, %s148
      %p155 = scmp.eq.s32.totalorder %s33, 1
      %p156 = por %p154, %p155
      %p157 = scmp.ne.s32.totalorder %s148, %s149
      %p158 = scmp.eq.s32.totalorder %s33, 0
      %p159 = por %p157, %p158
      %p160 = scmp.ne.s32.totalorder %s148, %s149
      %p161 = scmp.eq.s32.totalorder %s34, 1
      %p162 = por %p160, %p161
      %p164 = scmp.ne.s32.totalorder %s149, %s163
      %p165 = scmp.eq.s32.totalorder %s34, 0
      %p166 = por %p164, %p165
      %s168 = sadd.s32 %s167, 1
      %p171 = scmp.eq.s32.totalorder %s28, 1
      %p172 = scmp.ne.s32.totalorder %s167, %s169
      %p173 = scmp.eq.s32.totalorder %s28, 0
      %p174 = por %p172, %p173
      %p175 = scmp.ne.s32.totalorder %s167, %s169
      %p176 = scmp.eq.s32.totalorder %s33, 1
      %p177 = por %p175, %p176
      %p178 = scmp.ne.s32.totalorder %s169, %s170
      %p179 = scmp.eq.s32.totalorder %s33, 0
      %p180 = por %p178, %p179
      %p181 = scmp.ne.s32.totalorder %s169, %s170
      %p182 = scmp.eq.s32.totalorder %s34, 1
      %p183 = por %p181, %p182
      %p185 = scmp.ne.s32.totalorder %s170, %s184
      %p186 = scmp.eq.s32.totalorder %s34, 0
      %p187 = por %p185, %p186
      %s189 = sadd.s32 %s188, 1
      %p192 = scmp.eq.s32.totalorder %s28, 1
      %p193 = scmp.ne.s32.totalorder %s188, %s190
      %p194 = scmp.eq.s32.totalorder %s28, 0
      %p195 = por %p193, %p194
      %p196 = scmp.ne.s32.totalorder %s188, %s190
      %p197 = scmp.eq.s32.totalorder %s33, 1
      %p198 = por %p196, %p197
      %p199 = scmp.ne.s32.totalorder %s190, %s191
      %p200 = scmp.eq.s32.totalorder %s33, 0
      %p201 = por %p199, %p200
      %p202 = scmp.ne.s32.totalorder %s190, %s191
      %p203 = scmp.eq.s32.totalorder %s34, 1
      %p204 = por %p202, %p203
      %p206 = scmp.ne.s32.totalorder %s191, %s205
      %p207 = scmp.eq.s32.totalorder %s34, 0
      %p208 = por %p206, %p207
      %s210 = sadd.s32 %s209, 1
      %p213 = scmp.eq.s32.totalorder %s28, 1
      %p214 = scmp.ne.s32.totalorder %s209, %s211
      %p215 = scmp.eq.s32.totalorder %s28, 0
      %p216 = por %p214, %p215
      %p217 = scmp.ne.s32.totalorder %s209, %s211
      %p218 = scmp.eq.s32.totalorder %s33, 1
      %p219 = por %p217, %p218
      %p220 = scmp.ne.s32.totalorder %s211, %s212
      %p221 = scmp.eq.s32.totalorder %s33, 0
      %p222 = por %p220, %p221
      %p223 = scmp.ne.s32.totalorder %s211, %s212
      %p224 = scmp.eq.s32.totalorder %s34, 1
      %p225 = por %p223, %p224
      %p227 = scmp.ne.s32.totalorder %s212, %s226
      %p228 = scmp.eq.s32.totalorder %s34, 0
      %p229 = por %p227, %p228
      %s231 = sadd.s32 %s230, 1
      %p234 = scmp.eq.s32.totalorder %s28, 1
      %p235 = scmp.ne.s32.totalorder %s230, %s232
      %p236 = scmp.eq.s32.totalorder %s28, 0
      %p237 = por %p235, %p236
      %p238 = scmp.ne.s32.totalorder %s230, %s232
      %p239 = scmp.eq.s32.totalorder %s33, 1
      %p240 = por %p238, %p239
      %p241 = scmp.ne.s32.totalorder %s232, %s233
      %p242 = scmp.eq.s32.totalorder %s33, 0
      %p243 = por %p241, %p242
      %p244 = scmp.ne.s32.totalorder %s232, %s233
      %p245 = scmp.eq.s32.totalorder %s34, 1
      %p246 = por %p244, %p245
      %p248 = scmp.ne.s32.totalorder %s233, %s247
      %p249 = scmp.eq.s32.totalorder %s34, 0
      %p250 = por %p248, %p249
      %s252 = sadd.s32 %s251, 1
      %p255 = scmp.eq.s32.totalorder %s28, 1
      %p256 = scmp.ne.s32.totalorder %s251, %s253
      %p257 = scmp.eq.s32.totalorder %s28, 0
      %p258 = por %p256, %p257
      %p259 = scmp.ne.s32.totalorder %s251, %s253
      %p260 = scmp.eq.s32.totalorder %s33, 1
      %p261 = por %p259, %p260
      %p262 = scmp.ne.s32.totalorder %s253, %s254
      %p263 = scmp.eq.s32.totalorder %s33, 0
      %p264 = por %p262, %p263
      %p265 = scmp.ne.s32.totalorder %s253, %s254
      %p266 = scmp.eq.s32.totalorder %s34, 1
      %p267 = por %p265, %p266
      %p269 = scmp.ne.s32.totalorder %s254, %s268
      %p270 = scmp.eq.s32.totalorder %s34, 0
      %p271 = por %p269, %p270
      %s272 = ssub.s32 %s28, %s35
      %p273 = scmp.eq.s32.totalorder %s272, 0
      %s275 = sadd.s32 %s274, 1
      %s276 = scalar_select %p273, %s274, %s275
      %p279 = pneg %p273
      %p280 = scmp.eq.s32.totalorder %s28, 1
      %p281 = por %p279, %p280
      %p282 = scmp.ne.s32.totalorder %s274, %s277
      %p283 = scmp.eq.s32.totalorder %s28, 0
      %p284 = por %p282, %p283
      %p285 = scmp.ne.s32.totalorder %s274, %s277
      %p286 = scmp.eq.s32.totalorder %s33, 1
      %p287 = por %p285, %p286
      %p288 = scmp.ne.s32.totalorder %s277, %s278
      %p289 = scmp.eq.s32.totalorder %s33, 0
      %p290 = por %p288, %p289
      %p291 = scmp.ne.s32.totalorder %s277, %s278
      %p292 = scmp.eq.s32.totalorder %s34, 1
      %p293 = por %p291, %p292
      %p295 = scmp.ne.s32.totalorder %s278, %s294
      %p296 = scmp.eq.s32.totalorder %s34, 0
      %p297 = por %p295, %p296
      %s299 = sadd.s32 %s298, 1
      %p302 = scmp.eq.s32.totalorder %s28, 1
      %p303 = scmp.ne.s32.totalorder %s298, %s300
      %p304 = scmp.eq.s32.totalorder %s28, 0
      %p305 = por %p303, %p304
      %p306 = scmp.ne.s32.totalorder %s298, %s300
      %p307 = scmp.eq.s32.totalorder %s33, 1
      %p308 = por %p306, %p307
      %p309 = scmp.ne.s32.totalorder %s300, %s301
      %p310 = scmp.eq.s32.totalorder %s33, 0
      %p311 = por %p309, %p310
      %p312 = scmp.ne.s32.totalorder %s300, %s301
      %p313 = scmp.eq.s32.totalorder %s34, 1
      %p314 = por %p312, %p313
      %p316 = scmp.ne.s32.totalorder %s301, %s315
      %p317 = scmp.eq.s32.totalorder %s34, 0
      %p318 = por %p316, %p317
      %s320 = sadd.s32 %s319, 1
      %p323 = scmp.eq.s32.totalorder %s28, 1
      %p324 = scmp.ne.s32.totalorder %s319, %s321
      %p325 = scmp.eq.s32.totalorder %s28, 0
      %p326 = por %p324, %p325
      %p327 = scmp.ne.s32.totalorder %s319, %s321
      %p328 = scmp.eq.s32.totalorder %s33, 1
      %p329 = por %p327, %p328
      %p330 = scmp.ne.s32.totalorder %s321, %s322
      %p331 = scmp.eq.s32.totalorder %s33, 0
      %p332 = por %p330, %p331
      %p333 = scmp.ne.s32.totalorder %s321, %s322
      %p334 = scmp.eq.s32.totalorder %s34, 1
      %p335 = por %p333, %p334
      %p337 = scmp.ne.s32.totalorder %s322, %s336
      %p338 = scmp.eq.s32.totalorder %s34, 0
      %p339 = por %p337, %p338
      %p340 = scmp.le.s32.totalorder 1, %s28
      %p341 = scmp.lt.s32.totalorder %s28, 3
      %p342 = pnand %p340, %p341
      %p343 = pneg %p342
      // Predicated region
      $region9: #{tpu_custom_call.1} parent=5 // pred_check
        _
      $region10: #{tpu_custom_call.1} parent=5 // pred_check_branch
        %345 = sbr.rel (%p342) target = $region12
      $region11: #{tpu_custom_call.1} parent=5 // pred_region
        %s346 = ssub.s32 %s28, 1
        // Predicated region
        $region13: #{tpu_custom_call.1} parent=11 // pred_check
          %p347 = pneg %p75
        $region14: #{tpu_custom_call.1} parent=11 // pred_check_branch
          %349 = sbr.rel (%p347) target = $region16
        $region15: #{tpu_custom_call.1} parent=11 // pred_region
          _
        $region16: #{tpu_custom_call.1} parent=11 // pred_fallthru
          _
        // Predicated region
        $region17: #{tpu_custom_call.1} parent=11 // pred_check
          %p350 = pneg %p96
        $region18: #{tpu_custom_call.1} parent=11 // pred_check_branch
          %352 = sbr.rel (%p350) target = $region20
        $region19: #{tpu_custom_call.1} parent=11 // pred_region
          %s354 = ssub.s32 256, 256
          %355 = vsyncadd [#allocation7], %s354
          %s356 = sshll.u32 [#allocation6], 4
          %s357 = int_to_ptr.vmem [resolvable:$true] %s356
          %362 = dma.hbm_to_vmem [thread:$0]  %s2, 256, %s357, [#allocation7], 128, 128, 8
        $region20: #{tpu_custom_call.1} parent=11 // pred_fallthru
          _
        // Predicated region
        $region21: #{tpu_custom_call.1} parent=11 // pred_check
          %p363 = pneg %p117
        $region22: #{tpu_custom_call.1} parent=11 // pred_check_branch
          %365 = sbr.rel (%p363) target = $region24
        $region23: #{tpu_custom_call.1} parent=11 // pred_region
          %s367 = ssub.s32 4096, 4096
          %368 = vsyncadd [#allocation10], %s367
          %s369 = sshll.u32 [#allocation9], 4
          %s370 = int_to_ptr.vmem [resolvable:$true] %s369
          %375 = dma.hbm_to_vmem [thread:$0]  %s3, 4096, %s370, [#allocation10], 256, 256, 16
        $region24: #{tpu_custom_call.1} parent=11 // pred_fallthru
          _
        // Predicated region
        $region25: #{tpu_custom_call.1} parent=11 // pred_check
          %p376 = pneg %p138
        $region26: #{tpu_custom_call.1} parent=11 // pred_check_branch
          %378 = sbr.rel (%p376) target = $region28
        $region27: #{tpu_custom_call.1} parent=11 // pred_region
          %s380 = ssub.s32 64, 64
          %381 = vsyncadd [#allocation10], %s380
          %s383 = sshll.u32 [#allocation11], 4
          %s384 = int_to_ptr.vmem [resolvable:$true] %s383
          %386 = dma.hbm_to_vmem [thread:$0]  %s4, 64, %s384, [#allocation10]
        $region28: #{tpu_custom_call.1} parent=11 // pred_fallthru
          _
        // Predicated region
        $region29: #{tpu_custom_call.1} parent=11 // pred_check
          %p387 = pneg %p159
        $region30: #{tpu_custom_call.1} parent=11 // pred_check_branch
          %389 = sbr.rel (%p387) target = $region32
        $region31: #{tpu_custom_call.1} parent=11 // pred_region
          %s391 = ssub.s32 4096, 4096
          %392 = vsyncadd [#allocation13], %s391
          %s393 = sshll.u32 [#allocation12], 4
          %s394 = int_to_ptr.vmem [resolvable:$true] %s393
          %399 = dma.hbm_to_vmem [thread:$0]  %s5, 4096, %s394, [#allocation13], 256, 256, 16
        $region32: #{tpu_custom_call.1} parent=11 // pred_fallthru
          _
        // Predicated region
        $region33: #{tpu_custom_call.1} parent=11 // pred_check
          %p400 = pneg %p180
        $region34: #{tpu_custom_call.1} parent=11 // pred_check_branch
          %402 = sbr.rel (%p400) target = $region36
        $region35: #{tpu_custom_call.1} parent=11 // pred_region
          %s404 = ssub.s32 4096, 4096
          %405 = vsyncadd [#allocation13], %s404
          %s406 = sshll.u32 [#allocation14], 4
          %s407 = int_to_ptr.vmem [resolvable:$true] %s406
          %412 = dma.hbm_to_vmem [thread:$0]  %s6, 4096, %s407, [#allocation13], 256, 256, 16
        $region36: #{tpu_custom_call.1} parent=11 // pred_fallthru
          _
        // Predicated region
        $region37: #{tpu_custom_call.1} parent=11 // pred_check
          %p413 = pneg %p201
        $region38: #{tpu_custom_call.1} parent=11 // pred_check_branch
          %415 = sbr.rel (%p413) target = $region40
        $region39: #{tpu_custom_call.1} parent=11 // pred_region
          %s417 = ssub.s32 64, 64
          %418 = vsyncadd [#allocation16], %s417
          %s420 = sshll.u32 [#allocation15], 4
          %s421 = int_to_ptr.vmem [resolvable:$true] %s420
          %423 = dma.hbm_to_vmem [thread:$0]  %s7, 64, %s421, [#allocation16]
        $region40: #{tpu_custom_call.1} parent=11 // pred_fallthru
          _
        // Predicated region
        $region41: #{tpu_custom_call.1} parent=11 // pred_check
          %p424 = pneg %p222
        $region42: #{tpu_custom_call.1} parent=11 // pred_check_branch
          %426 = sbr.rel (%p424) target = $region44
        $region43: #{tpu_custom_call.1} parent=11 // pred_region
          %s428 = ssub.s32 4096, 4096
          %429 = vsyncadd [#allocation16], %s428
          %s430 = sshll.u32 [#allocation17], 4
          %s431 = int_to_ptr.vmem [resolvable:$true] %s430
          %436 = dma.hbm_to_vmem [thread:$0]  %s8, 4096, %s431, [#allocation16], 256, 256, 16
        $region44: #{tpu_custom_call.1} parent=11 // pred_fallthru
          _
        // Predicated region
        $region45: #{tpu_custom_call.1} parent=11 // pred_check
          %p437 = pneg %p243
        $region46: #{tpu_custom_call.1} parent=11 // pred_check_branch
          %439 = sbr.rel (%p437) target = $region48
        $region47: #{tpu_custom_call.1} parent=11 // pred_region
          _
        $region48: #{tpu_custom_call.1} parent=11 // pred_fallthru
          _
        // Predicated region
        $region49: #{tpu_custom_call.1} parent=11 // pred_check
          %p440 = pneg %p264
        $region50: #{tpu_custom_call.1} parent=11 // pred_check_branch
          %442 = sbr.rel (%p440) target = $region52
        $region51: #{tpu_custom_call.1} parent=11 // pred_region
          _
        $region52: #{tpu_custom_call.1} parent=11 // pred_fallthru
          _
      $region12: #{tpu_custom_call.1} parent=5 // pred_fallthru
        _
      %p443 = scmp.lt.s32.totalorder %s28, 2
      // Predicated region
      $region53: #{tpu_custom_call.1} parent=5 // pred_check
        %p444 = pneg %p443
      $region54: #{tpu_custom_call.1} parent=5 // pred_check_branch
        %446 = sbr.rel (%p444) target = $region56
      $region55: #{tpu_custom_call.1} parent=5 // pred_region
        // Predicated region
        $region57: #{tpu_custom_call.1} parent=55 // pred_check
          %p447 = pneg %p48
        $region58: #{tpu_custom_call.1} parent=55 // pred_check_branch
          %449 = sbr.rel (%p447) target = $region60
        $region59: #{tpu_custom_call.1} parent=55 // pred_region
          %s450 = smul.u32 4, %s28
          %p451 = scmp.lt.s32.totalorder %s450, 7
          %s452 = scalar_select %p451, %s450, 7
          %s453 = smul.addr %s452, 8
          %s454 = scalar_lea.vmem %s0, %s453
          %s455 = smul.u32 4, %s28
        $region60: #{tpu_custom_call.1} parent=55 // pred_fallthru
          _
      $region56: #{tpu_custom_call.1} parent=5 // pred_fallthru
        _
      %p456 = scmp.le.s32.totalorder 1, %s28
      %p457 = scmp.lt.s32.totalorder %s28, 3
      %p458 = pnand %p456, %p457
      %p459 = pneg %p458
      // Predicated region
      $region61: #{tpu_custom_call.1} parent=5 // pred_check
        _
      $region62: #{tpu_custom_call.1} parent=5 // pred_check_branch
        %461 = sbr.rel (%p458) target = $region64
      $region63: #{tpu_custom_call.1} parent=5 // pred_region
        %s462 = ssub.s32 %s28, 1
        // Predicated region
        $region65: #{tpu_custom_call.1} parent=63 // pred_check
          %p463 = pneg %p96
        $region66: #{tpu_custom_call.1} parent=63 // pred_check_branch
          %465 = sbr.rel (%p463) target = $region68
        $region67: #{tpu_custom_call.1} parent=63 // pred_region
          %466 = dma.done [#allocation7], 256
        $region68: #{tpu_custom_call.1} parent=63 // pred_fallthru
          _
        // Predicated region
        $region69: #{tpu_custom_call.1} parent=63 // pred_check
          %p467 = pneg %p117
        $region70: #{tpu_custom_call.1} parent=63 // pred_check_branch
          %469 = sbr.rel (%p467) target = $region72
        $region71: #{tpu_custom_call.1} parent=63 // pred_region
          %470 = dma.done [#allocation10], 4096
        $region72: #{tpu_custom_call.1} parent=63 // pred_fallthru
          _
        // Predicated region
        $region73: #{tpu_custom_call.1} parent=63 // pred_check
          %p471 = pneg %p138
        $region74: #{tpu_custom_call.1} parent=63 // pred_check_branch
          %473 = sbr.rel (%p471) target = $region76
        $region75: #{tpu_custom_call.1} parent=63 // pred_region
          %474 = dma.done [#allocation10], 64
        $region76: #{tpu_custom_call.1} parent=63 // pred_fallthru
          _
        // Predicated region
        $region77: #{tpu_custom_call.1} parent=63 // pred_check
          %p475 = pneg %p159
        $region78: #{tpu_custom_call.1} parent=63 // pred_check_branch
          %477 = sbr.rel (%p475) target = $region80
        $region79: #{tpu_custom_call.1} parent=63 // pred_region
          %478 = dma.done [#allocation13], 4096
        $region80: #{tpu_custom_call.1} parent=63 // pred_fallthru
          _
        // Predicated region
        $region81: #{tpu_custom_call.1} parent=63 // pred_check
          %p479 = pneg %p180
        $region82: #{tpu_custom_call.1} parent=63 // pred_check_branch
          %481 = sbr.rel (%p479) target = $region84
        $region83: #{tpu_custom_call.1} parent=63 // pred_region
          %482 = dma.done [#allocation13], 4096
        $region84: #{tpu_custom_call.1} parent=63 // pred_fallthru
          _
        // Predicated region
        $region85: #{tpu_custom_call.1} parent=63 // pred_check
          %p483 = pneg %p201
        $region86: #{tpu_custom_call.1} parent=63 // pred_check_branch
          %485 = sbr.rel (%p483) target = $region88
        $region87: #{tpu_custom_call.1} parent=63 // pred_region
          %486 = dma.done [#allocation16], 64
        $region88: #{tpu_custom_call.1} parent=63 // pred_fallthru
          _
        // Predicated region
        $region89: #{tpu_custom_call.1} parent=63 // pred_check
          %p487 = pneg %p222
        $region90: #{tpu_custom_call.1} parent=63 // pred_check_branch
          %489 = sbr.rel (%p487) target = $region92
        $region91: #{tpu_custom_call.1} parent=63 // pred_region
          %490 = dma.done [#allocation16], 4096
        $region92: #{tpu_custom_call.1} parent=63 // pred_fallthru
          _
        %s491 = smul.u32 4, %s33
        %p492 = scmp.lt.s32.totalorder %s491, 7
        %s493 = scalar_select %p492, %s491, 7
        %s494 = smul.addr %s493, 8
        %s495 = scalar_lea.vmem %s0, %s494
        %p496 = pneg %p54
        %p497 = pneg %p51
        %p498 = pneg %p75
        %p499 = pneg %p72
        %p500 = pneg %p96
        %p501 = pneg %p93
        %p502 = pneg %p117
        %p503 = pneg %p114
        %p504 = pneg %p138
        %p505 = pneg %p135
        %p506 = pneg %p159
        %p507 = pneg %p156
        %p508 = pneg %p180
        %p509 = pneg %p177
        %p510 = pneg %p201
        %p511 = pneg %p198
        %p512 = pneg %p222
        %p513 = pneg %p219
        %p514 = pneg %p243
        %p515 = pneg %p240
        %p516 = pneg %p264
        %p517 = pneg %p261
        %p518 = pneg %p290
        %p519 = pneg %p287
        %s520 = sand.u32 %s277, 1
        %s521 = scalar_lea.sflag [#allocation8], %s520
        %s522 = sand.u32 %s277, 1
        %s523 = smul.addr %s522, 32
        %s524 = scalar_lea.vmem [#allocation18], %s523
        %p525 = pneg %p311
        %p526 = pneg %p308
        %p527 = pneg %p332
        %p528 = pneg %p329
        %s529 = smul.u32 4, %s33
        %p530 = scmp.lt.s32.totalorder %s529, 7
        %s531 = scalar_select %p530, %s529, 7
        %s532 = smul.addr %s531, 8
        %s533 = scalar_lea.vmem %s0, %s532
        %s534 = smul.u32 4, %s33
        %s535 = smul.u32 4, %s33
        %p537 = scmp.eq.s32.totalorder %s33, 0
        // Predicated region
        $region93: #{tpu_custom_call.1} parent=63 // pred_check
          %p538 = pneg %p537
        $region94: #{tpu_custom_call.1} parent=63 // pred_check_branch
          %540 = sbr.rel (%p538) target = $region96
        $region95: #{tpu_custom_call.1} parent=63 // pred_region
          %v541 = vld [vmem:[%s1] sm:$0xff]
          %v542 = vld [vmem:[%s1 + $0x8] sm:$0xff]
          %543 = vst [vmem:[#allocation4] sm:$0xff] %v541
          %544 = vst [vmem:[#allocation4 + $0x8] sm:$0xff] %v542
          %v545 = vld [vmem:[#allocation6] sm:$0xff]
          %v546 = vld [vmem:[#allocation6 + $0x8] sm:$0xff]
          %547 = vst [vmem:[#allocation5] sm:$0xff] %v545
          %548 = vst [vmem:[#allocation5 + $0x8] sm:$0xff] %v546
        $region96: #{tpu_custom_call.1} parent=63 // pred_fallthru
          _
        %v549 = vld [vmem:[%s533] sm:$0xff]
        %v550 = vld [vmem:[%s533 + $0x8] sm:$0xff]
        %v551 = vld [vmem:[%s533 + $0x10] sm:$0xff]
        %v552 = vld [vmem:[%s533 + $0x18] sm:$0xff]
        %v553 = vlaneseq
        %v554 = vand.u32 %v553, 127
        %555 = vset.pattern.permute.xlu0 0
        %556 = vperm.xlu0 %555, %v549
        %v557 = vpop.permute.xlu0 %556
        %558 = vset.pattern.permute.xlu0 0
        %559 = vperm.xlu0 %558, %v550
        %v560 = vpop.permute.xlu0 %559
        %561 = vset.pattern.permute.xlu0 0
        %562 = vperm.xlu0 %561, %v551
        %v563 = vpop.permute.xlu0 %562
        %564 = vset.pattern.permute.xlu0 0
        %565 = vperm.xlu0 %564, %v552
        %v566 = vpop.permute.xlu0 %565
        %vm567 = vcmp.eq.s32.totalorder %v557, %v554
        %vm568 = vcmp.eq.s32.totalorder %v560, %v554
        %vm569 = vcmp.eq.s32.totalorder %v563, %v554
        %vm570 = vcmp.eq.s32.totalorder %v566, %v554
        %v571 = vsel %vm567, 1, 0
        %v572 = vsel %vm568, 1, 0
        %v573 = vsel %vm569, 1, 0
        %v574 = vsel %vm570, 1, 0
        %v575 = vcvt.s32.f32 %v571
        %v576 = vcvt.s32.f32 %v572
        %v577 = vcvt.s32.f32 %v573
        %v578 = vcvt.s32.f32 %v574
        %v579 = vpack.c.bf16 %v576, %v575
        %v580 = vpack.c.bf16 %v578, %v577
        %v581 = vld [vmem:[#allocation9] sm:$0xff]
        %v582 = vld [vmem:[#allocation9 + $0x8] sm:$0xff]
        %v583 = vld [vmem:[#allocation9 + $0x10] sm:$0xff]
        %v584 = vld [vmem:[#allocation9 + $0x18] sm:$0xff]
        %v585 = vld [vmem:[#allocation9 + $0x20] sm:$0xff]
        %v586 = vld [vmem:[#allocation9 + $0x28] sm:$0xff]
        %v587 = vld [vmem:[#allocation9 + $0x30] sm:$0xff]
        %v588 = vld [vmem:[#allocation9 + $0x38] sm:$0xff]
        %v589 = vld [vmem:[#allocation9 + $0x40] sm:$0xff]
        %v590 = vld [vmem:[#allocation9 + $0x48] sm:$0xff]
        %v591 = vld [vmem:[#allocation9 + $0x50] sm:$0xff]
        %v592 = vld [vmem:[#allocation9 + $0x58] sm:$0xff]
        %v593 = vld [vmem:[#allocation9 + $0x60] sm:$0xff]
        %v594 = vld [vmem:[#allocation9 + $0x68] sm:$0xff]
        %v595 = vld [vmem:[#allocation9 + $0x70] sm:$0xff]
        %v596 = vld [vmem:[#allocation9 + $0x78] sm:$0xff]
        %v597 = vld [vmem:[#allocation9 + $0x80] sm:$0xff]
        %v598 = vld [vmem:[#allocation9 + $0x88] sm:$0xff]
        %v599 = vld [vmem:[#allocation9 + $0x90] sm:$0xff]
        %v600 = vld [vmem:[#allocation9 + $0x98] sm:$0xff]
        %v601 = vld [vmem:[#allocation9 + $0xa0] sm:$0xff]
        %v602 = vld [vmem:[#allocation9 + $0xa8] sm:$0xff]
        %v603 = vld [vmem:[#allocation9 + $0xb0] sm:$0xff]
        %v604 = vld [vmem:[#allocation9 + $0xb8] sm:$0xff]
        %v605 = vld [vmem:[#allocation9 + $0xc0] sm:$0xff]
        %v606 = vld [vmem:[#allocation9 + $0xc8] sm:$0xff]
        %v607 = vld [vmem:[#allocation9 + $0xd0] sm:$0xff]
        %v608 = vld [vmem:[#allocation9 + $0xd8] sm:$0xff]
        %v609 = vld [vmem:[#allocation9 + $0xe0] sm:$0xff]
        %v610 = vld [vmem:[#allocation9 + $0xe8] sm:$0xff]
        %v611 = vld [vmem:[#allocation9 + $0xf0] sm:$0xff]
        %v612 = vld [vmem:[#allocation9 + $0xf8] sm:$0xff]
        %v613 = vld [vmem:[#allocation11] sm:$0xf]
        %v615 = vlaneseq
        %v616 = vshrl.u32 %v615, 7
        %v617 = vsub.s32 0, %v616
        %v618 = vrot.slane %v613, %v617
        %v619 = vlaneseq
        %v620 = vshrl.u32 %v619, 7
        %v621 = vsub.s32 1, %v620
        %v622 = vrot.slane %v613, %v621
        %v623 = vlaneseq
        %v624 = vshrl.u32 %v623, 7
        %v625 = vsub.s32 2, %v624
        %v626 = vrot.slane %v613, %v625
        %v627 = vlaneseq
        %v628 = vshrl.u32 %v627, 7
        %v629 = vsub.s32 3, %v628
        %v630 = vrot.slane %v613, %v629
        %v667 = vunpack.c.l.b16 %v581
        %v668 = vunpack.c.h.b16 %v581
        %v669 = vunpack.c.l.b16 %v582
        %v670 = vunpack.c.h.b16 %v582
        %v671 = vunpack.c.l.b16 %v583
        %v672 = vunpack.c.h.b16 %v583
        %v673 = vunpack.c.l.b16 %v584
        %v674 = vunpack.c.h.b16 %v584
        %v675 = vunpack.c.l.b16 %v585
        %v676 = vunpack.c.h.b16 %v585
        %v677 = vunpack.c.l.b16 %v586
        %v678 = vunpack.c.h.b16 %v586
        %v679 = vunpack.c.l.b16 %v587
        %v680 = vunpack.c.h.b16 %v587
        %v681 = vunpack.c.l.b16 %v588
        %v682 = vunpack.c.h.b16 %v588
        %v683 = vunpack.c.l.b16 %v589
        %v684 = vunpack.c.h.b16 %v589
        %v685 = vunpack.c.l.b16 %v590
        %v686 = vunpack.c.h.b16 %v590
        %v687 = vunpack.c.l.b16 %v591
        %v688 = vunpack.c.h.b16 %v591
        %v689 = vunpack.c.l.b16 %v592
        %v690 = vunpack.c.h.b16 %v592
        %v691 = vunpack.c.l.b16 %v593
        %v692 = vunpack.c.h.b16 %v593
        %v693 = vunpack.c.l.b16 %v594
        %v694 = vunpack.c.h.b16 %v594
        %v695 = vunpack.c.l.b16 %v595
        %v696 = vunpack.c.h.b16 %v595
        %v697 = vunpack.c.l.b16 %v596
        %v698 = vunpack.c.h.b16 %v596
        %v699 = vunpack.c.l.b16 %v597
        %v700 = vunpack.c.h.b16 %v597
        %v701 = vunpack.c.l.b16 %v598
        %v702 = vunpack.c.h.b16 %v598
        %v703 = vunpack.c.l.b16 %v599
        %v704 = vunpack.c.h.b16 %v599
        %v705 = vunpack.c.l.b16 %v600
        %v706 = vunpack.c.h.b16 %v600
        %v707 = vunpack.c.l.b16 %v601
        %v708 = vunpack.c.h.b16 %v601
        %v709 = vunpack.c.l.b16 %v602
        %v710 = vunpack.c.h.b16 %v602
        %v711 = vunpack.c.l.b16 %v603
        %v712 = vunpack.c.h.b16 %v603
        %v713 = vunpack.c.l.b16 %v604
        %v714 = vunpack.c.h.b16 %v604
        %v715 = vunpack.c.l.b16 %v605
        %v716 = vunpack.c.h.b16 %v605
        %v717 = vunpack.c.l.b16 %v606
        %v718 = vunpack.c.h.b16 %v606
        %v719 = vunpack.c.l.b16 %v607
        %v720 = vunpack.c.h.b16 %v607
        %v721 = vunpack.c.l.b16 %v608
        %v722 = vunpack.c.h.b16 %v608
        %v723 = vunpack.c.l.b16 %v609
        %v724 = vunpack.c.h.b16 %v609
        %v725 = vunpack.c.l.b16 %v610
        %v726 = vunpack.c.h.b16 %v610
        %v727 = vunpack.c.l.b16 %v611
        %v728 = vunpack.c.h.b16 %v611
        %v729 = vunpack.c.l.b16 %v612
        %v730 = vunpack.c.h.b16 %v612
        %v731 = vpack.c.b16 %v671, %v667
        %v732 = vpack.c.b16 %v672, %v668
        %v733 = vpack.c.b16 %v673, %v669
        %v734 = vpack.c.b16 %v674, %v670
        %v735 = vpack.c.b16 %v679, %v675
        %v736 = vpack.c.b16 %v680, %v676
        %v737 = vpack.c.b16 %v681, %v677
        %v738 = vpack.c.b16 %v682, %v678
        %v739 = vpack.c.b16 %v687, %v683
        %v740 = vpack.c.b16 %v688, %v684
        %v741 = vpack.c.b16 %v689, %v685
        %v742 = vpack.c.b16 %v690, %v686
        %v743 = vpack.c.b16 %v695, %v691
        %v744 = vpack.c.b16 %v696, %v692
        %v745 = vpack.c.b16 %v697, %v693
        %v746 = vpack.c.b16 %v698, %v694
        %v747 = vpack.c.b16 %v703, %v699
        %v748 = vpack.c.b16 %v704, %v700
        %v749 = vpack.c.b16 %v705, %v701
        %v750 = vpack.c.b16 %v706, %v702
        %v751 = vpack.c.b16 %v711, %v707
        %v752 = vpack.c.b16 %v712, %v708
        %v753 = vpack.c.b16 %v713, %v709
        %v754 = vpack.c.b16 %v714, %v710
        %v755 = vpack.c.b16 %v719, %v715
        %v756 = vpack.c.b16 %v720, %v716
        %v757 = vpack.c.b16 %v721, %v717
        %v758 = vpack.c.b16 %v722, %v718
        %v759 = vpack.c.b16 %v727, %v723
        %v760 = vpack.c.b16 %v728, %v724
        %v761 = vpack.c.b16 %v729, %v725
        %v762 = vpack.c.b16 %v730, %v726
        %795 = vmatprep.subr.bf16.mxu0 %v760
        %796 = vmatpush1.bf16.msra.mxu0 %v759
        %797 = vmatprep.subr.bf16.mxu0 %v756
        %798 = vmatpush1.bf16.msra.mxu0 %v755
        %799 = vmatprep.subr.bf16.mxu0 %v752
        %800 = vmatpush1.bf16.msra.mxu0 %v751
        %801 = vmatprep.subr.bf16.mxu0 %v748
        %802 = vmatpush1.bf16.msra.mxu0 %v747
        %803 = vmatprep.subr.bf16.mxu0 %v744
        %804 = vmatpush1.bf16.msra.mxu0 %v743
        %805 = vmatprep.subr.bf16.mxu0 %v740
        %806 = vmatpush1.bf16.msra.mxu0 %v739
        %807 = vmatprep.subr.bf16.mxu0 %v736
        %808 = vmatpush1.bf16.msra.mxu0 %v735
        %809 = vmatprep.subr.bf16.mxu0 %v732
        %810 = vmatpush1.bf16.msra.mxu0 %v731
        %811 = vmatprep.subr.bf16.mxu0 0
        %812 = vmatpush2.bf16.msra.mxu0 0
        %813 = vmatprep.subr.bf16.mxu0 0
        %814 = vmatpush2.bf16.msra.mxu0 0
        %815 = vmatprep.subr.bf16.mxu0 0
        %816 = vmatpush2.bf16.msra.mxu0 0
        %817 = vmatprep.subr.bf16.mxu0 0
        %818 = vmatpush2.bf16.msra.mxu0 0
        %819 = vmatprep.subr.bf16.mxu0 0
        %820 = vmatpush2.bf16.msra.mxu0 0
        %821 = vmatprep.subr.bf16.mxu0 0
        %822 = vmatpush2.bf16.msra.mxu0 0
        %823 = vmatprep.subr.bf16.mxu0 0
        %824 = vmatpush2.bf16.msra.mxu0 0
        %825 = vmatprep.subr.bf16.mxu0 0
        %826 = vmatpush2.bf16.msra.mxu0 0
        %827 = vmatprep.mubr.bf16.mxu0 0
        %828 = vmatmul.mubr.bf16.gmra.mxu0 %v579
        %v829 = vpop.f32.mrf.mxu0
        %v830 = vadd.f32 %v618, %v829
        %v831 = vpop.f32.mrf.mxu0
        %v832 = vadd.f32 %v622, %v831
        %v833 = vpop.f32.mrf.mxu0
        %v834 = vadd.f32 %v618, %v833
        %v835 = vpop.f32.mrf.mxu0
        %v836 = vadd.f32 %v622, %v835
        %837 = vmatprep.mubr.bf16.mxu0 0
        %838 = vmatmul.mubr.bf16.gmra.mxu0 %v580
        %v839 = vpop.f32.mrf.mxu0
        %v840 = vadd.f32 %v618, %v839
        %v841 = vpop.f32.mrf.mxu0
        %v842 = vadd.f32 %v622, %v841
        %v843 = vpop.f32.mrf.mxu0
        %v844 = vadd.f32 %v618, %v843
        %v845 = vpop.f32.mrf.mxu0
        %v846 = vadd.f32 %v622, %v845
        %847 = vdwg.mxu0
        %848 = vmatprep.subr.bf16.mxu0 %v762
        %849 = vmatpush1.bf16.msra.mxu0 %v761
        %850 = vmatprep.subr.bf16.mxu0 %v758
        %851 = vmatpush1.bf16.msra.mxu0 %v757
        %852 = vmatprep.subr.bf16.mxu0 %v754
        %853 = vmatpush1.bf16.msra.mxu0 %v753
        %854 = vmatprep.subr.bf16.mxu0 %v750
        %855 = vmatpush1.bf16.msra.mxu0 %v749
        %856 = vmatprep.subr.bf16.mxu0 %v746
        %857 = vmatpush1.bf16.msra.mxu0 %v745
        %858 = vmatprep.subr.bf16.mxu0 %v742
        %859 = vmatpush1.bf16.msra.mxu0 %v741
        %860 = vmatprep.subr.bf16.mxu0 %v738
        %861 = vmatpush1.bf16.msra.mxu0 %v737
        %862 = vmatprep.subr.bf16.mxu0 %v734
        %863 = vmatpush1.bf16.msra.mxu0 %v733
        %864 = vmatprep.subr.bf16.mxu0 0
        %865 = vmatpush2.bf16.msra.mxu0 0
        %866 = vmatprep.subr.bf16.mxu0 0
        %867 = vmatpush2.bf16.msra.mxu0 0
        %868 = vmatprep.subr.bf16.mxu0 0
        %869 = vmatpush2.bf16.msra.mxu0 0
        %870 = vmatprep.subr.bf16.mxu0 0
        %871 = vmatpush2.bf16.msra.mxu0 0
        %872 = vmatprep.subr.bf16.mxu0 0
        %873 = vmatpush2.bf16.msra.mxu0 0
        %874 = vmatprep.subr.bf16.mxu0 0
        %875 = vmatpush2.bf16.msra.mxu0 0
        %876 = vmatprep.subr.bf16.mxu0 0
        %877 = vmatpush2.bf16.msra.mxu0 0
        %878 = vmatprep.subr.bf16.mxu0 0
        %879 = vmatpush2.bf16.msra.mxu0 0
        %880 = vmatprep.mubr.bf16.mxu0 0
        %881 = vmatmul.mubr.bf16.gmra.mxu0 %v579
        %v882 = vpop.f32.mrf.mxu0
        %v883 = vadd.f32 %v626, %v882
        %v884 = vpop.f32.mrf.mxu0
        %v885 = vadd.f32 %v630, %v884
        %v886 = vpop.f32.mrf.mxu0
        %v887 = vadd.f32 %v626, %v886
        %v888 = vpop.f32.mrf.mxu0
        %v889 = vadd.f32 %v630, %v888
        %890 = vmatprep.mubr.bf16.mxu0 0
        %891 = vmatmul.mubr.bf16.gmra.mxu0 %v580
        %v892 = vpop.f32.mrf.mxu0
        %v893 = vadd.f32 %v626, %v892
        %v894 = vpop.f32.mrf.mxu0
        %v895 = vadd.f32 %v630, %v894
        %v896 = vpop.f32.mrf.mxu0
        %v897 = vadd.f32 %v626, %v896
        %v898 = vpop.f32.mrf.mxu0
        %v899 = vadd.f32 %v630, %v898
        %900 = vdwg.mxu0
        %901 = vst [vmem:[#allocation2] sm:$0xff] %v830
        %902 = vst [vmem:[#allocation2 + $0x8] sm:$0xff] %v832
        %903 = vst [vmem:[#allocation2 + $0x10] sm:$0xff] %v883
        %904 = vst [vmem:[#allocation2 + $0x18] sm:$0xff] %v885
        %905 = vst [vmem:[#allocation2 + $0x20] sm:$0xff] %v834
        %906 = vst [vmem:[#allocation2 + $0x28] sm:$0xff] %v836
        %907 = vst [vmem:[#allocation2 + $0x30] sm:$0xff] %v887
        %908 = vst [vmem:[#allocation2 + $0x38] sm:$0xff] %v889
        %909 = vst [vmem:[#allocation2 + $0x40] sm:$0xff] %v840
        %910 = vst [vmem:[#allocation2 + $0x48] sm:$0xff] %v842
        %911 = vst [vmem:[#allocation2 + $0x50] sm:$0xff] %v893
        %912 = vst [vmem:[#allocation2 + $0x58] sm:$0xff] %v895
        %913 = vst [vmem:[#allocation2 + $0x60] sm:$0xff] %v844
        %914 = vst [vmem:[#allocation2 + $0x68] sm:$0xff] %v846
        %915 = vst [vmem:[#allocation2 + $0x70] sm:$0xff] %v897
        %916 = vst [vmem:[#allocation2 + $0x78] sm:$0xff] %v899
        %v917 = vld [vmem:[#allocation12] sm:$0xff]
        %v918 = vld [vmem:[#allocation12 + $0x8] sm:$0xff]
        %v919 = vld [vmem:[#allocation12 + $0x10] sm:$0xff]
        %v920 = vld [vmem:[#allocation12 + $0x18] sm:$0xff]
        %v921 = vld [vmem:[#allocation12 + $0x20] sm:$0xff]
        %v922 = vld [vmem:[#allocation12 + $0x28] sm:$0xff]
        %v923 = vld [vmem:[#allocation12 + $0x30] sm:$0xff]
        %v924 = vld [vmem:[#allocation12 + $0x38] sm:$0xff]
        %v925 = vld [vmem:[#allocation12 + $0x40] sm:$0xff]
        %v926 = vld [vmem:[#allocation12 + $0x48] sm:$0xff]
        %v927 = vld [vmem:[#allocation12 + $0x50] sm:$0xff]
        %v928 = vld [vmem:[#allocation12 + $0x58] sm:$0xff]
        %v929 = vld [vmem:[#allocation12 + $0x60] sm:$0xff]
        %v930 = vld [vmem:[#allocation12 + $0x68] sm:$0xff]
        %v931 = vld [vmem:[#allocation12 + $0x70] sm:$0xff]
        %v932 = vld [vmem:[#allocation12 + $0x78] sm:$0xff]
        %v933 = vld [vmem:[#allocation12 + $0x80] sm:$0xff]
        %v934 = vld [vmem:[#allocation12 + $0x88] sm:$0xff]
        %v935 = vld [vmem:[#allocation12 + $0x90] sm:$0xff]
        %v936 = vld [vmem:[#allocation12 + $0x98] sm:$0xff]
        %v937 = vld [vmem:[#allocation12 + $0xa0] sm:$0xff]
        %v938 = vld [vmem:[#allocation12 + $0xa8] sm:$0xff]
        %v939 = vld [vmem:[#allocation12 + $0xb0] sm:$0xff]
        %v940 = vld [vmem:[#allocation12 + $0xb8] sm:$0xff]
        %v941 = vld [vmem:[#allocation12 + $0xc0] sm:$0xff]
        %v942 = vld [vmem:[#allocation12 + $0xc8] sm:$0xff]
        %v943 = vld [vmem:[#allocation12 + $0xd0] sm:$0xff]
        %v944 = vld [vmem:[#allocation12 + $0xd8] sm:$0xff]
        %v945 = vld [vmem:[#allocation12 + $0xe0] sm:$0xff]
        %v946 = vld [vmem:[#allocation12 + $0xe8] sm:$0xff]
        %v947 = vld [vmem:[#allocation12 + $0xf0] sm:$0xff]
        %v948 = vld [vmem:[#allocation12 + $0xf8] sm:$0xff]
        %v949 = vld [vmem:[#allocation4] sm:$0xff]
        %v950 = vld [vmem:[#allocation5] sm:$0xff]
        %v951 = vpack.c.bf16 %v949, %v949
        %s952 = smul.u32 0, 4
        %s953 = smul.addr %s952, 8
        %s954 = scalar_lea.vmem [#allocation2], %s953
        %v955 = vld [vmem:[%s954] sm:$0xff]
        %v956 = vld [vmem:[%s954 + $0x8] sm:$0xff]
        %v957 = vld [vmem:[%s954 + $0x10] sm:$0xff]
        %v958 = vld [vmem:[%s954 + $0x18] sm:$0xff]
        %v991 = vunpack.c.l.b16 %v917
        %v992 = vunpack.c.h.b16 %v917
        %v993 = vunpack.c.l.b16 %v918
        %v994 = vunpack.c.h.b16 %v918
        %v995 = vunpack.c.l.b16 %v919
        %v996 = vunpack.c.h.b16 %v919
        %v997 = vunpack.c.l.b16 %v920
        %v998 = vunpack.c.h.b16 %v920
        %v999 = vunpack.c.l.b16 %v921
        %v1000 = vunpack.c.h.b16 %v921
        %v1001 = vunpack.c.l.b16 %v922
        %v1002 = vunpack.c.h.b16 %v922
        %v1003 = vunpack.c.l.b16 %v923
        %v1004 = vunpack.c.h.b16 %v923
        %v1005 = vunpack.c.l.b16 %v924
        %v1006 = vunpack.c.h.b16 %v924
        %v1007 = vunpack.c.l.b16 %v925
        %v1008 = vunpack.c.h.b16 %v925
        %v1009 = vunpack.c.l.b16 %v926
        %v1010 = vunpack.c.h.b16 %v926
        %v1011 = vunpack.c.l.b16 %v927
        %v1012 = vunpack.c.h.b16 %v927
        %v1013 = vunpack.c.l.b16 %v928
        %v1014 = vunpack.c.h.b16 %v928
        %v1015 = vunpack.c.l.b16 %v929
        %v1016 = vunpack.c.h.b16 %v929
        %v1017 = vunpack.c.l.b16 %v930
        %v1018 = vunpack.c.h.b16 %v930
        %v1019 = vunpack.c.l.b16 %v931
        %v1020 = vunpack.c.h.b16 %v931
        %v1021 = vunpack.c.l.b16 %v932
        %v1022 = vunpack.c.h.b16 %v932
        %v1023 = vunpack.c.l.b16 %v933
        %v1024 = vunpack.c.h.b16 %v933
        %v1025 = vunpack.c.l.b16 %v934
        %v1026 = vunpack.c.h.b16 %v934
        %v1027 = vunpack.c.l.b16 %v935
        %v1028 = vunpack.c.h.b16 %v935
        %v1029 = vunpack.c.l.b16 %v936
        %v1030 = vunpack.c.h.b16 %v936
        %v1031 = vunpack.c.l.b16 %v937
        %v1032 = vunpack.c.h.b16 %v937
        %v1033 = vunpack.c.l.b16 %v938
        %v1034 = vunpack.c.h.b16 %v938
        %v1035 = vunpack.c.l.b16 %v939
        %v1036 = vunpack.c.h.b16 %v939
        %v1037 = vunpack.c.l.b16 %v940
        %v1038 = vunpack.c.h.b16 %v940
        %v1039 = vunpack.c.l.b16 %v941
        %v1040 = vunpack.c.h.b16 %v941
        %v1041 = vunpack.c.l.b16 %v942
        %v1042 = vunpack.c.h.b16 %v942
        %v1043 = vunpack.c.l.b16 %v943
        %v1044 = vunpack.c.h.b16 %v943
        %v1045 = vunpack.c.l.b16 %v944
        %v1046 = vunpack.c.h.b16 %v944
        %v1047 = vunpack.c.l.b16 %v945
        %v1048 = vunpack.c.h.b16 %v945
        %v1049 = vunpack.c.l.b16 %v946
        %v1050 = vunpack.c.h.b16 %v946
        %v1051 = vunpack.c.l.b16 %v947
        %v1052 = vunpack.c.h.b16 %v947
        %v1053 = vunpack.c.l.b16 %v948
        %v1054 = vunpack.c.h.b16 %v948
        %v1055 = vpack.c.b16 %v995, %v991
        %v1056 = vpack.c.b16 %v996, %v992
        %v1057 = vpack.c.b16 %v997, %v993
        %v1058 = vpack.c.b16 %v998, %v994
        %v1059 = vpack.c.b16 %v1003, %v999
        %v1060 = vpack.c.b16 %v1004, %v1000
        %v1061 = vpack.c.b16 %v1005, %v1001
        %v1062 = vpack.c.b16 %v1006, %v1002
        %v1063 = vpack.c.b16 %v1011, %v1007
        %v1064 = vpack.c.b16 %v1012, %v1008
        %v1065 = vpack.c.b16 %v1013, %v1009
        %v1066 = vpack.c.b16 %v1014, %v1010
        %v1067 = vpack.c.b16 %v1019, %v1015
        %v1068 = vpack.c.b16 %v1020, %v1016
        %v1069 = vpack.c.b16 %v1021, %v1017
        %v1070 = vpack.c.b16 %v1022, %v1018
        %v1071 = vpack.c.b16 %v1027, %v1023
        %v1072 = vpack.c.b16 %v1028, %v1024
        %v1073 = vpack.c.b16 %v1029, %v1025
        %v1074 = vpack.c.b16 %v1030, %v1026
        %v1075 = vpack.c.b16 %v1035, %v1031
        %v1076 = vpack.c.b16 %v1036, %v1032
        %v1077 = vpack.c.b16 %v1037, %v1033
        %v1078 = vpack.c.b16 %v1038, %v1034
        %v1079 = vpack.c.b16 %v1043, %v1039
        %v1080 = vpack.c.b16 %v1044, %v1040
        %v1081 = vpack.c.b16 %v1045, %v1041
        %v1082 = vpack.c.b16 %v1046, %v1042
        %v1083 = vpack.c.b16 %v1051, %v1047
        %v1084 = vpack.c.b16 %v1052, %v1048
        %v1085 = vpack.c.b16 %v1053, %v1049
        %v1086 = vpack.c.b16 %v1054, %v1050
        %1119 = vmatprep.subr.bf16.mxu0 %v1084
        %1120 = vmatpush1.bf16.msra.mxu0 %v1083
        %1121 = vmatprep.subr.bf16.mxu0 %v1080
        %1122 = vmatpush1.bf16.msra.mxu0 %v1079
        %1123 = vmatprep.subr.bf16.mxu0 %v1076
        %1124 = vmatpush1.bf16.msra.mxu0 %v1075
        %1125 = vmatprep.subr.bf16.mxu0 %v1072
        %1126 = vmatpush1.bf16.msra.mxu0 %v1071
        %1127 = vmatprep.subr.bf16.mxu0 %v1068
        %1128 = vmatpush1.bf16.msra.mxu0 %v1067
        %1129 = vmatprep.subr.bf16.mxu0 %v1064
        %1130 = vmatpush1.bf16.msra.mxu0 %v1063
        %1131 = vmatprep.subr.bf16.mxu0 %v1060
        %1132 = vmatpush1.bf16.msra.mxu0 %v1059
        %1133 = vmatprep.subr.bf16.mxu0 %v1056
        %1134 = vmatpush1.bf16.msra.mxu0 %v1055
        %1135 = vmatprep.subr.bf16.mxu0 0
        %1136 = vmatpush2.bf16.msra.mxu0 0
        %1137 = vmatprep.subr.bf16.mxu0 0
        %1138 = vmatpush2.bf16.msra.mxu0 0
        %1139 = vmatprep.subr.bf16.mxu0 0
        %1140 = vmatpush2.bf16.msra.mxu0 0
        %1141 = vmatprep.subr.bf16.mxu0 0
        %1142 = vmatpush2.bf16.msra.mxu0 0
        %1143 = vmatprep.subr.bf16.mxu0 0
        %1144 = vmatpush2.bf16.msra.mxu0 0
        %1145 = vmatprep.subr.bf16.mxu0 0
        %1146 = vmatpush2.bf16.msra.mxu0 0
        %1147 = vmatprep.subr.bf16.mxu0 0
        %1148 = vmatpush2.bf16.msra.mxu0 0
        %1149 = vmatprep.subr.bf16.mxu0 0
        %1150 = vmatpush2.bf16.msra.mxu0 0
        %1151 = vmatprep.mubr.bf16.mxu0 0
        %1152 = vmatmul.mubr.bf16.gmra.mxu0 %v951
        %v1153 = vpop.f32.mrf.mxu0
        %v1154 = vadd.f32 %v955, %v1153
        %v1155 = vpop.f32.mrf.mxu0
        %v1156 = vadd.f32 %v956, %v1155
        %v1157 = vpop.f32.mrf.mxu0
        %v1158 = vpop.f32.mrf.mxu0
        %1159 = vdwg.mxu0
        %1160 = vmatprep.subr.bf16.mxu0 %v1086
        %1161 = vmatpush1.bf16.msra.mxu0 %v1085
        %1162 = vmatprep.subr.bf16.mxu0 %v1082
        %1163 = vmatpush1.bf16.msra.mxu0 %v1081
        %1164 = vmatprep.subr.bf16.mxu0 %v1078
        %1165 = vmatpush1.bf16.msra.mxu0 %v1077
        %1166 = vmatprep.subr.bf16.mxu0 %v1074
        %1167 = vmatpush1.bf16.msra.mxu0 %v1073
        %1168 = vmatprep.subr.bf16.mxu0 %v1070
        %1169 = vmatpush1.bf16.msra.mxu0 %v1069
        %1170 = vmatprep.subr.bf16.mxu0 %v1066
        %1171 = vmatpush1.bf16.msra.mxu0 %v1065
        %1172 = vmatprep.subr.bf16.mxu0 %v1062
        %1173 = vmatpush1.bf16.msra.mxu0 %v1061
        %1174 = vmatprep.subr.bf16.mxu0 %v1058
        %1175 = vmatpush1.bf16.msra.mxu0 %v1057
        %1176 = vmatprep.subr.bf16.mxu0 0
        %1177 = vmatpush2.bf16.msra.mxu0 0
        %1178 = vmatprep.subr.bf16.mxu0 0
        %1179 = vmatpush2.bf16.msra.mxu0 0
        %1180 = vmatprep.subr.bf16.mxu0 0
        %1181 = vmatpush2.bf16.msra.mxu0 0
        %1182 = vmatprep.subr.bf16.mxu0 0
        %1183 = vmatpush2.bf16.msra.mxu0 0
        %1184 = vmatprep.subr.bf16.mxu0 0
        %1185 = vmatpush2.bf16.msra.mxu0 0
        %1186 = vmatprep.subr.bf16.mxu0 0
        %1187 = vmatpush2.bf16.msra.mxu0 0
        %1188 = vmatprep.subr.bf16.mxu0 0
        %1189 = vmatpush2.bf16.msra.mxu0 0
        %1190 = vmatprep.subr.bf16.mxu0 0
        %1191 = vmatpush2.bf16.msra.mxu0 0
        %1192 = vmatprep.mubr.bf16.mxu0 0
        %1193 = vmatmul.mubr.bf16.gmra.mxu0 %v951
        %v1194 = vpop.f32.mrf.mxu0
        %v1195 = vadd.f32 %v957, %v1194
        %v1196 = vpop.f32.mrf.mxu0
        %v1197 = vadd.f32 %v958, %v1196
        %v1198 = vpop.f32.mrf.mxu0
        %v1199 = vpop.f32.mrf.mxu0
        %1200 = vdwg.mxu0
        %v1201 = vxor.u32 %v1154, 2147483648
        %v1202 = vxor.u32 %v1156, 2147483648
        %v1203 = vxor.u32 %v1195, 2147483648
        %v1204 = vmul.f32 %v1201, 1.442695
        %v1205 = vpow.pop %v1204
        %v1206 = vmul.f32 %v1202, 1.442695
        %v1207 = vpow.pop %v1206
        %v1208 = vmul.f32 %v1203, 1.442695
        %v1209 = vpow.pop %v1208
        %v1210 = vadd.f32 %v1205, 1.0
        %v1211 = vadd.f32 %v1207, 1.0
        %v1212 = vadd.f32 %v1209, 1.0
        %v1213 = vrcp.pop %v1210
        %v1214 = vmul.f32 1.0, %v1213
        %v1215 = vrcp.pop %v1211
        %v1216 = vmul.f32 1.0, %v1215
        %v1217 = vrcp.pop %v1212
        %v1218 = vmul.f32 1.0, %v1217
        %v1219 = vtanh.pop %v1197
        %v1220 = vmul.f32 %v1216, %v950
        %v1221 = vmul.f32 %v1214, %v1219
        %v1222 = vadd.f32 %v1220, %v1221
        %v1223 = vtanh.pop %v1222
        %v1224 = vmul.f32 %v1218, %v1223
        %v1225 = vpack.c.bf16 %v1224, %v1224
        %1226 = vst [vmem:[#allocation3] sm:$0xf] %v1225
        %s1227 = smul.u32 1, 4
        %s1228 = smul.addr %s1227, 8
        %s1229 = scalar_lea.vmem [#allocation2], %s1228
        %v1230 = vld [vmem:[%s1229] sm:$0xff]
        %v1231 = vld [vmem:[%s1229 + $0x8] sm:$0xff]
        %v1232 = vld [vmem:[%s1229 + $0x10] sm:$0xff]
        %v1233 = vld [vmem:[%s1229 + $0x18] sm:$0xff]
        %1234 = vmatprep.subr.bf16.mxu0 %v1084
        %1235 = vmatpush1.bf16.msra.mxu0 %v1083
        %1236 = vmatprep.subr.bf16.mxu0 %v1080
        %1237 = vmatpush1.bf16.msra.mxu0 %v1079
        %1238 = vmatprep.subr.bf16.mxu0 %v1076
        %1239 = vmatpush1.bf16.msra.mxu0 %v1075
        %1240 = vmatprep.subr.bf16.mxu0 %v1072
        %1241 = vmatpush1.bf16.msra.mxu0 %v1071
        %1242 = vmatprep.subr.bf16.mxu0 %v1068
        %1243 = vmatpush1.bf16.msra.mxu0 %v1067
        %1244 = vmatprep.subr.bf16.mxu0 %v1064
        %1245 = vmatpush1.bf16.msra.mxu0 %v1063
        %1246 = vmatprep.subr.bf16.mxu0 %v1060
        %1247 = vmatpush1.bf16.msra.mxu0 %v1059
        %1248 = vmatprep.subr.bf16.mxu0 %v1056
        %1249 = vmatpush1.bf16.msra.mxu0 %v1055
        %1250 = vmatprep.subr.bf16.mxu0 0
        %1251 = vmatpush2.bf16.msra.mxu0 0
        %1252 = vmatprep.subr.bf16.mxu0 0
        %1253 = vmatpush2.bf16.msra.mxu0 0
        %1254 = vmatprep.subr.bf16.mxu0 0
        %1255 = vmatpush2.bf16.msra.mxu0 0
        %1256 = vmatprep.subr.bf16.mxu0 0
        %1257 = vmatpush2.bf16.msra.mxu0 0
        %1258 = vmatprep.subr.bf16.mxu0 0
        %1259 = vmatpush2.bf16.msra.mxu0 0
        %1260 = vmatprep.subr.bf16.mxu0 0
        %1261 = vmatpush2.bf16.msra.mxu0 0
        %1262 = vmatprep.subr.bf16.mxu0 0
        %1263 = vmatpush2.bf16.msra.mxu0 0
        %1264 = vmatprep.subr.bf16.mxu0 0
        %1265 = vmatpush2.bf16.msra.mxu0 0
        %1266 = vmatprep.mubr.bf16.mxu0 0
        %1267 = vmatmul.mubr.bf16.gmra.mxu0 %v1225
        %v1268 = vpop.f32.mrf.mxu0
        %v1269 = vadd.f32 %v1230, %v1268
        %v1270 = vpop.f32.mrf.mxu0
        %v1271 = vadd.f32 %v1231, %v1270
        %v1272 = vpop.f32.mrf.mxu0
        %v1273 = vpop.f32.mrf.mxu0
        %1274 = vdwg.mxu0
        %1275 = vmatprep.subr.bf16.mxu0 %v1086
        %1276 = vmatpush1.bf16.msra.mxu0 %v1085
        %1277 = vmatprep.subr.bf16.mxu0 %v1082
        %1278 = vmatpush1.bf16.msra.mxu0 %v1081
        %1279 = vmatprep.subr.bf16.mxu0 %v1078
        %1280 = vmatpush1.bf16.msra.mxu0 %v1077
        %1281 = vmatprep.subr.bf16.mxu0 %v1074
        %1282 = vmatpush1.bf16.msra.mxu0 %v1073
        %1283 = vmatprep.subr.bf16.mxu0 %v1070
        %1284 = vmatpush1.bf16.msra.mxu0 %v1069
        %1285 = vmatprep.subr.bf16.mxu0 %v1066
        %1286 = vmatpush1.bf16.msra.mxu0 %v1065
        %1287 = vmatprep.subr.bf16.mxu0 %v1062
        %1288 = vmatpush1.bf16.msra.mxu0 %v1061
        %1289 = vmatprep.subr.bf16.mxu0 %v1058
        %1290 = vmatpush1.bf16.msra.mxu0 %v1057
        %1291 = vmatprep.subr.bf16.mxu0 0
        %1292 = vmatpush2.bf16.msra.mxu0 0
        %1293 = vmatprep.subr.bf16.mxu0 0
        %1294 = vmatpush2.bf16.msra.mxu0 0
        %1295 = vmatprep.subr.bf16.mxu0 0
        %1296 = vmatpush2.bf16.msra.mxu0 0
        %1297 = vmatprep.subr.bf16.mxu0 0
        %1298 = vmatpush2.bf16.msra.mxu0 0
        %1299 = vmatprep.subr.bf16.mxu0 0
        %1300 = vmatpush2.bf16.msra.mxu0 0
        %1301 = vmatprep.subr.bf16.mxu0 0
        %1302 = vmatpush2.bf16.msra.mxu0 0
        %1303 = vmatprep.subr.bf16.mxu0 0
        %1304 = vmatpush2.bf16.msra.mxu0 0
        %1305 = vmatprep.subr.bf16.mxu0 0
        %1306 = vmatpush2.bf16.msra.mxu0 0
        %1307 = vmatprep.mubr.bf16.mxu0 0
        %1308 = vmatmul.mubr.bf16.gmra.mxu0 %v1225
        %v1309 = vpop.f32.mrf.mxu0
        %v1310 = vadd.f32 %v1232, %v1309
        %v1311 = vpop.f32.mrf.mxu0
        %v1312 = vadd.f32 %v1233, %v1311
        %v1313 = vpop.f32.mrf.mxu0
        %v1314 = vpop.f32.mrf.mxu0
        %1315 = vdwg.mxu0
        %v1316 = vxor.u32 %v1269, 2147483648
        %v1317 = vxor.u32 %v1271, 2147483648
        %v1318 = vxor.u32 %v1310, 2147483648
        %v1319 = vmul.f32 %v1316, 1.442695
        %v1320 = vpow.pop %v1319
        %v1321 = vmul.f32 %v1317, 1.442695
        %v1322 = vpow.pop %v1321
        %v1323 = vmul.f32 %v1318, 1.442695
        %v1324 = vpow.pop %v1323
        %v1325 = vadd.f32 %v1320, 1.0
        %v1326 = vadd.f32 %v1322, 1.0
        %v1327 = vadd.f32 %v1324, 1.0
        %v1328 = vrcp.pop %v1325
        %v1329 = vmul.f32 1.0, %v1328
        %v1330 = vrcp.pop %v1326
        %v1331 = vmul.f32 1.0, %v1330
        %v1332 = vrcp.pop %v1327
        %v1333 = vmul.f32 1.0, %v1332
        %v1334 = vtanh.pop %v1312
        %v1335 = vmul.f32 %v1331, %v1222
        %v1336 = vmul.f32 %v1329, %v1334
        %v1337 = vadd.f32 %v1335, %v1336
        %v1338 = vtanh.pop %v1337
        %v1339 = vmul.f32 %v1333, %v1338
        %v1340 = vpack.c.bf16 %v1339, %v1339
        %s1341 = scalar_lea.vmem [#allocation3], 4
        %1342 = vst [vmem:[%s1341] sm:$0xf] %v1340
        %s1343 = smul.u32 2, 4
        %s1344 = smul.addr %s1343, 8
        %s1345 = scalar_lea.vmem [#allocation2], %s1344
        %v1346 = vld [vmem:[%s1345] sm:$0xff]
        %v1347 = vld [vmem:[%s1345 + $0x8] sm:$0xff]
        %v1348 = vld [vmem:[%s1345 + $0x10] sm:$0xff]
        %v1349 = vld [vmem:[%s1345 + $0x18] sm:$0xff]
        %1350 = vmatprep.subr.bf16.mxu0 %v1084
        %1351 = vmatpush1.bf16.msra.mxu0 %v1083
        %1352 = vmatprep.subr.bf16.mxu0 %v1080
        %1353 = vmatpush1.bf16.msra.mxu0 %v1079
        %1354 = vmatprep.subr.bf16.mxu0 %v1076
        %1355 = vmatpush1.bf16.msra.mxu0 %v1075
        %1356 = vmatprep.subr.bf16.mxu0 %v1072
        %1357 = vmatpush1.bf16.msra.mxu0 %v1071
        %1358 = vmatprep.subr.bf16.mxu0 %v1068
        %1359 = vmatpush1.bf16.msra.mxu0 %v1067
        %1360 = vmatprep.subr.bf16.mxu0 %v1064
        %1361 = vmatpush1.bf16.msra.mxu0 %v1063
        %1362 = vmatprep.subr.bf16.mxu0 %v1060
        %1363 = vmatpush1.bf16.msra.mxu0 %v1059
        %1364 = vmatprep.subr.bf16.mxu0 %v1056
        %1365 = vmatpush1.bf16.msra.mxu0 %v1055
        %1366 = vmatprep.subr.bf16.mxu0 0
        %1367 = vmatpush2.bf16.msra.mxu0 0
        %1368 = vmatprep.subr.bf16.mxu0 0
        %1369 = vmatpush2.bf16.msra.mxu0 0
        %1370 = vmatprep.subr.bf16.mxu0 0
        %1371 = vmatpush2.bf16.msra.mxu0 0
        %1372 = vmatprep.subr.bf16.mxu0 0
        %1373 = vmatpush2.bf16.msra.mxu0 0
        %1374 = vmatprep.subr.bf16.mxu0 0
        %1375 = vmatpush2.bf16.msra.mxu0 0
        %1376 = vmatprep.subr.bf16.mxu0 0
        %1377 = vmatpush2.bf16.msra.mxu0 0
        %1378 = vmatprep.subr.bf16.mxu0 0
        %1379 = vmatpush2.bf16.msra.mxu0 0
        %1380 = vmatprep.subr.bf16.mxu0 0
        %1381 = vmatpush2.bf16.msra.mxu0 0
        %1382 = vmatprep.mubr.bf16.mxu0 0
        %1383 = vmatmul.mubr.bf16.gmra.mxu0 %v1340
        %v1384 = vpop.f32.mrf.mxu0
        %v1385 = vadd.f32 %v1346, %v1384
        %v1386 = vpop.f32.mrf.mxu0
        %v1387 = vadd.f32 %v1347, %v1386
        %v1388 = vpop.f32.mrf.mxu0
        %v1389 = vpop.f32.mrf.mxu0
        %1390 = vdwg.mxu0
        %1391 = vmatprep.subr.bf16.mxu0 %v1086
        %1392 = vmatpush1.bf16.msra.mxu0 %v1085
        %1393 = vmatprep.subr.bf16.mxu0 %v1082
        %1394 = vmatpush1.bf16.msra.mxu0 %v1081
        %1395 = vmatprep.subr.bf16.mxu0 %v1078
        %1396 = vmatpush1.bf16.msra.mxu0 %v1077
        %1397 = vmatprep.subr.bf16.mxu0 %v1074
        %1398 = vmatpush1.bf16.msra.mxu0 %v1073
        %1399 = vmatprep.subr.bf16.mxu0 %v1070
        %1400 = vmatpush1.bf16.msra.mxu0 %v1069
        %1401 = vmatprep.subr.bf16.mxu0 %v1066
        %1402 = vmatpush1.bf16.msra.mxu0 %v1065
        %1403 = vmatprep.subr.bf16.mxu0 %v1062
        %1404 = vmatpush1.bf16.msra.mxu0 %v1061
        %1405 = vmatprep.subr.bf16.mxu0 %v1058
        %1406 = vmatpush1.bf16.msra.mxu0 %v1057
        %1407 = vmatprep.subr.bf16.mxu0 0
        %1408 = vmatpush2.bf16.msra.mxu0 0
        %1409 = vmatprep.subr.bf16.mxu0 0
        %1410 = vmatpush2.bf16.msra.mxu0 0
        %1411 = vmatprep.subr.bf16.mxu0 0
        %1412 = vmatpush2.bf16.msra.mxu0 0
        %1413 = vmatprep.subr.bf16.mxu0 0
        %1414 = vmatpush2.bf16.msra.mxu0 0
        %1415 = vmatprep.subr.bf16.mxu0 0
        %1416 = vmatpush2.bf16.msra.mxu0 0
        %1417 = vmatprep.subr.bf16.mxu0 0
        %1418 = vmatpush2.bf16.msra.mxu0 0
        %1419 = vmatprep.subr.bf16.mxu0 0
        %1420 = vmatpush2.bf16.msra.mxu0 0
        %1421 = vmatprep.subr.bf16.mxu0 0
        %1422 = vmatpush2.bf16.msra.mxu0 0
        %1423 = vmatprep.mubr.bf16.mxu0 0
        %1424 = vmatmul.mubr.bf16.gmra.mxu0 %v1340
        %v1425 = vpop.f32.mrf.mxu0
        %v1426 = vadd.f32 %v1348, %v1425
        %v1427 = vpop.f32.mrf.mxu0
        %v1428 = vadd.f32 %v1349, %v1427
        %v1429 = vpop.f32.mrf.mxu0
        %v1430 = vpop.f32.mrf.mxu0
        %1431 = vdwg.mxu0
        %v1432 = vxor.u32 %v1385, 2147483648
        %v1433 = vxor.u32 %v1387, 2147483648
        %v1434 = vxor.u32 %v1426, 2147483648
        %v1435 = vmul.f32 %v1432, 1.442695
        %v1436 = vpow.pop %v1435
        %v1437 = vmul.f32 %v1433, 1.442695
        %v1438 = vpow.pop %v1437
        %v1439 = vmul.f32 %v1434, 1.442695
        %v1440 = vpow.pop %v1439
        %v1441 = vadd.f32 %v1436, 1.0
        %v1442 = vadd.f32 %v1438, 1.0
        %v1443 = vadd.f32 %v1440, 1.0
        %v1444 = vrcp.pop %v1441
        %v1445 = vmul.f32 1.0, %v1444
        %v1446 = vrcp.pop %v1442
        %v1447 = vmul.f32 1.0, %v1446
        %v1448 = vrcp.pop %v1443
        %v1449 = vmul.f32 1.0, %v1448
        %v1450 = vtanh.pop %v1428
        %v1451 = vmul.f32 %v1447, %v1337
        %v1452 = vmul.f32 %v1445, %v1450
        %v1453 = vadd.f32 %v1451, %v1452
        %v1454 = vtanh.pop %v1453
        %v1455 = vmul.f32 %v1449, %v1454
        %v1456 = vpack.c.bf16 %v1455, %v1455
        %s1457 = scalar_lea.vmem [#allocation3], 8
        %1458 = vst [vmem:[%s1457] sm:$0xf] %v1456
        %s1459 = smul.u32 3, 4
        %s1460 = smul.addr %s1459, 8
        %s1461 = scalar_lea.vmem [#allocation2], %s1460
        %v1462 = vld [vmem:[%s1461] sm:$0xff]
        %v1463 = vld [vmem:[%s1461 + $0x8] sm:$0xff]
        %v1464 = vld [vmem:[%s1461 + $0x10] sm:$0xff]
        %v1465 = vld [vmem:[%s1461 + $0x18] sm:$0xff]
        %1466 = vmatprep.subr.bf16.mxu0 %v1084
        %1467 = vmatpush1.bf16.msra.mxu0 %v1083
        %1468 = vmatprep.subr.bf16.mxu0 %v1080
        %1469 = vmatpush1.bf16.msra.mxu0 %v1079
        %1470 = vmatprep.subr.bf16.mxu0 %v1076
        %1471 = vmatpush1.bf16.msra.mxu0 %v1075
        %1472 = vmatprep.subr.bf16.mxu0 %v1072
        %1473 = vmatpush1.bf16.msra.mxu0 %v1071
        %1474 = vmatprep.subr.bf16.mxu0 %v1068
        %1475 = vmatpush1.bf16.msra.mxu0 %v1067
        %1476 = vmatprep.subr.bf16.mxu0 %v1064
        %1477 = vmatpush1.bf16.msra.mxu0 %v1063
        %1478 = vmatprep.subr.bf16.mxu0 %v1060
        %1479 = vmatpush1.bf16.msra.mxu0 %v1059
        %1480 = vmatprep.subr.bf16.mxu0 %v1056
        %1481 = vmatpush1.bf16.msra.mxu0 %v1055
        %1482 = vmatprep.subr.bf16.mxu0 0
        %1483 = vmatpush2.bf16.msra.mxu0 0
        %1484 = vmatprep.subr.bf16.mxu0 0
        %1485 = vmatpush2.bf16.msra.mxu0 0
        %1486 = vmatprep.subr.bf16.mxu0 0
        %1487 = vmatpush2.bf16.msra.mxu0 0
        %1488 = vmatprep.subr.bf16.mxu0 0
        %1489 = vmatpush2.bf16.msra.mxu0 0
        %1490 = vmatprep.subr.bf16.mxu0 0
        %1491 = vmatpush2.bf16.msra.mxu0 0
        %1492 = vmatprep.subr.bf16.mxu0 0
        %1493 = vmatpush2.bf16.msra.mxu0 0
        %1494 = vmatprep.subr.bf16.mxu0 0
        %1495 = vmatpush2.bf16.msra.mxu0 0
        %1496 = vmatprep.subr.bf16.mxu0 0
        %1497 = vmatpush2.bf16.msra.mxu0 0
        %1498 = vmatprep.mubr.bf16.mxu0 0
        %1499 = vmatmul.mubr.bf16.gmra.mxu0 %v1456
        %v1500 = vpop.f32.mrf.mxu0
        %v1501 = vadd.f32 %v1462, %v1500
        %v1502 = vpop.f32.mrf.mxu0
        %v1503 = vadd.f32 %v1463, %v1502
        %v1504 = vpop.f32.mrf.mxu0
        %v1505 = vpop.f32.mrf.mxu0
        %1506 = vdwg.mxu0
        %1507 = vmatprep.subr.bf16.mxu0 %v1086
        %1508 = vmatpush1.bf16.msra.mxu0 %v1085
        %1509 = vmatprep.subr.bf16.mxu0 %v1082
        %1510 = vmatpush1.bf16.msra.mxu0 %v1081
        %1511 = vmatprep.subr.bf16.mxu0 %v1078
        %1512 = vmatpush1.bf16.msra.mxu0 %v1077
        %1513 = vmatprep.subr.bf16.mxu0 %v1074
        %1514 = vmatpush1.bf16.msra.mxu0 %v1073
        %1515 = vmatprep.subr.bf16.mxu0 %v1070
        %1516 = vmatpush1.bf16.msra.mxu0 %v1069
        %1517 = vmatprep.subr.bf16.mxu0 %v1066
        %1518 = vmatpush1.bf16.msra.mxu0 %v1065
        %1519 = vmatprep.subr.bf16.mxu0 %v1062
        %1520 = vmatpush1.bf16.msra.mxu0 %v1061
        %1521 = vmatprep.subr.bf16.mxu0 %v1058
        %1522 = vmatpush1.bf16.msra.mxu0 %v1057
        %1523 = vmatprep.subr.bf16.mxu0 0
        %1524 = vmatpush2.bf16.msra.mxu0 0
        %1525 = vmatprep.subr.bf16.mxu0 0
        %1526 = vmatpush2.bf16.msra.mxu0 0
        %1527 = vmatprep.subr.bf16.mxu0 0
        %1528 = vmatpush2.bf16.msra.mxu0 0
        %1529 = vmatprep.subr.bf16.mxu0 0
        %1530 = vmatpush2.bf16.msra.mxu0 0
        %1531 = vmatprep.subr.bf16.mxu0 0
        %1532 = vmatpush2.bf16.msra.mxu0 0
        %1533 = vmatprep.subr.bf16.mxu0 0
        %1534 = vmatpush2.bf16.msra.mxu0 0
        %1535 = vmatprep.subr.bf16.mxu0 0
        %1536 = vmatpush2.bf16.msra.mxu0 0
        %1537 = vmatprep.subr.bf16.mxu0 0
        %1538 = vmatpush2.bf16.msra.mxu0 0
        %1539 = vmatprep.mubr.bf16.mxu0 0
        %1540 = vmatmul.mubr.bf16.gmra.mxu0 %v1456
        %v1541 = vpop.f32.mrf.mxu0
        %v1542 = vadd.f32 %v1464, %v1541
        %v1543 = vpop.f32.mrf.mxu0
        %v1544 = vadd.f32 %v1465, %v1543
        %v1545 = vpop.f32.mrf.mxu0
        %v1546 = vpop.f32.mrf.mxu0
        %1547 = vdwg.mxu0
        %v1548 = vxor.u32 %v1501, 2147483648
        %v1549 = vxor.u32 %v1503, 2147483648
        %v1550 = vxor.u32 %v1542, 2147483648
        %v1551 = vmul.f32 %v1548, 1.442695
        %v1552 = vpow.pop %v1551
        %v1553 = vmul.f32 %v1549, 1.442695
        %v1554 = vpow.pop %v1553
        %v1555 = vmul.f32 %v1550, 1.442695
        %v1556 = vpow.pop %v1555
        %v1557 = vadd.f32 %v1552, 1.0
        %v1558 = vadd.f32 %v1554, 1.0
        %v1559 = vadd.f32 %v1556, 1.0
        %v1560 = vrcp.pop %v1557
        %v1561 = vmul.f32 1.0, %v1560
        %v1562 = vrcp.pop %v1558
        %v1563 = vmul.f32 1.0, %v1562
        %v1564 = vrcp.pop %v1559
        %v1565 = vmul.f32 1.0, %v1564
        %v1566 = vtanh.pop %v1544
        %v1567 = vmul.f32 %v1563, %v1453
        %v1568 = vmul.f32 %v1561, %v1566
        %v1569 = vadd.f32 %v1567, %v1568
        %v1570 = vtanh.pop %v1569
        %v1571 = vmul.f32 %v1565, %v1570
        %v1572 = vpack.c.bf16 %v1571, %v1571
        %s1573 = scalar_lea.vmem [#allocation3], 12
        %1574 = vst [vmem:[%s1573] sm:$0xf] %v1572
        %1575 = vst [vmem:[#allocation4] sm:$0xff] %v1571
        %1576 = vst [vmem:[#allocation5] sm:$0xff] %v1569
        %v1577 = vld [vmem:[#allocation3] sm:$0xf]
        %v1578 = vld [vmem:[#allocation3 + $0x4] sm:$0xf]
        %v1579 = vld [vmem:[#allocation3 + $0x8] sm:$0xf]
        %v1580 = vld [vmem:[#allocation3 + $0xc] sm:$0xf]
        %v1581 = vld [vmem:[#allocation14] sm:$0xff]
        %v1582 = vld [vmem:[#allocation14 + $0x8] sm:$0xff]
        %v1583 = vld [vmem:[#allocation14 + $0x10] sm:$0xff]
        %v1584 = vld [vmem:[#allocation14 + $0x18] sm:$0xff]
        %v1585 = vld [vmem:[#allocation14 + $0x20] sm:$0xff]
        %v1586 = vld [vmem:[#allocation14 + $0x28] sm:$0xff]
        %v1587 = vld [vmem:[#allocation14 + $0x30] sm:$0xff]
        %v1588 = vld [vmem:[#allocation14 + $0x38] sm:$0xff]
        %v1589 = vld [vmem:[#allocation14 + $0x40] sm:$0xff]
        %v1590 = vld [vmem:[#allocation14 + $0x48] sm:$0xff]
        %v1591 = vld [vmem:[#allocation14 + $0x50] sm:$0xff]
        %v1592 = vld [vmem:[#allocation14 + $0x58] sm:$0xff]
        %v1593 = vld [vmem:[#allocation14 + $0x60] sm:$0xff]
        %v1594 = vld [vmem:[#allocation14 + $0x68] sm:$0xff]
        %v1595 = vld [vmem:[#allocation14 + $0x70] sm:$0xff]
        %v1596 = vld [vmem:[#allocation14 + $0x78] sm:$0xff]
        %v1597 = vld [vmem:[#allocation14 + $0x80] sm:$0xff]
        %v1598 = vld [vmem:[#allocation14 + $0x88] sm:$0xff]
        %v1599 = vld [vmem:[#allocation14 + $0x90] sm:$0xff]
        %v1600 = vld [vmem:[#allocation14 + $0x98] sm:$0xff]
        %v1601 = vld [vmem:[#allocation14 + $0xa0] sm:$0xff]
        %v1602 = vld [vmem:[#allocation14 + $0xa8] sm:$0xff]
        %v1603 = vld [vmem:[#allocation14 + $0xb0] sm:$0xff]
        %v1604 = vld [vmem:[#allocation14 + $0xb8] sm:$0xff]
        %v1605 = vld [vmem:[#allocation14 + $0xc0] sm:$0xff]
        %v1606 = vld [vmem:[#allocation14 + $0xc8] sm:$0xff]
        %v1607 = vld [vmem:[#allocation14 + $0xd0] sm:$0xff]
        %v1608 = vld [vmem:[#allocation14 + $0xd8] sm:$0xff]
        %v1609 = vld [vmem:[#allocation14 + $0xe0] sm:$0xff]
        %v1610 = vld [vmem:[#allocation14 + $0xe8] sm:$0xff]
        %v1611 = vld [vmem:[#allocation14 + $0xf0] sm:$0xff]
        %v1612 = vld [vmem:[#allocation14 + $0xf8] sm:$0xff]
        %v1613 = vld [vmem:[#allocation15] sm:$0xf]
        %v1615 = vlaneseq
        %v1616 = vshrl.u32 %v1615, 7
        %v1617 = vsub.s32 0, %v1616
        %v1618 = vrot.slane %v1613, %v1617
        %v1619 = vlaneseq
        %v1620 = vshrl.u32 %v1619, 7
        %v1621 = vsub.s32 1, %v1620
        %v1622 = vrot.slane %v1613, %v1621
        %v1623 = vlaneseq
        %v1624 = vshrl.u32 %v1623, 7
        %v1625 = vsub.s32 2, %v1624
        %v1626 = vrot.slane %v1613, %v1625
        %v1627 = vlaneseq
        %v1628 = vshrl.u32 %v1627, 7
        %v1629 = vsub.s32 3, %v1628
        %v1630 = vrot.slane %v1613, %v1629
        %v1639 = vunpack.c.l.b16 %v1577
        %v1640 = vunpack.c.l.b16 %v1578
        %v1641 = vunpack.c.l.b16 %v1579
        %v1642 = vunpack.c.l.b16 %v1580
        %v1643 = vpack.c.b16 %v1640, %v1639
        %v1644 = vpack.c.b16 %v1642, %v1641
        %v1679 = vunpack.c.l.b16 %v1581
        %v1680 = vunpack.c.h.b16 %v1581
        %v1681 = vunpack.c.l.b16 %v1582
        %v1682 = vunpack.c.h.b16 %v1582
        %v1683 = vunpack.c.l.b16 %v1583
        %v1684 = vunpack.c.h.b16 %v1583
        %v1685 = vunpack.c.l.b16 %v1584
        %v1686 = vunpack.c.h.b16 %v1584
        %v1687 = vunpack.c.l.b16 %v1585
        %v1688 = vunpack.c.h.b16 %v1585
        %v1689 = vunpack.c.l.b16 %v1586
        %v1690 = vunpack.c.h.b16 %v1586
        %v1691 = vunpack.c.l.b16 %v1587
        %v1692 = vunpack.c.h.b16 %v1587
        %v1693 = vunpack.c.l.b16 %v1588
        %v1694 = vunpack.c.h.b16 %v1588
        %v1695 = vunpack.c.l.b16 %v1589
        %v1696 = vunpack.c.h.b16 %v1589
        %v1697 = vunpack.c.l.b16 %v1590
        %v1698 = vunpack.c.h.b16 %v1590
        %v1699 = vunpack.c.l.b16 %v1591
        %v1700 = vunpack.c.h.b16 %v1591
        %v1701 = vunpack.c.l.b16 %v1592
        %v1702 = vunpack.c.h.b16 %v1592
        %v1703 = vunpack.c.l.b16 %v1593
        %v1704 = vunpack.c.h.b16 %v1593
        %v1705 = vunpack.c.l.b16 %v1594
        %v1706 = vunpack.c.h.b16 %v1594
        %v1707 = vunpack.c.l.b16 %v1595
        %v1708 = vunpack.c.h.b16 %v1595
        %v1709 = vunpack.c.l.b16 %v1596
        %v1710 = vunpack.c.h.b16 %v1596
        %v1711 = vunpack.c.l.b16 %v1597
        %v1712 = vunpack.c.h.b16 %v1597
        %v1713 = vunpack.c.l.b16 %v1598
        %v1714 = vunpack.c.h.b16 %v1598
        %v1715 = vunpack.c.l.b16 %v1599
        %v1716 = vunpack.c.h.b16 %v1599
        %v1717 = vunpack.c.l.b16 %v1600
        %v1718 = vunpack.c.h.b16 %v1600
        %v1719 = vunpack.c.l.b16 %v1601
        %v1720 = vunpack.c.h.b16 %v1601
        %v1721 = vunpack.c.l.b16 %v1602
        %v1722 = vunpack.c.h.b16 %v1602
        %v1723 = vunpack.c.l.b16 %v1603
        %v1724 = vunpack.c.h.b16 %v1603
        %v1725 = vunpack.c.l.b16 %v1604
        %v1726 = vunpack.c.h.b16 %v1604
        %v1727 = vunpack.c.l.b16 %v1605
        %v1728 = vunpack.c.h.b16 %v1605
        %v1729 = vunpack.c.l.b16 %v1606
        %v1730 = vunpack.c.h.b16 %v1606
        %v1731 = vunpack.c.l.b16 %v1607
        %v1732 = vunpack.c.h.b16 %v1607
        %v1733 = vunpack.c.l.b16 %v1608
        %v1734 = vunpack.c.h.b16 %v1608
        %v1735 = vunpack.c.l.b16 %v1609
        %v1736 = vunpack.c.h.b16 %v1609
        %v1737 = vunpack.c.l.b16 %v1610
        %v1738 = vunpack.c.h.b16 %v1610
        %v1739 = vunpack.c.l.b16 %v1611
        %v1740 = vunpack.c.h.b16 %v1611
        %v1741 = vunpack.c.l.b16 %v1612
        %v1742 = vunpack.c.h.b16 %v1612
        %v1743 = vpack.c.b16 %v1683, %v1679
        %v1744 = vpack.c.b16 %v1684, %v1680
        %v1745 = vpack.c.b16 %v1685, %v1681
        %v1746 = vpack.c.b16 %v1686, %v1682
        %v1747 = vpack.c.b16 %v1691, %v1687
        %v1748 = vpack.c.b16 %v1692, %v1688
        %v1749 = vpack.c.b16 %v1693, %v1689
        %v1750 = vpack.c.b16 %v1694, %v1690
        %v1751 = vpack.c.b16 %v1699, %v1695
        %v1752 = vpack.c.b16 %v1700, %v1696
        %v1753 = vpack.c.b16 %v1701, %v1697
        %v1754 = vpack.c.b16 %v1702, %v1698
        %v1755 = vpack.c.b16 %v1707, %v1703
        %v1756 = vpack.c.b16 %v1708, %v1704
        %v1757 = vpack.c.b16 %v1709, %v1705
        %v1758 = vpack.c.b16 %v1710, %v1706
        %v1759 = vpack.c.b16 %v1715, %v1711
        %v1760 = vpack.c.b16 %v1716, %v1712
        %v1761 = vpack.c.b16 %v1717, %v1713
        %v1762 = vpack.c.b16 %v1718, %v1714
        %v1763 = vpack.c.b16 %v1723, %v1719
        %v1764 = vpack.c.b16 %v1724, %v1720
        %v1765 = vpack.c.b16 %v1725, %v1721
        %v1766 = vpack.c.b16 %v1726, %v1722
        %v1767 = vpack.c.b16 %v1731, %v1727
        %v1768 = vpack.c.b16 %v1732, %v1728
        %v1769 = vpack.c.b16 %v1733, %v1729
        %v1770 = vpack.c.b16 %v1734, %v1730
        %v1771 = vpack.c.b16 %v1739, %v1735
        %v1772 = vpack.c.b16 %v1740, %v1736
        %v1773 = vpack.c.b16 %v1741, %v1737
        %v1774 = vpack.c.b16 %v1742, %v1738
        %1807 = vmatprep.subr.bf16.mxu0 %v1772
        %1808 = vmatpush1.bf16.msra.mxu0 %v1771
        %1809 = vmatprep.subr.bf16.mxu0 %v1768
        %1810 = vmatpush1.bf16.msra.mxu0 %v1767
        %1811 = vmatprep.subr.bf16.mxu0 %v1764
        %1812 = vmatpush1.bf16.msra.mxu0 %v1763
        %1813 = vmatprep.subr.bf16.mxu0 %v1760
        %1814 = vmatpush1.bf16.msra.mxu0 %v1759
        %1815 = vmatprep.subr.bf16.mxu0 %v1756
        %1816 = vmatpush1.bf16.msra.mxu0 %v1755
        %1817 = vmatprep.subr.bf16.mxu0 %v1752
        %1818 = vmatpush1.bf16.msra.mxu0 %v1751
        %1819 = vmatprep.subr.bf16.mxu0 %v1748
        %1820 = vmatpush1.bf16.msra.mxu0 %v1747
        %1821 = vmatprep.subr.bf16.mxu0 %v1744
        %1822 = vmatpush1.bf16.msra.mxu0 %v1743
        %1823 = vmatprep.subr.bf16.mxu0 0
        %1824 = vmatpush2.bf16.msra.mxu0 0
        %1825 = vmatprep.subr.bf16.mxu0 0
        %1826 = vmatpush2.bf16.msra.mxu0 0
        %1827 = vmatprep.subr.bf16.mxu0 0
        %1828 = vmatpush2.bf16.msra.mxu0 0
        %1829 = vmatprep.subr.bf16.mxu0 0
        %1830 = vmatpush2.bf16.msra.mxu0 0
        %1831 = vmatprep.subr.bf16.mxu0 0
        %1832 = vmatpush2.bf16.msra.mxu0 0
        %1833 = vmatprep.subr.bf16.mxu0 0
        %1834 = vmatpush2.bf16.msra.mxu0 0
        %1835 = vmatprep.subr.bf16.mxu0 0
        %1836 = vmatpush2.bf16.msra.mxu0 0
        %1837 = vmatprep.subr.bf16.mxu0 0
        %1838 = vmatpush2.bf16.msra.mxu0 0
        %1839 = vmatprep.mubr.bf16.mxu0 0
        %1840 = vmatmul.mubr.bf16.gmra.mxu0 %v1643
        %v1841 = vpop.f32.mrf.mxu0
        %v1842 = vadd.f32 %v1618, %v1841
        %v1843 = vpop.f32.mrf.mxu0
        %v1844 = vadd.f32 %v1622, %v1843
        %v1845 = vpop.f32.mrf.mxu0
        %v1846 = vadd.f32 %v1618, %v1845
        %v1847 = vpop.f32.mrf.mxu0
        %v1848 = vadd.f32 %v1622, %v1847
        %1849 = vmatprep.mubr.bf16.mxu0 0
        %1850 = vmatmul.mubr.bf16.gmra.mxu0 %v1644
        %v1851 = vpop.f32.mrf.mxu0
        %v1852 = vadd.f32 %v1618, %v1851
        %v1853 = vpop.f32.mrf.mxu0
        %v1854 = vadd.f32 %v1622, %v1853
        %v1855 = vpop.f32.mrf.mxu0
        %v1856 = vadd.f32 %v1618, %v1855
        %v1857 = vpop.f32.mrf.mxu0
        %v1858 = vadd.f32 %v1622, %v1857
        %1859 = vdwg.mxu0
        %1860 = vmatprep.subr.bf16.mxu0 %v1774
        %1861 = vmatpush1.bf16.msra.mxu0 %v1773
        %1862 = vmatprep.subr.bf16.mxu0 %v1770
        %1863 = vmatpush1.bf16.msra.mxu0 %v1769
        %1864 = vmatprep.subr.bf16.mxu0 %v1766
        %1865 = vmatpush1.bf16.msra.mxu0 %v1765
        %1866 = vmatprep.subr.bf16.mxu0 %v1762
        %1867 = vmatpush1.bf16.msra.mxu0 %v1761
        %1868 = vmatprep.subr.bf16.mxu0 %v1758
        %1869 = vmatpush1.bf16.msra.mxu0 %v1757
        %1870 = vmatprep.subr.bf16.mxu0 %v1754
        %1871 = vmatpush1.bf16.msra.mxu0 %v1753
        %1872 = vmatprep.subr.bf16.mxu0 %v1750
        %1873 = vmatpush1.bf16.msra.mxu0 %v1749
        %1874 = vmatprep.subr.bf16.mxu0 %v1746
        %1875 = vmatpush1.bf16.msra.mxu0 %v1745
        %1876 = vmatprep.subr.bf16.mxu0 0
        %1877 = vmatpush2.bf16.msra.mxu0 0
        %1878 = vmatprep.subr.bf16.mxu0 0
        %1879 = vmatpush2.bf16.msra.mxu0 0
        %1880 = vmatprep.subr.bf16.mxu0 0
        %1881 = vmatpush2.bf16.msra.mxu0 0
        %1882 = vmatprep.subr.bf16.mxu0 0
        %1883 = vmatpush2.bf16.msra.mxu0 0
        %1884 = vmatprep.subr.bf16.mxu0 0
        %1885 = vmatpush2.bf16.msra.mxu0 0
        %1886 = vmatprep.subr.bf16.mxu0 0
        %1887 = vmatpush2.bf16.msra.mxu0 0
        %1888 = vmatprep.subr.bf16.mxu0 0
        %1889 = vmatpush2.bf16.msra.mxu0 0
        %1890 = vmatprep.subr.bf16.mxu0 0
        %1891 = vmatpush2.bf16.msra.mxu0 0
        %1892 = vmatprep.mubr.bf16.mxu0 0
        %1893 = vmatmul.mubr.bf16.gmra.mxu0 %v1643
        %v1894 = vpop.f32.mrf.mxu0
        %v1895 = vadd.f32 %v1626, %v1894
        %v1896 = vpop.f32.mrf.mxu0
        %v1897 = vadd.f32 %v1630, %v1896
        %v1898 = vpop.f32.mrf.mxu0
        %v1899 = vadd.f32 %v1626, %v1898
        %v1900 = vpop.f32.mrf.mxu0
        %v1901 = vadd.f32 %v1630, %v1900
        %1902 = vmatprep.mubr.bf16.mxu0 0
        %1903 = vmatmul.mubr.bf16.gmra.mxu0 %v1644
        %v1904 = vpop.f32.mrf.mxu0
        %v1905 = vadd.f32 %v1626, %v1904
        %v1906 = vpop.f32.mrf.mxu0
        %v1907 = vadd.f32 %v1630, %v1906
        %v1908 = vpop.f32.mrf.mxu0
        %v1909 = vadd.f32 %v1626, %v1908
        %v1910 = vpop.f32.mrf.mxu0
        %v1911 = vadd.f32 %v1630, %v1910
        %1912 = vdwg.mxu0
        %1913 = vst [vmem:[#allocation2] sm:$0xff] %v1842
        %1914 = vst [vmem:[#allocation2 + $0x8] sm:$0xff] %v1844
        %1915 = vst [vmem:[#allocation2 + $0x10] sm:$0xff] %v1895
        %1916 = vst [vmem:[#allocation2 + $0x18] sm:$0xff] %v1897
        %1917 = vst [vmem:[#allocation2 + $0x20] sm:$0xff] %v1846
        %1918 = vst [vmem:[#allocation2 + $0x28] sm:$0xff] %v1848
        %1919 = vst [vmem:[#allocation2 + $0x30] sm:$0xff] %v1899
        %1920 = vst [vmem:[#allocation2 + $0x38] sm:$0xff] %v1901
        %1921 = vst [vmem:[#allocation2 + $0x40] sm:$0xff] %v1852
        %1922 = vst [vmem:[#allocation2 + $0x48] sm:$0xff] %v1854
        %1923 = vst [vmem:[#allocation2 + $0x50] sm:$0xff] %v1905
        %1924 = vst [vmem:[#allocation2 + $0x58] sm:$0xff] %v1907
        %1925 = vst [vmem:[#allocation2 + $0x60] sm:$0xff] %v1856
        %1926 = vst [vmem:[#allocation2 + $0x68] sm:$0xff] %v1858
        %1927 = vst [vmem:[#allocation2 + $0x70] sm:$0xff] %v1909
        %1928 = vst [vmem:[#allocation2 + $0x78] sm:$0xff] %v1911
        %v1929 = vld [vmem:[#allocation17] sm:$0xff]
        %v1930 = vld [vmem:[#allocation17 + $0x8] sm:$0xff]
        %v1931 = vld [vmem:[#allocation17 + $0x10] sm:$0xff]
        %v1932 = vld [vmem:[#allocation17 + $0x18] sm:$0xff]
        %v1933 = vld [vmem:[#allocation17 + $0x20] sm:$0xff]
        %v1934 = vld [vmem:[#allocation17 + $0x28] sm:$0xff]
        %v1935 = vld [vmem:[#allocation17 + $0x30] sm:$0xff]
        %v1936 = vld [vmem:[#allocation17 + $0x38] sm:$0xff]
        %v1937 = vld [vmem:[#allocation17 + $0x40] sm:$0xff]
        %v1938 = vld [vmem:[#allocation17 + $0x48] sm:$0xff]
        %v1939 = vld [vmem:[#allocation17 + $0x50] sm:$0xff]
        %v1940 = vld [vmem:[#allocation17 + $0x58] sm:$0xff]
        %v1941 = vld [vmem:[#allocation17 + $0x60] sm:$0xff]
        %v1942 = vld [vmem:[#allocation17 + $0x68] sm:$0xff]
        %v1943 = vld [vmem:[#allocation17 + $0x70] sm:$0xff]
        %v1944 = vld [vmem:[#allocation17 + $0x78] sm:$0xff]
        %v1945 = vld [vmem:[#allocation17 + $0x80] sm:$0xff]
        %v1946 = vld [vmem:[#allocation17 + $0x88] sm:$0xff]
        %v1947 = vld [vmem:[#allocation17 + $0x90] sm:$0xff]
        %v1948 = vld [vmem:[#allocation17 + $0x98] sm:$0xff]
        %v1949 = vld [vmem:[#allocation17 + $0xa0] sm:$0xff]
        %v1950 = vld [vmem:[#allocation17 + $0xa8] sm:$0xff]
        %v1951 = vld [vmem:[#allocation17 + $0xb0] sm:$0xff]
        %v1952 = vld [vmem:[#allocation17 + $0xb8] sm:$0xff]
        %v1953 = vld [vmem:[#allocation17 + $0xc0] sm:$0xff]
        %v1954 = vld [vmem:[#allocation17 + $0xc8] sm:$0xff]
        %v1955 = vld [vmem:[#allocation17 + $0xd0] sm:$0xff]
        %v1956 = vld [vmem:[#allocation17 + $0xd8] sm:$0xff]
        %v1957 = vld [vmem:[#allocation17 + $0xe0] sm:$0xff]
        %v1958 = vld [vmem:[#allocation17 + $0xe8] sm:$0xff]
        %v1959 = vld [vmem:[#allocation17 + $0xf0] sm:$0xff]
        %v1960 = vld [vmem:[#allocation17 + $0xf8] sm:$0xff]
        %s1961 = scalar_lea.vmem [#allocation4], 8
        %v1962 = vld [vmem:[%s1961] sm:$0xff]
        %s1963 = scalar_lea.vmem [#allocation5], 8
        %v1964 = vld [vmem:[%s1963] sm:$0xff]
        %v1965 = vpack.c.bf16 %v1962, %v1962
        %v1966 = vld [vmem:[%s954] sm:$0xff]
        %v1967 = vld [vmem:[%s954 + $0x8] sm:$0xff]
        %v1968 = vld [vmem:[%s954 + $0x10] sm:$0xff]
        %v1969 = vld [vmem:[%s954 + $0x18] sm:$0xff]
        %v2002 = vunpack.c.l.b16 %v1929
        %v2003 = vunpack.c.h.b16 %v1929
        %v2004 = vunpack.c.l.b16 %v1930
        %v2005 = vunpack.c.h.b16 %v1930
        %v2006 = vunpack.c.l.b16 %v1931
        %v2007 = vunpack.c.h.b16 %v1931
        %v2008 = vunpack.c.l.b16 %v1932
        %v2009 = vunpack.c.h.b16 %v1932
        %v2010 = vunpack.c.l.b16 %v1933
        %v2011 = vunpack.c.h.b16 %v1933
        %v2012 = vunpack.c.l.b16 %v1934
        %v2013 = vunpack.c.h.b16 %v1934
        %v2014 = vunpack.c.l.b16 %v1935
        %v2015 = vunpack.c.h.b16 %v1935
        %v2016 = vunpack.c.l.b16 %v1936
        %v2017 = vunpack.c.h.b16 %v1936
        %v2018 = vunpack.c.l.b16 %v1937
        %v2019 = vunpack.c.h.b16 %v1937
        %v2020 = vunpack.c.l.b16 %v1938
        %v2021 = vunpack.c.h.b16 %v1938
        %v2022 = vunpack.c.l.b16 %v1939
        %v2023 = vunpack.c.h.b16 %v1939
        %v2024 = vunpack.c.l.b16 %v1940
        %v2025 = vunpack.c.h.b16 %v1940
        %v2026 = vunpack.c.l.b16 %v1941
        %v2027 = vunpack.c.h.b16 %v1941
        %v2028 = vunpack.c.l.b16 %v1942
        %v2029 = vunpack.c.h.b16 %v1942
        %v2030 = vunpack.c.l.b16 %v1943
        %v2031 = vunpack.c.h.b16 %v1943
        %v2032 = vunpack.c.l.b16 %v1944
        %v2033 = vunpack.c.h.b16 %v1944
        %v2034 = vunpack.c.l.b16 %v1945
        %v2035 = vunpack.c.h.b16 %v1945
        %v2036 = vunpack.c.l.b16 %v1946
        %v2037 = vunpack.c.h.b16 %v1946
        %v2038 = vunpack.c.l.b16 %v1947
        %v2039 = vunpack.c.h.b16 %v1947
        %v2040 = vunpack.c.l.b16 %v1948
        %v2041 = vunpack.c.h.b16 %v1948
        %v2042 = vunpack.c.l.b16 %v1949
        %v2043 = vunpack.c.h.b16 %v1949
        %v2044 = vunpack.c.l.b16 %v1950
        %v2045 = vunpack.c.h.b16 %v1950
        %v2046 = vunpack.c.l.b16 %v1951
        %v2047 = vunpack.c.h.b16 %v1951
        %v2048 = vunpack.c.l.b16 %v1952
        %v2049 = vunpack.c.h.b16 %v1952
        %v2050 = vunpack.c.l.b16 %v1953
        %v2051 = vunpack.c.h.b16 %v1953
        %v2052 = vunpack.c.l.b16 %v1954
        %v2053 = vunpack.c.h.b16 %v1954
        %v2054 = vunpack.c.l.b16 %v1955
        %v2055 = vunpack.c.h.b16 %v1955
        %v2056 = vunpack.c.l.b16 %v1956
        %v2057 = vunpack.c.h.b16 %v1956
        %v2058 = vunpack.c.l.b16 %v1957
        %v2059 = vunpack.c.h.b16 %v1957
        %v2060 = vunpack.c.l.b16 %v1958
        %v2061 = vunpack.c.h.b16 %v1958
        %v2062 = vunpack.c.l.b16 %v1959
        %v2063 = vunpack.c.h.b16 %v1959
        %v2064 = vunpack.c.l.b16 %v1960
        %v2065 = vunpack.c.h.b16 %v1960
        %v2066 = vpack.c.b16 %v2006, %v2002
        %v2067 = vpack.c.b16 %v2007, %v2003
        %v2068 = vpack.c.b16 %v2008, %v2004
        %v2069 = vpack.c.b16 %v2009, %v2005
        %v2070 = vpack.c.b16 %v2014, %v2010
        %v2071 = vpack.c.b16 %v2015, %v2011
        %v2072 = vpack.c.b16 %v2016, %v2012
        %v2073 = vpack.c.b16 %v2017, %v2013
        %v2074 = vpack.c.b16 %v2022, %v2018
        %v2075 = vpack.c.b16 %v2023, %v2019
        %v2076 = vpack.c.b16 %v2024, %v2020
        %v2077 = vpack.c.b16 %v2025, %v2021
        %v2078 = vpack.c.b16 %v2030, %v2026
        %v2079 = vpack.c.b16 %v2031, %v2027
        %v2080 = vpack.c.b16 %v2032, %v2028
        %v2081 = vpack.c.b16 %v2033, %v2029
        %v2082 = vpack.c.b16 %v2038, %v2034
        %v2083 = vpack.c.b16 %v2039, %v2035
        %v2084 = vpack.c.b16 %v2040, %v2036
        %v2085 = vpack.c.b16 %v2041, %v2037
        %v2086 = vpack.c.b16 %v2046, %v2042
        %v2087 = vpack.c.b16 %v2047, %v2043
        %v2088 = vpack.c.b16 %v2048, %v2044
        %v2089 = vpack.c.b16 %v2049, %v2045
        %v2090 = vpack.c.b16 %v2054, %v2050
        %v2091 = vpack.c.b16 %v2055, %v2051
        %v2092 = vpack.c.b16 %v2056, %v2052
        %v2093 = vpack.c.b16 %v2057, %v2053
        %v2094 = vpack.c.b16 %v2062, %v2058
        %v2095 = vpack.c.b16 %v2063, %v2059
        %v2096 = vpack.c.b16 %v2064, %v2060
        %v2097 = vpack.c.b16 %v2065, %v2061
        %2130 = vmatprep.subr.bf16.mxu0 %v2095
        %2131 = vmatpush1.bf16.msra.mxu0 %v2094
        %2132 = vmatprep.subr.bf16.mxu0 %v2091
        %2133 = vmatpush1.bf16.msra.mxu0 %v2090
        %2134 = vmatprep.subr.bf16.mxu0 %v2087
        %2135 = vmatpush1.bf16.msra.mxu0 %v2086
        %2136 = vmatprep.subr.bf16.mxu0 %v2083
        %2137 = vmatpush1.bf16.msra.mxu0 %v2082
        %2138 = vmatprep.subr.bf16.mxu0 %v2079
        %2139 = vmatpush1.bf16.msra.mxu0 %v2078
        %2140 = vmatprep.subr.bf16.mxu0 %v2075
        %2141 = vmatpush1.bf16.msra.mxu0 %v2074
        %2142 = vmatprep.subr.bf16.mxu0 %v2071
        %2143 = vmatpush1.bf16.msra.mxu0 %v2070
        %2144 = vmatprep.subr.bf16.mxu0 %v2067
        %2145 = vmatpush1.bf16.msra.mxu0 %v2066
        %2146 = vmatprep.subr.bf16.mxu0 0
        %2147 = vmatpush2.bf16.msra.mxu0 0
        %2148 = vmatprep.subr.bf16.mxu0 0
        %2149 = vmatpush2.bf16.msra.mxu0 0
        %2150 = vmatprep.subr.bf16.mxu0 0
        %2151 = vmatpush2.bf16.msra.mxu0 0
        %2152 = vmatprep.subr.bf16.mxu0 0
        %2153 = vmatpush2.bf16.msra.mxu0 0
        %2154 = vmatprep.subr.bf16.mxu0 0
        %2155 = vmatpush2.bf16.msra.mxu0 0
        %2156 = vmatprep.subr.bf16.mxu0 0
        %2157 = vmatpush2.bf16.msra.mxu0 0
        %2158 = vmatprep.subr.bf16.mxu0 0
        %2159 = vmatpush2.bf16.msra.mxu0 0
        %2160 = vmatprep.subr.bf16.mxu0 0
        %2161 = vmatpush2.bf16.msra.mxu0 0
        %2162 = vmatprep.mubr.bf16.mxu0 0
        %2163 = vmatmul.mubr.bf16.gmra.mxu0 %v1965
        %v2164 = vpop.f32.mrf.mxu0
        %v2165 = vadd.f32 %v1966, %v2164
        %v2166 = vpop.f32.mrf.mxu0
        %v2167 = vadd.f32 %v1967, %v2166
        %v2168 = vpop.f32.mrf.mxu0
        %v2169 = vpop.f32.mrf.mxu0
        %2170 = vdwg.mxu0
        %2171 = vmatprep.subr.bf16.mxu0 %v2097
        %2172 = vmatpush1.bf16.msra.mxu0 %v2096
        %2173 = vmatprep.subr.bf16.mxu0 %v2093
        %2174 = vmatpush1.bf16.msra.mxu0 %v2092
        %2175 = vmatprep.subr.bf16.mxu0 %v2089
        %2176 = vmatpush1.bf16.msra.mxu0 %v2088
        %2177 = vmatprep.subr.bf16.mxu0 %v2085
        %2178 = vmatpush1.bf16.msra.mxu0 %v2084
        %2179 = vmatprep.subr.bf16.mxu0 %v2081
        %2180 = vmatpush1.bf16.msra.mxu0 %v2080
        %2181 = vmatprep.subr.bf16.mxu0 %v2077
        %2182 = vmatpush1.bf16.msra.mxu0 %v2076
        %2183 = vmatprep.subr.bf16.mxu0 %v2073
        %2184 = vmatpush1.bf16.msra.mxu0 %v2072
        %2185 = vmatprep.subr.bf16.mxu0 %v2069
        %2186 = vmatpush1.bf16.msra.mxu0 %v2068
        %2187 = vmatprep.subr.bf16.mxu0 0
        %2188 = vmatpush2.bf16.msra.mxu0 0
        %2189 = vmatprep.subr.bf16.mxu0 0
        %2190 = vmatpush2.bf16.msra.mxu0 0
        %2191 = vmatprep.subr.bf16.mxu0 0
        %2192 = vmatpush2.bf16.msra.mxu0 0
        %2193 = vmatprep.subr.bf16.mxu0 0
        %2194 = vmatpush2.bf16.msra.mxu0 0
        %2195 = vmatprep.subr.bf16.mxu0 0
        %2196 = vmatpush2.bf16.msra.mxu0 0
        %2197 = vmatprep.subr.bf16.mxu0 0
        %2198 = vmatpush2.bf16.msra.mxu0 0
        %2199 = vmatprep.subr.bf16.mxu0 0
        %2200 = vmatpush2.bf16.msra.mxu0 0
        %2201 = vmatprep.subr.bf16.mxu0 0
        %2202 = vmatpush2.bf16.msra.mxu0 0
        %2203 = vmatprep.mubr.bf16.mxu0 0
        %2204 = vmatmul.mubr.bf16.gmra.mxu0 %v1965
        %v2205 = vpop.f32.mrf.mxu0
        %v2206 = vadd.f32 %v1968, %v2205
        %v2207 = vpop.f32.mrf.mxu0
        %v2208 = vadd.f32 %v1969, %v2207
        %v2209 = vpop.f32.mrf.mxu0
        %v2210 = vpop.f32.mrf.mxu0
        %2211 = vdwg.mxu0
        %v2212 = vxor.u32 %v2165, 2147483648
        %v2213 = vxor.u32 %v2167, 2147483648
        %v2214 = vxor.u32 %v2206, 2147483648
        %v2215 = vmul.f32 %v2212, 1.442695
        %v2216 = vpow.pop %v2215
        %v2217 = vmul.f32 %v2213, 1.442695
        %v2218 = vpow.pop %v2217
        %v2219 = vmul.f32 %v2214, 1.442695
        %v2220 = vpow.pop %v2219
        %v2221 = vadd.f32 %v2216, 1.0
        %v2222 = vadd.f32 %v2218, 1.0
        %v2223 = vadd.f32 %v2220, 1.0
        %v2224 = vrcp.pop %v2221
        %v2225 = vmul.f32 1.0, %v2224
        %v2226 = vrcp.pop %v2222
        %v2227 = vmul.f32 1.0, %v2226
        %v2228 = vrcp.pop %v2223
        %v2229 = vmul.f32 1.0, %v2228
        %v2230 = vtanh.pop %v2208
        %v2231 = vmul.f32 %v2227, %v1964
        %v2232 = vmul.f32 %v2225, %v2230
        %v2233 = vadd.f32 %v2231, %v2232
        %v2234 = vtanh.pop %v2233
        %v2235 = vmul.f32 %v2229, %v2234
        %v2236 = vpack.c.bf16 %v2235, %v2235
        %2237 = vst [vmem:[#allocation3] sm:$0xf] %v2236
        %v2238 = vld [vmem:[%s1229] sm:$0xff]
        %v2239 = vld [vmem:[%s1229 + $0x8] sm:$0xff]
        %v2240 = vld [vmem:[%s1229 + $0x10] sm:$0xff]
        %v2241 = vld [vmem:[%s1229 + $0x18] sm:$0xff]
        %2242 = vmatprep.subr.bf16.mxu0 %v2095
        %2243 = vmatpush1.bf16.msra.mxu0 %v2094
        %2244 = vmatprep.subr.bf16.mxu0 %v2091
        %2245 = vmatpush1.bf16.msra.mxu0 %v2090
        %2246 = vmatprep.subr.bf16.mxu0 %v2087
        %2247 = vmatpush1.bf16.msra.mxu0 %v2086
        %2248 = vmatprep.subr.bf16.mxu0 %v2083
        %2249 = vmatpush1.bf16.msra.mxu0 %v2082
        %2250 = vmatprep.subr.bf16.mxu0 %v2079
        %2251 = vmatpush1.bf16.msra.mxu0 %v2078
        %2252 = vmatprep.subr.bf16.mxu0 %v2075
        %2253 = vmatpush1.bf16.msra.mxu0 %v2074
        %2254 = vmatprep.subr.bf16.mxu0 %v2071
        %2255 = vmatpush1.bf16.msra.mxu0 %v2070
        %2256 = vmatprep.subr.bf16.mxu0 %v2067
        %2257 = vmatpush1.bf16.msra.mxu0 %v2066
        %2258 = vmatprep.subr.bf16.mxu0 0
        %2259 = vmatpush2.bf16.msra.mxu0 0
        %2260 = vmatprep.subr.bf16.mxu0 0
        %2261 = vmatpush2.bf16.msra.mxu0 0
        %2262 = vmatprep.subr.bf16.mxu0 0
        %2263 = vmatpush2.bf16.msra.mxu0 0
        %2264 = vmatprep.subr.bf16.mxu0 0
        %2265 = vmatpush2.bf16.msra.mxu0 0
        %2266 = vmatprep.subr.bf16.mxu0 0
        %2267 = vmatpush2.bf16.msra.mxu0 0
        %2268 = vmatprep.subr.bf16.mxu0 0
        %2269 = vmatpush2.bf16.msra.mxu0 0
        %2270 = vmatprep.subr.bf16.mxu0 0
        %2271 = vmatpush2.bf16.msra.mxu0 0
        %2272 = vmatprep.subr.bf16.mxu0 0
        %2273 = vmatpush2.bf16.msra.mxu0 0
        %2274 = vmatprep.mubr.bf16.mxu0 0
        %2275 = vmatmul.mubr.bf16.gmra.mxu0 %v2236
        %v2276 = vpop.f32.mrf.mxu0
        %v2277 = vadd.f32 %v2238, %v2276
        %v2278 = vpop.f32.mrf.mxu0
        %v2279 = vadd.f32 %v2239, %v2278
        %v2280 = vpop.f32.mrf.mxu0
        %v2281 = vpop.f32.mrf.mxu0
        %2282 = vdwg.mxu0
        %2283 = vmatprep.subr.bf16.mxu0 %v2097
        %2284 = vmatpush1.bf16.msra.mxu0 %v2096
        %2285 = vmatprep.subr.bf16.mxu0 %v2093
        %2286 = vmatpush1.bf16.msra.mxu0 %v2092
        %2287 = vmatprep.subr.bf16.mxu0 %v2089
        %2288 = vmatpush1.bf16.msra.mxu0 %v2088
        %2289 = vmatprep.subr.bf16.mxu0 %v2085
        %2290 = vmatpush1.bf16.msra.mxu0 %v2084
        %2291 = vmatprep.subr.bf16.mxu0 %v2081
        %2292 = vmatpush1.bf16.msra.mxu0 %v2080
        %2293 = vmatprep.subr.bf16.mxu0 %v2077
        %2294 = vmatpush1.bf16.msra.mxu0 %v2076
        %2295 = vmatprep.subr.bf16.mxu0 %v2073
        %2296 = vmatpush1.bf16.msra.mxu0 %v2072
        %2297 = vmatprep.subr.bf16.mxu0 %v2069
        %2298 = vmatpush1.bf16.msra.mxu0 %v2068
        %2299 = vmatprep.subr.bf16.mxu0 0
        %2300 = vmatpush2.bf16.msra.mxu0 0
        %2301 = vmatprep.subr.bf16.mxu0 0
        %2302 = vmatpush2.bf16.msra.mxu0 0
        %2303 = vmatprep.subr.bf16.mxu0 0
        %2304 = vmatpush2.bf16.msra.mxu0 0
        %2305 = vmatprep.subr.bf16.mxu0 0
        %2306 = vmatpush2.bf16.msra.mxu0 0
        %2307 = vmatprep.subr.bf16.mxu0 0
        %2308 = vmatpush2.bf16.msra.mxu0 0
        %2309 = vmatprep.subr.bf16.mxu0 0
        %2310 = vmatpush2.bf16.msra.mxu0 0
        %2311 = vmatprep.subr.bf16.mxu0 0
        %2312 = vmatpush2.bf16.msra.mxu0 0
        %2313 = vmatprep.subr.bf16.mxu0 0
        %2314 = vmatpush2.bf16.msra.mxu0 0
        %2315 = vmatprep.mubr.bf16.mxu0 0
        %2316 = vmatmul.mubr.bf16.gmra.mxu0 %v2236
        %v2317 = vpop.f32.mrf.mxu0
        %v2318 = vadd.f32 %v2240, %v2317
        %v2319 = vpop.f32.mrf.mxu0
        %v2320 = vadd.f32 %v2241, %v2319
        %v2321 = vpop.f32.mrf.mxu0
        %v2322 = vpop.f32.mrf.mxu0
        %2323 = vdwg.mxu0
        %v2324 = vxor.u32 %v2277, 2147483648
        %v2325 = vxor.u32 %v2279, 2147483648
        %v2326 = vxor.u32 %v2318, 2147483648
        %v2327 = vmul.f32 %v2324, 1.442695
        %v2328 = vpow.pop %v2327
        %v2329 = vmul.f32 %v2325, 1.442695
        %v2330 = vpow.pop %v2329
        %v2331 = vmul.f32 %v2326, 1.442695
        %v2332 = vpow.pop %v2331
        %v2333 = vadd.f32 %v2328, 1.0
        %v2334 = vadd.f32 %v2330, 1.0
        %v2335 = vadd.f32 %v2332, 1.0
        %v2336 = vrcp.pop %v2333
        %v2337 = vmul.f32 1.0, %v2336
        %v2338 = vrcp.pop %v2334
        %v2339 = vmul.f32 1.0, %v2338
        %v2340 = vrcp.pop %v2335
        %v2341 = vmul.f32 1.0, %v2340
        %v2342 = vtanh.pop %v2320
        %v2343 = vmul.f32 %v2339, %v2233
        %v2344 = vmul.f32 %v2337, %v2342
        %v2345 = vadd.f32 %v2343, %v2344
        %v2346 = vtanh.pop %v2345
        %v2347 = vmul.f32 %v2341, %v2346
        %v2348 = vpack.c.bf16 %v2347, %v2347
        %2349 = vst [vmem:[%s1341] sm:$0xf] %v2348
        %v2350 = vld [vmem:[%s1345] sm:$0xff]
        %v2351 = vld [vmem:[%s1345 + $0x8] sm:$0xff]
        %v2352 = vld [vmem:[%s1345 + $0x10] sm:$0xff]
        %v2353 = vld [vmem:[%s1345 + $0x18] sm:$0xff]
        %2354 = vmatprep.subr.bf16.mxu0 %v2095
        %2355 = vmatpush1.bf16.msra.mxu0 %v2094
        %2356 = vmatprep.subr.bf16.mxu0 %v2091
        %2357 = vmatpush1.bf16.msra.mxu0 %v2090
        %2358 = vmatprep.subr.bf16.mxu0 %v2087
        %2359 = vmatpush1.bf16.msra.mxu0 %v2086
        %2360 = vmatprep.subr.bf16.mxu0 %v2083
        %2361 = vmatpush1.bf16.msra.mxu0 %v2082
        %2362 = vmatprep.subr.bf16.mxu0 %v2079
        %2363 = vmatpush1.bf16.msra.mxu0 %v2078
        %2364 = vmatprep.subr.bf16.mxu0 %v2075
        %2365 = vmatpush1.bf16.msra.mxu0 %v2074
        %2366 = vmatprep.subr.bf16.mxu0 %v2071
        %2367 = vmatpush1.bf16.msra.mxu0 %v2070
        %2368 = vmatprep.subr.bf16.mxu0 %v2067
        %2369 = vmatpush1.bf16.msra.mxu0 %v2066
        %2370 = vmatprep.subr.bf16.mxu0 0
        %2371 = vmatpush2.bf16.msra.mxu0 0
        %2372 = vmatprep.subr.bf16.mxu0 0
        %2373 = vmatpush2.bf16.msra.mxu0 0
        %2374 = vmatprep.subr.bf16.mxu0 0
        %2375 = vmatpush2.bf16.msra.mxu0 0
        %2376 = vmatprep.subr.bf16.mxu0 0
        %2377 = vmatpush2.bf16.msra.mxu0 0
        %2378 = vmatprep.subr.bf16.mxu0 0
        %2379 = vmatpush2.bf16.msra.mxu0 0
        %2380 = vmatprep.subr.bf16.mxu0 0
        %2381 = vmatpush2.bf16.msra.mxu0 0
        %2382 = vmatprep.subr.bf16.mxu0 0
        %2383 = vmatpush2.bf16.msra.mxu0 0
        %2384 = vmatprep.subr.bf16.mxu0 0
        %2385 = vmatpush2.bf16.msra.mxu0 0
        %2386 = vmatprep.mubr.bf16.mxu0 0
        %2387 = vmatmul.mubr.bf16.gmra.mxu0 %v2348
        %v2388 = vpop.f32.mrf.mxu0
        %v2389 = vadd.f32 %v2350, %v2388
        %v2390 = vpop.f32.mrf.mxu0
        %v2391 = vadd.f32 %v2351, %v2390
        %v2392 = vpop.f32.mrf.mxu0
        %v2393 = vpop.f32.mrf.mxu0
        %2394 = vdwg.mxu0
        %2395 = vmatprep.subr.bf16.mxu0 %v2097
        %2396 = vmatpush1.bf16.msra.mxu0 %v2096
        %2397 = vmatprep.subr.bf16.mxu0 %v2093
        %2398 = vmatpush1.bf16.msra.mxu0 %v2092
        %2399 = vmatprep.subr.bf16.mxu0 %v2089
        %2400 = vmatpush1.bf16.msra.mxu0 %v2088
        %2401 = vmatprep.subr.bf16.mxu0 %v2085
        %2402 = vmatpush1.bf16.msra.mxu0 %v2084
        %2403 = vmatprep.subr.bf16.mxu0 %v2081
        %2404 = vmatpush1.bf16.msra.mxu0 %v2080
        %2405 = vmatprep.subr.bf16.mxu0 %v2077
        %2406 = vmatpush1.bf16.msra.mxu0 %v2076
        %2407 = vmatprep.subr.bf16.mxu0 %v2073
        %2408 = vmatpush1.bf16.msra.mxu0 %v2072
        %2409 = vmatprep.subr.bf16.mxu0 %v2069
        %2410 = vmatpush1.bf16.msra.mxu0 %v2068
        %2411 = vmatprep.subr.bf16.mxu0 0
        %2412 = vmatpush2.bf16.msra.mxu0 0
        %2413 = vmatprep.subr.bf16.mxu0 0
        %2414 = vmatpush2.bf16.msra.mxu0 0
        %2415 = vmatprep.subr.bf16.mxu0 0
        %2416 = vmatpush2.bf16.msra.mxu0 0
        %2417 = vmatprep.subr.bf16.mxu0 0
        %2418 = vmatpush2.bf16.msra.mxu0 0
        %2419 = vmatprep.subr.bf16.mxu0 0
        %2420 = vmatpush2.bf16.msra.mxu0 0
        %2421 = vmatprep.subr.bf16.mxu0 0
        %2422 = vmatpush2.bf16.msra.mxu0 0
        %2423 = vmatprep.subr.bf16.mxu0 0
        %2424 = vmatpush2.bf16.msra.mxu0 0
        %2425 = vmatprep.subr.bf16.mxu0 0
        %2426 = vmatpush2.bf16.msra.mxu0 0
        %2427 = vmatprep.mubr.bf16.mxu0 0
        %2428 = vmatmul.mubr.bf16.gmra.mxu0 %v2348
        %v2429 = vpop.f32.mrf.mxu0
        %v2430 = vadd.f32 %v2352, %v2429
        %v2431 = vpop.f32.mrf.mxu0
        %v2432 = vadd.f32 %v2353, %v2431
        %v2433 = vpop.f32.mrf.mxu0
        %v2434 = vpop.f32.mrf.mxu0
        %2435 = vdwg.mxu0
        %v2436 = vxor.u32 %v2389, 2147483648
        %v2437 = vxor.u32 %v2391, 2147483648
        %v2438 = vxor.u32 %v2430, 2147483648
        %v2439 = vmul.f32 %v2436, 1.442695
        %v2440 = vpow.pop %v2439
        %v2441 = vmul.f32 %v2437, 1.442695
        %v2442 = vpow.pop %v2441
        %v2443 = vmul.f32 %v2438, 1.442695
        %v2444 = vpow.pop %v2443
        %v2445 = vadd.f32 %v2440, 1.0
        %v2446 = vadd.f32 %v2442, 1.0
        %v2447 = vadd.f32 %v2444, 1.0
        %v2448 = vrcp.pop %v2445
        %v2449 = vmul.f32 1.0, %v2448
        %v2450 = vrcp.pop %v2446
        %v2451 = vmul.f32 1.0, %v2450
        %v2452 = vrcp.pop %v2447
        %v2453 = vmul.f32 1.0, %v2452
        %v2454 = vtanh.pop %v2432
        %v2455 = vmul.f32 %v2451, %v2345
        %v2456 = vmul.f32 %v2449, %v2454
        %v2457 = vadd.f32 %v2455, %v2456
        %v2458 = vtanh.pop %v2457
        %v2459 = vmul.f32 %v2453, %v2458
        %v2460 = vpack.c.bf16 %v2459, %v2459
        %2461 = vst [vmem:[%s1457] sm:$0xf] %v2460
        %v2462 = vld [vmem:[%s1461] sm:$0xff]
        %v2463 = vld [vmem:[%s1461 + $0x8] sm:$0xff]
        %v2464 = vld [vmem:[%s1461 + $0x10] sm:$0xff]
        %v2465 = vld [vmem:[%s1461 + $0x18] sm:$0xff]
        %2466 = vmatprep.subr.bf16.mxu0 %v2095
        %2467 = vmatpush1.bf16.msra.mxu0 %v2094
        %2468 = vmatprep.subr.bf16.mxu0 %v2091
        %2469 = vmatpush1.bf16.msra.mxu0 %v2090
        %2470 = vmatprep.subr.bf16.mxu0 %v2087
        %2471 = vmatpush1.bf16.msra.mxu0 %v2086
        %2472 = vmatprep.subr.bf16.mxu0 %v2083
        %2473 = vmatpush1.bf16.msra.mxu0 %v2082
        %2474 = vmatprep.subr.bf16.mxu0 %v2079
        %2475 = vmatpush1.bf16.msra.mxu0 %v2078
        %2476 = vmatprep.subr.bf16.mxu0 %v2075
        %2477 = vmatpush1.bf16.msra.mxu0 %v2074
        %2478 = vmatprep.subr.bf16.mxu0 %v2071
        %2479 = vmatpush1.bf16.msra.mxu0 %v2070
        %2480 = vmatprep.subr.bf16.mxu0 %v2067
        %2481 = vmatpush1.bf16.msra.mxu0 %v2066
        %2482 = vmatprep.subr.bf16.mxu0 0
        %2483 = vmatpush2.bf16.msra.mxu0 0
        %2484 = vmatprep.subr.bf16.mxu0 0
        %2485 = vmatpush2.bf16.msra.mxu0 0
        %2486 = vmatprep.subr.bf16.mxu0 0
        %2487 = vmatpush2.bf16.msra.mxu0 0
        %2488 = vmatprep.subr.bf16.mxu0 0
        %2489 = vmatpush2.bf16.msra.mxu0 0
        %2490 = vmatprep.subr.bf16.mxu0 0
        %2491 = vmatpush2.bf16.msra.mxu0 0
        %2492 = vmatprep.subr.bf16.mxu0 0
        %2493 = vmatpush2.bf16.msra.mxu0 0
        %2494 = vmatprep.subr.bf16.mxu0 0
        %2495 = vmatpush2.bf16.msra.mxu0 0
        %2496 = vmatprep.subr.bf16.mxu0 0
        %2497 = vmatpush2.bf16.msra.mxu0 0
        %2498 = vmatprep.mubr.bf16.mxu0 0
        %2499 = vmatmul.mubr.bf16.gmra.mxu0 %v2460
        %v2500 = vpop.f32.mrf.mxu0
        %v2501 = vadd.f32 %v2462, %v2500
        %v2502 = vpop.f32.mrf.mxu0
        %v2503 = vadd.f32 %v2463, %v2502
        %v2504 = vpop.f32.mrf.mxu0
        %v2505 = vpop.f32.mrf.mxu0
        %2506 = vdwg.mxu0
        %2507 = vmatprep.subr.bf16.mxu0 %v2097
        %2508 = vmatpush1.bf16.msra.mxu0 %v2096
        %2509 = vmatprep.subr.bf16.mxu0 %v2093
        %2510 = vmatpush1.bf16.msra.mxu0 %v2092
        %2511 = vmatprep.subr.bf16.mxu0 %v2089
        %2512 = vmatpush1.bf16.msra.mxu0 %v2088
        %2513 = vmatprep.subr.bf16.mxu0 %v2085
        %2514 = vmatpush1.bf16.msra.mxu0 %v2084
        %2515 = vmatprep.subr.bf16.mxu0 %v2081
        %2516 = vmatpush1.bf16.msra.mxu0 %v2080
        %2517 = vmatprep.subr.bf16.mxu0 %v2077
        %2518 = vmatpush1.bf16.msra.mxu0 %v2076
        %2519 = vmatprep.subr.bf16.mxu0 %v2073
        %2520 = vmatpush1.bf16.msra.mxu0 %v2072
        %2521 = vmatprep.subr.bf16.mxu0 %v2069
        %2522 = vmatpush1.bf16.msra.mxu0 %v2068
        %2523 = vmatprep.subr.bf16.mxu0 0
        %2524 = vmatpush2.bf16.msra.mxu0 0
        %2525 = vmatprep.subr.bf16.mxu0 0
        %2526 = vmatpush2.bf16.msra.mxu0 0
        %2527 = vmatprep.subr.bf16.mxu0 0
        %2528 = vmatpush2.bf16.msra.mxu0 0
        %2529 = vmatprep.subr.bf16.mxu0 0
        %2530 = vmatpush2.bf16.msra.mxu0 0
        %2531 = vmatprep.subr.bf16.mxu0 0
        %2532 = vmatpush2.bf16.msra.mxu0 0
        %2533 = vmatprep.subr.bf16.mxu0 0
        %2534 = vmatpush2.bf16.msra.mxu0 0
        %2535 = vmatprep.subr.bf16.mxu0 0
        %2536 = vmatpush2.bf16.msra.mxu0 0
        %2537 = vmatprep.subr.bf16.mxu0 0
        %2538 = vmatpush2.bf16.msra.mxu0 0
        %2539 = vmatprep.mubr.bf16.mxu0 0
        %2540 = vmatmul.mubr.bf16.gmra.mxu0 %v2460
        %v2541 = vpop.f32.mrf.mxu0
        %v2542 = vadd.f32 %v2464, %v2541
        %v2543 = vpop.f32.mrf.mxu0
        %v2544 = vadd.f32 %v2465, %v2543
        %v2545 = vpop.f32.mrf.mxu0
        %v2546 = vpop.f32.mrf.mxu0
        %2547 = vdwg.mxu0
        %v2548 = vxor.u32 %v2501, 2147483648
        %v2549 = vxor.u32 %v2503, 2147483648
        %v2550 = vxor.u32 %v2542, 2147483648
        %v2551 = vmul.f32 %v2548, 1.442695
        %v2552 = vpow.pop %v2551
        %v2553 = vmul.f32 %v2549, 1.442695
        %v2554 = vpow.pop %v2553
        %v2555 = vmul.f32 %v2550, 1.442695
        %v2556 = vpow.pop %v2555
        %v2557 = vadd.f32 %v2552, 1.0
        %v2558 = vadd.f32 %v2554, 1.0
        %v2559 = vadd.f32 %v2556, 1.0
        %v2560 = vrcp.pop %v2557
        %v2561 = vmul.f32 1.0, %v2560
        %v2562 = vrcp.pop %v2558
        %v2563 = vmul.f32 1.0, %v2562
        %v2564 = vrcp.pop %v2559
        %v2565 = vmul.f32 1.0, %v2564
        %v2566 = vtanh.pop %v2544
        %v2567 = vmul.f32 %v2563, %v2457
        %v2568 = vmul.f32 %v2561, %v2566
        %v2569 = vadd.f32 %v2567, %v2568
        %v2570 = vtanh.pop %v2569
        %v2571 = vmul.f32 %v2565, %v2570
        %v2572 = vpack.c.bf16 %v2571, %v2571
        %2573 = vst [vmem:[%s1573] sm:$0xf] %v2572
        %2574 = vst [vmem:[%s1961] sm:$0xff] %v2571
        %2575 = vst [vmem:[%s1963] sm:$0xff] %v2569
        %v2576 = vld [vmem:[#allocation3] sm:$0xf]
        %v2577 = vld [vmem:[#allocation3 + $0x4] sm:$0xf]
        %v2578 = vld [vmem:[#allocation3 + $0x8] sm:$0xf]
        %v2579 = vld [vmem:[#allocation3 + $0xc] sm:$0xf]
        %v2580 = vld [vmem:[%s9] sm:$0xf]
        %v2581 = vld [vmem:[%s9 + $0x4] sm:$0xf]
        %v2582 = vld [vmem:[%s9 + $0x8] sm:$0xf]
        %v2583 = vld [vmem:[%s9 + $0xc] sm:$0xf]
        %v2584 = vld [vmem:[%s9 + $0x10] sm:$0xf]
        %v2585 = vld [vmem:[%s9 + $0x14] sm:$0xf]
        %v2586 = vld [vmem:[%s9 + $0x18] sm:$0xf]
        %v2587 = vld [vmem:[%s9 + $0x1c] sm:$0xf]
        %v2588 = vld [vmem:[%s9 + $0x20] sm:$0xf]
        %v2589 = vld [vmem:[%s9 + $0x24] sm:$0xf]
        %v2590 = vld [vmem:[%s9 + $0x28] sm:$0xf]
        %v2591 = vld [vmem:[%s9 + $0x2c] sm:$0xf]
        %v2592 = vld [vmem:[%s9 + $0x30] sm:$0xf]
        %v2593 = vld [vmem:[%s9 + $0x34] sm:$0xf]
        %v2594 = vld [vmem:[%s9 + $0x38] sm:$0xf]
        %v2595 = vld [vmem:[%s9 + $0x3c] sm:$0xf]
        %v2596 = vld [vmem:[%s10] sm:$0x1]
        %v2598 = vlaneseq
        %v2599 = vshrl.u32 %v2598, 7
        %v2600 = vsub.s32 0, %v2599
        %v2601 = vrot.slane %v2596, %v2600
        %v2607 = vunpack.c.l.b16 %v2576
        %v2608 = vunpack.c.l.b16 %v2577
        %v2609 = vunpack.c.l.b16 %v2578
        %v2610 = vunpack.c.l.b16 %v2579
        %v2611 = vpack.c.b16 %v2608, %v2607
        %v2612 = vpack.c.b16 %v2610, %v2609
        %v2631 = vunpack.c.l.b16 %v2580
        %v2632 = vunpack.c.l.b16 %v2581
        %v2633 = vunpack.c.l.b16 %v2582
        %v2634 = vunpack.c.l.b16 %v2583
        %v2635 = vunpack.c.l.b16 %v2584
        %v2636 = vunpack.c.l.b16 %v2585
        %v2637 = vunpack.c.l.b16 %v2586
        %v2638 = vunpack.c.l.b16 %v2587
        %v2639 = vunpack.c.l.b16 %v2588
        %v2640 = vunpack.c.l.b16 %v2589
        %v2641 = vunpack.c.l.b16 %v2590
        %v2642 = vunpack.c.l.b16 %v2591
        %v2643 = vunpack.c.l.b16 %v2592
        %v2644 = vunpack.c.l.b16 %v2593
        %v2645 = vunpack.c.l.b16 %v2594
        %v2646 = vunpack.c.l.b16 %v2595
        %v2647 = vpack.c.b16 %v2632, %v2631
        %v2648 = vpack.c.b16 %v2634, %v2633
        %v2649 = vpack.c.b16 %v2636, %v2635
        %v2650 = vpack.c.b16 %v2638, %v2637
        %v2651 = vpack.c.b16 %v2640, %v2639
        %v2652 = vpack.c.b16 %v2642, %v2641
        %v2653 = vpack.c.b16 %v2644, %v2643
        %v2654 = vpack.c.b16 %v2646, %v2645
        %2663 = vmatprep.subr.bf16.mxu0 0
        %2664 = vmatpush1.bf16.msra.mxu0 %v2654
        %2665 = vmatprep.subr.bf16.mxu0 0
        %2666 = vmatpush1.bf16.msra.mxu0 %v2653
        %2667 = vmatprep.subr.bf16.mxu0 0
        %2668 = vmatpush1.bf16.msra.mxu0 %v2652
        %2669 = vmatprep.subr.bf16.mxu0 0
        %2670 = vmatpush1.bf16.msra.mxu0 %v2651
        %2671 = vmatprep.subr.bf16.mxu0 0
        %2672 = vmatpush1.bf16.msra.mxu0 %v2650
        %2673 = vmatprep.subr.bf16.mxu0 0
        %2674 = vmatpush1.bf16.msra.mxu0 %v2649
        %2675 = vmatprep.subr.bf16.mxu0 0
        %2676 = vmatpush1.bf16.msra.mxu0 %v2648
        %2677 = vmatprep.subr.bf16.mxu0 0
        %2678 = vmatpush1.bf16.msra.mxu0 %v2647
        %2679 = vmatprep.subr.bf16.mxu0 0
        %2680 = vmatpush2.bf16.msra.mxu0 0
        %2681 = vmatprep.subr.bf16.mxu0 0
        %2682 = vmatpush2.bf16.msra.mxu0 0
        %2683 = vmatprep.subr.bf16.mxu0 0
        %2684 = vmatpush2.bf16.msra.mxu0 0
        %2685 = vmatprep.subr.bf16.mxu0 0
        %2686 = vmatpush2.bf16.msra.mxu0 0
        %2687 = vmatprep.subr.bf16.mxu0 0
        %2688 = vmatpush2.bf16.msra.mxu0 0
        %2689 = vmatprep.subr.bf16.mxu0 0
        %2690 = vmatpush2.bf16.msra.mxu0 0
        %2691 = vmatprep.subr.bf16.mxu0 0
        %2692 = vmatpush2.bf16.msra.mxu0 0
        %2693 = vmatprep.subr.bf16.mxu0 0
        %2694 = vmatpush2.bf16.msra.mxu0 0
        %2695 = vmatprep.mubr.bf16.mxu0 0
        %2696 = vmatmul.mubr.bf16.gmra.mxu0 %v2611
        %v2697 = vpop.f32.mrf.mxu0
        %v2698 = vadd.f32 %v2601, %v2697
        %v2699 = vpop.f32.mrf.mxu0
        %v2700 = vpop.f32.mrf.mxu0
        %v2701 = vadd.f32 %v2601, %v2700
        %v2702 = vpop.f32.mrf.mxu0
        %2703 = vmatprep.mubr.bf16.mxu0 0
        %2704 = vmatmul.mubr.bf16.gmra.mxu0 %v2612
        %v2705 = vpop.f32.mrf.mxu0
        %v2706 = vadd.f32 %v2601, %v2705
        %v2707 = vpop.f32.mrf.mxu0
        %v2708 = vpop.f32.mrf.mxu0
        %v2709 = vadd.f32 %v2601, %v2708
        %v2710 = vpop.f32.mrf.mxu0
        %2711 = vdwg.mxu0
        %2712 = vst [vmem:[%s524] sm:$0xff] %v2698
        %2713 = vst [vmem:[%s524 + $0x8] sm:$0xff] %v2701
        %2714 = vst [vmem:[%s524 + $0x10] sm:$0xff] %v2706
        %2715 = vst [vmem:[%s524 + $0x18] sm:$0xff] %v2709
        %p2716 = scmp.eq.s32.totalorder %s33, 1
        // Predicated region
        $region97: #{tpu_custom_call.1} parent=63 // pred_check
          %p2717 = pneg %p2716
        $region98: #{tpu_custom_call.1} parent=63 // pred_check_branch
          %2719 = sbr.rel (%p2717) target = $region100
        $region99: #{tpu_custom_call.1} parent=63 // pred_region
          %v2720 = vld [vmem:[#allocation4] sm:$0xff]
          %v2721 = vld [vmem:[#allocation4 + $0x8] sm:$0xff]
          %2722 = vst [vmem:[#allocation19] sm:$0xff] %v2720
          %2723 = vst [vmem:[#allocation19 + $0x8] sm:$0xff] %v2721
          %v2724 = vld [vmem:[#allocation5] sm:$0xff]
          %v2725 = vld [vmem:[#allocation5 + $0x8] sm:$0xff]
          %2726 = vst [vmem:[#allocation21] sm:$0xff] %v2724
          %2727 = vst [vmem:[#allocation21 + $0x8] sm:$0xff] %v2725
        $region100: #{tpu_custom_call.1} parent=63 // pred_fallthru
          _
        %s2728 = sand.u32 %s277, 1
        %s2729 = scalar_lea.sflag [#allocation8], %s2728
        %s2730 = sand.u32 %s277, 1
        %s2731 = smul.addr %s2730, 32
        %s2732 = scalar_lea.vmem [#allocation18], %s2731
        // Predicated region
        $region101: #{tpu_custom_call.1} parent=63 // pred_check
          %p2733 = pneg %p287
        $region102: #{tpu_custom_call.1} parent=63 // pred_check_branch
          %2735 = sbr.rel (%p2733) target = $region104
        $region103: #{tpu_custom_call.1} parent=63 // pred_region
          %s2736 = smul.u32 4, %s33
          %s2738 = ssub.s32 512, 512
          %2739 = vsyncadd %s2729, %s2738
          %s2740 = smul.addr %s2736, 128
          %s2741 = scalar_lea.hbm %s11, %s2740
          %s2742 = sshll.u32 %s2732, 4
          %s2743 = int_to_ptr.vmem [resolvable:$true] %s2742
          %2748 = dma.vmem_to_hbm [thread:$0]  %s2743, 512, %s2741, %s2729, 128, 128, 8
        $region104: #{tpu_custom_call.1} parent=63 // pred_fallthru
          _
        // Predicated region
        $region105: #{tpu_custom_call.1} parent=63 // pred_check
          %p2749 = pneg %p308
        $region106: #{tpu_custom_call.1} parent=63 // pred_check_branch
          %2751 = sbr.rel (%p2749) target = $region108
        $region107: #{tpu_custom_call.1} parent=63 // pred_region
          %s2753 = ssub.s32 256, 256
          %2754 = vsyncadd [#allocation20], %s2753
          %s2755 = sshll.u32 [#allocation19], 4
          %s2756 = int_to_ptr.vmem [resolvable:$true] %s2755
          %2761 = dma.vmem_to_hbm [thread:$0]  %s2756, 256, %s12, [#allocation20], 128, 128, 8
        $region108: #{tpu_custom_call.1} parent=63 // pred_fallthru
          _
        // Predicated region
        $region109: #{tpu_custom_call.1} parent=63 // pred_check
          %p2762 = pneg %p329
        $region110: #{tpu_custom_call.1} parent=63 // pred_check_branch
          %2764 = sbr.rel (%p2762) target = $region112
        $region111: #{tpu_custom_call.1} parent=63 // pred_region
          %s2766 = ssub.s32 256, 256
          %2767 = vsyncadd [#allocation20], %s2766
          %s2768 = sshll.u32 [#allocation21], 4
          %s2769 = int_to_ptr.vmem [resolvable:$true] %s2768
          %2774 = dma.vmem_to_hbm [thread:$0]  %s2769, 256, %s13, [#allocation20], 128, 128, 8
        $region112: #{tpu_custom_call.1} parent=63 // pred_fallthru
          _
        // Predicated region
        $region113: #{tpu_custom_call.1} parent=63 // pred_check
          %p2775 = pneg %p308
        $region114: #{tpu_custom_call.1} parent=63 // pred_check_branch
          %2777 = sbr.rel (%p2775) target = $region116
        $region115: #{tpu_custom_call.1} parent=63 // pred_region
          %2778 = dma.done [#allocation20], 256
        $region116: #{tpu_custom_call.1} parent=63 // pred_fallthru
          _
        // Predicated region
        $region117: #{tpu_custom_call.1} parent=63 // pred_check
          %p2779 = pneg %p329
        $region118: #{tpu_custom_call.1} parent=63 // pred_check_branch
          %2781 = sbr.rel (%p2779) target = $region120
        $region119: #{tpu_custom_call.1} parent=63 // pred_region
          %2782 = dma.done [#allocation20], 256
        $region120: #{tpu_custom_call.1} parent=63 // pred_fallthru
          _
      $region64: #{tpu_custom_call.1} parent=5 // pred_fallthru
        _
      %p2783 = scmp.le.s32.totalorder 2, %s28
      // Predicated region
      $region121: #{tpu_custom_call.1} parent=5 // pred_check
        %p2784 = pneg %p2783
      $region122: #{tpu_custom_call.1} parent=5 // pred_check_branch
        %2786 = sbr.rel (%p2784) target = $region124
      $region123: #{tpu_custom_call.1} parent=5 // pred_region
        %s2787 = ssub.s32 %s28, 2
        // Predicated region
        $region125: #{tpu_custom_call.1} parent=123 // pred_check
          %p2788 = pneg %p293
        $region126: #{tpu_custom_call.1} parent=123 // pred_check_branch
          %2790 = sbr.rel (%p2788) target = $region128
        $region127: #{tpu_custom_call.1} parent=123 // pred_region
          %s2791 = sand.u32 %s278, 1
          %s2792 = scalar_lea.sflag [#allocation8], %s2791
          %s2793 = sand.u32 %s278, 1
          %s2794 = smul.addr %s2793, 32
          %s2795 = scalar_lea.vmem [#allocation18], %s2794
          %2796 = dma.done %s2792, 512
        $region128: #{tpu_custom_call.1} parent=123 // pred_fallthru
          _
      $region124: #{tpu_custom_call.1} parent=5 // pred_fallthru
        _
    $region6: #{tpu_custom_call.1} parent=1 // loop_footer
      %s32 = sadd.s32 1, %s28
    $region7: #{tpu_custom_call.1} parent=1 // loop_footer_branch
      %27 = sbr.rel target = $region3
    $region8: #{tpu_custom_call.1} parent=1 // loop_exit
      _
    %2797 = vsyncpa [#allocation7], 1
    %s2798 = scalar_lea.sflag [#allocation7], 1
    %2799 = vsyncpa %s2798, 1
    %2800 = vsyncpa [#allocation10], 1
    %2801 = vsyncpa [#allocation13], 1
    %2802 = vsyncpa [#allocation16], 1
    %2803 = vsyncpa [#allocation8], 1
    %s2804 = scalar_lea.sflag [#allocation8], 1
    %2805 = vsyncpa %s2804, 1
    %2806 = vsyncpa [#allocation20], 1

</llo_original>
